<compile_context>
chip_gen: v7x
topology: tpu7x:2x2x1
jax: 0.10.0
libtpu: 0.0.40
codegen_flags: <defaults>
</compile_context>

<pallas_src>
import functools

import jax
import jax.numpy as jnp
from jax.experimental import pallas as pl
from jax.experimental.pallas import tpu as pltpu


def leroy_kernel(ng_ref, coef_ref, out_ref, *, num_values):
    # Per-step views: ng_ref (Bt, N, G), coef_ref (Bt, 1, G), out_ref (N, Bt*N).
    Bt, N, G = ng_ref.shape
    ng = ng_ref[...]                                     # (Bt, N, G) f32, small ints
    coef = coef_ref[...]                                 # (Bt, 1, G) = 1/log(groups_size)

    lg = jnp.sum(ng, axis=2, keepdims=True)              # (Bt, N, 1) len_groups
    w = lg * coef                                        # (Bt, N, G) = lg_i / log(gs_k)

    # ---- Stage 1: one-hot over the value alphabet, full MXU matmuls ----
    #   P[b,i,j] = lg_i*lg_j * sum_k [ng_ik>0 & ng_ik==ng_jk]*coef_k
    #            = sum_{v>=1} (lg.*E_v.*coef) @ (lg.*E_v)^T ,  E_v = (ng==v)
    p = jnp.zeros((Bt, N, N), jnp.float32)
    for v in range(1, num_values + 1):                   # small static alphabet
        hit = ng == float(v)                             # (Bt, N, G) exact
        lhs = jnp.where(hit, w, 0.0).astype(jnp.bfloat16)
        rhs = jnp.where(hit, lg, 0.0).astype(jnp.bfloat16)
        p = p + jnp.einsum('big,bjg->bij', lhs, rhs,
                           preferred_element_type=jnp.float32)

    # ---- Normalized scores (per graph) ----
    nn = jnp.where(p > 0.0, 1.0, 0.0)                    # node_neighbors
    pmax = jnp.max(jnp.max(p, axis=2, keepdims=True), axis=1, keepdims=True)  # (Bt,1,1)
    inv_max_log = pl.reciprocal(jnp.log(pmax + 1.0), approx=True)             # EUP
    ps = jnp.where(p > -1.0, jnp.log(p + 1.0) * inv_max_log, 0.0)

    # ---- Stage 2: CN_b = A_b @ A_b^T with A = NN .* PS (bf16 in, f32 acc) ----
    a = (nn * ps).astype(jnp.bfloat16)
    cn = jnp.einsum('bik,bjk->bij', a, a, preferred_element_type=jnp.float32)

    # ---- nan_to_num and lane-dense store: graph b -> lanes [b*N, (b+1)*N) ----
    cn = jnp.where(jnp.isnan(cn), 0.0, cn)
    fmax = float(jnp.finfo(jnp.float32).max)
    cn = jnp.clip(cn, -fmax, fmax)
    for b in range(Bt):
        out_ref[:, b * N:(b + 1) * N] = cn[b]


def _pick_batch_tile(B, N):
    """Graphs per grid step: aim for a >=128-lane output slab while keeping
    >= 2 grid steps when possible (v7x has 2 TensorCores to shard across)."""
    if B <= 1:
        return 1
    target = min(B // 2, max(1, -(-128 // N)))
    for bt in range(max(target, 1), 0, -1):
        if B % bt == 0:
            return bt
    return 1


def leroy_forward_batched(node_groups, groups_size, *, num_values, batch_tile=None):
    """node_groups: (B, N, G), groups_size: (B, G) -> (B, N, N)."""
    ng = node_groups.astype(jnp.float32)
    B, N, G = ng.shape
    # Precompute coef lane-dense in the wrapper (one EUP log per element, once).
    coef = (1.0 / jnp.log(groups_size.astype(jnp.float32))).reshape(B, 1, G)

    Bt = batch_tile if batch_tile is not None else _pick_batch_tile(B, N)
    assert B % Bt == 0, "batch_tile must divide the batch"
    S = B // Bt

    out_slab = pl.pallas_call(
        functools.partial(leroy_kernel, num_values=num_values),
        out_shape=jax.ShapeDtypeStruct((S, N, Bt * N), jnp.float32),
        grid=(S,),
        in_specs=[
            pl.BlockSpec((Bt, N, G), lambda s: (s, 0, 0)),
            pl.BlockSpec((Bt, 1, G), lambda s: (s, 0, 0)),
        ],
        out_specs=pl.BlockSpec((None, N, Bt * N), lambda s: (s, 0, 0)),
        compiler_params=pltpu.CompilerParams(
            dimension_semantics=("parallel",),
            vmem_limit_bytes=32 * 1024 * 1024),
    )(ng, coef)

    # Layout plumbing only: (S, N, Bt*N) -> (B, N, N).
    out = out_slab.reshape(S, N, Bt, N).transpose(0, 2, 1, 3).reshape(B, N, N)
    return out


def leroy_forward(node_groups, groups_size, *, num_values):
    """Single-graph entry point, matching the PyTorch module's forward."""
    out = leroy_forward_batched(node_groups[None], groups_size[None],
                                num_values=num_values)
    return out[0]


def leroy_reference(node_groups, groups_size):
    # Pure-JAX f32 reference (vectorized version of the PyTorch double loops).
    ng = node_groups.astype(jnp.float32)
    gs = groups_size.astype(jnp.float32)
    lg = jnp.sum(ng, axis=1)
    p0 = lg[:, None] * lg[None, :]
    coef = 1.0 / jnp.log(gs)
    m1 = (ng[:, None, :] > 0.0) & (ng[:, None, :] == ng[None, :, :])
    s1 = jnp.sum(jnp.where(m1, coef[None, None, :], 0.0), axis=-1)
    p = p0 * s1
    nn = jnp.where(p > 0.0, 1.0, 0.0)
    max_log = jnp.log(jnp.max(p) + 1.0)
    ps = jnp.where(p > -1.0, jnp.log(p + 1.0) / max_log, 0.0)
    m2 = (nn[:, None, :] > 0.0) & (nn[:, None, :] == nn[None, :, :])
    cn = jnp.sum(jnp.where(m2, ps[:, None, :] * ps[None, :, :], 0.0), axis=-1)
    return jnp.nan_to_num(cn)


if __name__ == "__main__":
    key = jax.random.PRNGKey(0)
    k1, k2 = jax.random.split(key)
    B, N, G = 32, 8, 16
    # node_groups: small integer-valued floats (0 == "not in a group" slot)
    node_groups = jax.random.randint(k1, (B, N, G), 0, 4).astype(jnp.float32)
    # groups_size: >= 2 so log(groups_size) > 0
    groups_size = jax.random.randint(k2, (B, G), 2, 20).astype(jnp.float32)

    # One-hot Stage-1 assumption: small non-negative integers, known alphabet.
    assert bool(jnp.all(node_groups >= 0.0))
    assert bool(jnp.all(node_groups == jnp.round(node_groups)))
    num_values = int(jnp.max(node_groups))

    # Batched path: Bt=16 graphs per grid step -> (8, 128) lane-dense output
    # slab per step, 2 parallel grid steps.
    out_b = jax.block_until_ready(
        leroy_forward_batched(node_groups, groups_size, num_values=num_values))
    assert out_b.shape == (B, N, N) and out_b.dtype == jnp.float32
    ref_b = jax.block_until_ready(jax.vmap(leroy_reference)(node_groups, groups_size))
    # Tolerance reflects bf16 MXU inputs (masks exact; coef/ps quantized ~2^-8)
    # and the approximate EUP reciprocal; typical error is <1%.
    assert jnp.allclose(out_b, ref_b, rtol=2e-2, atol=2e-3), "batched mismatch vs reference"

    # Single-graph path (matches the PyTorch module signature)
    out_1 = jax.block_until_ready(
        leroy_forward(node_groups[0], groups_size[0], num_values=num_values))
    ref_1 = jax.block_until_ready(leroy_reference(node_groups[0], groups_size[0]))
    assert jnp.allclose(out_1, ref_1, rtol=2e-2, atol=2e-3), "single-graph mismatch vs reference"

    print("KERNEL_OK")
</pallas_src>

<mosaic_0001>
module attributes {stable_mosaic.version = 11 : i64} {
  func.func @leroy_kernel(%arg0: i32, %arg1: memref<16x8x16xf32, #tpu.memory_space<vmem>>, %arg2: memref<16x1x16xf32, #tpu.memory_space<vmem>>, %arg3: memref<1x8x128xf32, #tpu.memory_space<vmem>>) attributes {dimension_semantics = [#tpu.dimension_semantics<parallel>], iteration_bounds = array<i64: 2>, scalar_prefetch = 0 : i64, scratch_operands = 0 : i64, tpu.core_type = #tpu.core_type<tc>, window_params = [{transform_indices = @transform_0, window_bounds = array<i64: 16, 8, 16>}, {transform_indices = @transform_1, window_bounds = array<i64: 16, 1, 16>}, {transform_indices = @transform_2, window_bounds = array<i64: 1, 8, 128>}]} {
    %c0 = arith.constant 0 : index
    %c0_0 = arith.constant 0 : index
    %c0_1 = arith.constant 0 : index
    %0 = vector.load %arg1[%c0, %c0_0, %c0_1] : memref<16x8x16xf32, #tpu.memory_space<vmem>>, vector<16x8x16xf32>
    %c0_2 = arith.constant 0 : index
    %c0_3 = arith.constant 0 : index
    %c0_4 = arith.constant 0 : index
    %1 = vector.load %arg2[%c0_2, %c0_3, %c0_4] : memref<16x1x16xf32, #tpu.memory_space<vmem>>, vector<16x1x16xf32>
    %cst = arith.constant dense<0.000000e+00> : vector<16x8xf32>
    %2 = vector.multi_reduction <add>, %0, %cst [2] : vector<16x8x16xf32> to vector<16x8xf32>
    %3 = vector.shape_cast %2 : vector<16x8xf32> to vector<16x8x1xf32>
    %4 = vector.broadcast %3 : vector<16x8x1xf32> to vector<16x8x16xf32>
    %5 = vector.broadcast %1 : vector<16x1x16xf32> to vector<16x8x16xf32>
    %6 = arith.mulf %4, %5 : vector<16x8x16xf32>
    %cst_5 = arith.constant 0.000000e+00 : f32
    %7 = vector.broadcast %cst_5 : f32 to vector<16x8x8xf32>
    %cst_6 = arith.constant 1.000000e+00 : f32
    %8 = vector.broadcast %cst_6 : f32 to vector<16x8x16xf32>
    %9 = arith.cmpf oeq, %0, %8 : vector<16x8x16xf32>
    %cst_7 = arith.constant 0.000000e+00 : f32
    %10 = vector.broadcast %cst_7 : f32 to vector<16x8x16xf32>
    %11 = arith.select %9, %6, %10 : vector<16x8x16xi1>, vector<16x8x16xf32>
    %12 = arith.truncf %11 : vector<16x8x16xf32> to vector<16x8x16xbf16>
    %cst_8 = arith.constant 0.000000e+00 : f32
    %13 = vector.shape_cast %3 : vector<16x8x1xf32> to vector<16x8x1xf32>
    %14 = vector.broadcast %13 : vector<16x8x1xf32> to vector<16x8x16xf32>
    %15 = vector.broadcast %cst_8 : f32 to vector<16x8x16xf32>
    %16 = arith.select %9, %14, %15 : vector<16x8x16xi1>, vector<16x8x16xf32>
    %17 = arith.truncf %16 : vector<16x8x16xf32> to vector<16x8x16xbf16>
    "tpu.trace_start"() <{level = 10 : i32, message = "big,bjg->bij"}> : () -> ()
    %cst_9 = arith.constant dense<0.000000e+00> : vector<16x8x8xf32>
    %18 = tpu.matmul %12, %17, %cst_9 {dimension_numbers = #tpu.dot_dimension_numbers<[2], [2], [1], [1], [0, 0, 0, 1, 1, 1], [0], [0]>} : vector<16x8x16xbf16>, vector<16x8x16xbf16>, vector<16x8x8xf32> -> vector<16x8x8xf32>
    "tpu.trace_stop"() : () -> ()
    %19 = arith.addf %7, %18 : vector<16x8x8xf32>
    %cst_10 = arith.constant 2.000000e+00 : f32
    %20 = vector.broadcast %cst_10 : f32 to vector<16x8x16xf32>
    %21 = arith.cmpf oeq, %0, %20 : vector<16x8x16xf32>
    %cst_11 = arith.constant 0.000000e+00 : f32
    %22 = vector.broadcast %cst_11 : f32 to vector<16x8x16xf32>
    %23 = arith.select %21, %6, %22 : vector<16x8x16xi1>, vector<16x8x16xf32>
    %24 = arith.truncf %23 : vector<16x8x16xf32> to vector<16x8x16xbf16>
    %cst_12 = arith.constant 0.000000e+00 : f32
    %25 = vector.shape_cast %3 : vector<16x8x1xf32> to vector<16x8x1xf32>
    %26 = vector.broadcast %25 : vector<16x8x1xf32> to vector<16x8x16xf32>
    %27 = vector.broadcast %cst_12 : f32 to vector<16x8x16xf32>
    %28 = arith.select %21, %26, %27 : vector<16x8x16xi1>, vector<16x8x16xf32>
    %29 = arith.truncf %28 : vector<16x8x16xf32> to vector<16x8x16xbf16>
    "tpu.trace_start"() <{level = 10 : i32, message = "big,bjg->bij"}> : () -> ()
    %cst_13 = arith.constant dense<0.000000e+00> : vector<16x8x8xf32>
    %30 = tpu.matmul %24, %29, %cst_13 {dimension_numbers = #tpu.dot_dimension_numbers<[2], [2], [1], [1], [0, 0, 0, 1, 1, 1], [0], [0]>} : vector<16x8x16xbf16>, vector<16x8x16xbf16>, vector<16x8x8xf32> -> vector<16x8x8xf32>
    "tpu.trace_stop"() : () -> ()
    %31 = arith.addf %19, %30 : vector<16x8x8xf32>
    %cst_14 = arith.constant 3.000000e+00 : f32
    %32 = vector.broadcast %cst_14 : f32 to vector<16x8x16xf32>
    %33 = arith.cmpf oeq, %0, %32 : vector<16x8x16xf32>
    %cst_15 = arith.constant 0.000000e+00 : f32
    %34 = vector.broadcast %cst_15 : f32 to vector<16x8x16xf32>
    %35 = arith.select %33, %6, %34 : vector<16x8x16xi1>, vector<16x8x16xf32>
    %36 = arith.truncf %35 : vector<16x8x16xf32> to vector<16x8x16xbf16>
    %cst_16 = arith.constant 0.000000e+00 : f32
    %37 = vector.shape_cast %3 : vector<16x8x1xf32> to vector<16x8x1xf32>
    %38 = vector.broadcast %37 : vector<16x8x1xf32> to vector<16x8x16xf32>
    %39 = vector.broadcast %cst_16 : f32 to vector<16x8x16xf32>
    %40 = arith.select %33, %38, %39 : vector<16x8x16xi1>, vector<16x8x16xf32>
    %41 = arith.truncf %40 : vector<16x8x16xf32> to vector<16x8x16xbf16>
    "tpu.trace_start"() <{level = 10 : i32, message = "big,bjg->bij"}> : () -> ()
    %cst_17 = arith.constant dense<0.000000e+00> : vector<16x8x8xf32>
    %42 = tpu.matmul %36, %41, %cst_17 {dimension_numbers = #tpu.dot_dimension_numbers<[2], [2], [1], [1], [0, 0, 0, 1, 1, 1], [0], [0]>} : vector<16x8x16xbf16>, vector<16x8x16xbf16>, vector<16x8x8xf32> -> vector<16x8x8xf32>
    "tpu.trace_stop"() : () -> ()
    %43 = arith.addf %31, %42 : vector<16x8x8xf32>
    %cst_18 = arith.constant 0.000000e+00 : f32
    %44 = vector.broadcast %cst_18 : f32 to vector<16x8x8xf32>
    %45 = arith.cmpf ogt, %43, %44 : vector<16x8x8xf32>
    %cst_19 = arith.constant 1.000000e+00 : f32
    %cst_20 = arith.constant 0.000000e+00 : f32
    %46 = vector.broadcast %cst_19 : f32 to vector<16x8x8xf32>
    %47 = vector.broadcast %cst_20 : f32 to vector<16x8x8xf32>
    %48 = arith.select %45, %46, %47 : vector<16x8x8xi1>, vector<16x8x8xf32>
    %cst_21 = arith.constant dense<0xFF800000> : vector<16x8xf32>
    %49 = vector.multi_reduction <maximumf>, %43, %cst_21 [2] : vector<16x8x8xf32> to vector<16x8xf32>
    %50 = vector.shape_cast %49 : vector<16x8xf32> to vector<16x8x1xf32>
    %cst_22 = arith.constant dense<0xFF800000> : vector<16x1xf32>
    %51 = vector.multi_reduction <maximumf>, %50, %cst_22 [1] : vector<16x8x1xf32> to vector<16x1xf32>
    %52 = vector.shape_cast %51 : vector<16x1xf32> to vector<16x1x1xf32>
    %cst_23 = arith.constant 1.000000e+00 : f32
    %53 = vector.broadcast %cst_23 : f32 to vector<16x1x1xf32>
    %54 = arith.addf %52, %53 : vector<16x1x1xf32>
    %55 = math.log %54 : vector<16x1x1xf32>
    %56 = tpu.reciprocal %55 {approx = true} : vector<16x1x1xf32> -> vector<16x1x1xf32>
    %cst_24 = arith.constant -1.000000e+00 : f32
    %57 = vector.broadcast %cst_24 : f32 to vector<16x8x8xf32>
    %58 = arith.cmpf ogt, %43, %57 : vector<16x8x8xf32>
    %cst_25 = arith.constant 1.000000e+00 : f32
    %59 = vector.broadcast %cst_25 : f32 to vector<16x8x8xf32>
    %60 = arith.addf %43, %59 : vector<16x8x8xf32>
    %61 = math.log %60 : vector<16x8x8xf32>
    %62 = vector.broadcast %56 : vector<16x1x1xf32> to vector<16x8x8xf32>
    %63 = arith.mulf %61, %62 : vector<16x8x8xf32>
    %cst_26 = arith.constant 0.000000e+00 : f32
    %64 = vector.broadcast %cst_26 : f32 to vector<16x8x8xf32>
    %65 = arith.select %58, %63, %64 : vector<16x8x8xi1>, vector<16x8x8xf32>
    %66 = arith.mulf %48, %65 : vector<16x8x8xf32>
    %67 = arith.truncf %66 : vector<16x8x8xf32> to vector<16x8x8xbf16>
    "tpu.trace_start"() <{level = 10 : i32, message = "bik,bjk->bij"}> : () -> ()
    %cst_27 = arith.constant dense<0.000000e+00> : vector<16x8x8xf32>
    %68 = tpu.matmul %67, %67, %cst_27 {dimension_numbers = #tpu.dot_dimension_numbers<[2], [2], [1], [1], [0, 0, 0, 1, 1, 1], [0], [0]>} : vector<16x8x8xbf16>, vector<16x8x8xbf16>, vector<16x8x8xf32> -> vector<16x8x8xf32>
    "tpu.trace_stop"() : () -> ()
    %69 = arith.cmpf one, %68, %68 : vector<16x8x8xf32>
    %cst_28 = arith.constant 0.000000e+00 : f32
    %70 = vector.broadcast %cst_28 : f32 to vector<16x8x8xf32>
    %71 = arith.select %69, %70, %68 : vector<16x8x8xi1>, vector<16x8x8xf32>
    %cst_29 = arith.constant -3.40282347E+38 : f32
    %cst_30 = arith.constant 3.40282347E+38 : f32
    %72 = vector.broadcast %cst_29 : f32 to vector<16x8x8xf32>
    %73 = arith.maximumf %72, %71 : vector<16x8x8xf32>
    %74 = vector.broadcast %cst_30 : f32 to vector<16x8x8xf32>
    %75 = arith.minimumf %74, %73 : vector<16x8x8xf32>
    %76 = vector.extract_strided_slice %75 {offsets = [0, 0, 0], sizes = [1, 8, 8], strides = [1, 1, 1]} : vector<16x8x8xf32> to vector<1x8x8xf32>
    %77 = vector.shape_cast %76 : vector<1x8x8xf32> to vector<8x8xf32>
    %c0_31 = arith.constant 0 : index
    %c0_32 = arith.constant 0 : index
    %c0_33 = arith.constant 0 : index
    %78 = vector.load %arg3[%c0_31, %c0_32, %c0_33] : memref<1x8x128xf32, #tpu.memory_space<vmem>>, vector<1x8x8xf32>
    %79 = vector.shape_cast %78 : vector<1x8x8xf32> to vector<8x8xf32>
    %80 = vector.shape_cast %77 : vector<8x8xf32> to vector<1x8x8xf32>
    tpu.vector_store %arg3[%c0_31, %c0_32, %c0_33], %80 {strides = array<i32>} : memref<1x8x128xf32, #tpu.memory_space<vmem>>, vector<1x8x8xf32>,
    %81 = vector.extract_strided_slice %75 {offsets = [1, 0, 0], sizes = [1, 8, 8], strides = [1, 1, 1]} : vector<16x8x8xf32> to vector<1x8x8xf32>
    %82 = vector.shape_cast %81 : vector<1x8x8xf32> to vector<8x8xf32>
    %c0_34 = arith.constant 0 : index
    %c0_35 = arith.constant 0 : index
    %c8 = arith.constant 8 : index
    %83 = vector.load %arg3[%c0_34, %c0_35, %c8] : memref<1x8x128xf32, #tpu.memory_space<vmem>>, vector<1x8x8xf32>
    %84 = vector.shape_cast %83 : vector<1x8x8xf32> to vector<8x8xf32>
    %85 = vector.shape_cast %82 : vector<8x8xf32> to vector<1x8x8xf32>
    tpu.vector_store %arg3[%c0_34, %c0_35, %c8], %85 {strides = array<i32>} : memref<1x8x128xf32, #tpu.memory_space<vmem>>, vector<1x8x8xf32>,
    %86 = vector.extract_strided_slice %75 {offsets = [2, 0, 0], sizes = [1, 8, 8], strides = [1, 1, 1]} : vector<16x8x8xf32> to vector<1x8x8xf32>
    %87 = vector.shape_cast %86 : vector<1x8x8xf32> to vector<8x8xf32>
    %c0_36 = arith.constant 0 : index
    %c0_37 = arith.constant 0 : index
    %c16 = arith.constant 16 : index
    %88 = vector.load %arg3[%c0_36, %c0_37, %c16] : memref<1x8x128xf32, #tpu.memory_space<vmem>>, vector<1x8x8xf32>
    %89 = vector.shape_cast %88 : vector<1x8x8xf32> to vector<8x8xf32>
    %90 = vector.shape_cast %87 : vector<8x8xf32> to vector<1x8x8xf32>
    tpu.vector_store %arg3[%c0_36, %c0_37, %c16], %90 {strides = array<i32>} : memref<1x8x128xf32, #tpu.memory_space<vmem>>, vector<1x8x8xf32>,
    %91 = vector.extract_strided_slice %75 {offsets = [3, 0, 0], sizes = [1, 8, 8], strides = [1, 1, 1]} : vector<16x8x8xf32> to vector<1x8x8xf32>
    %92 = vector.shape_cast %91 : vector<1x8x8xf32> to vector<8x8xf32>
    %c0_38 = arith.constant 0 : index
    %c0_39 = arith.constant 0 : index
    %c24 = arith.constant 24 : index
    %93 = vector.load %arg3[%c0_38, %c0_39, %c24] : memref<1x8x128xf32, #tpu.memory_space<vmem>>, vector<1x8x8xf32>
    %94 = vector.shape_cast %93 : vector<1x8x8xf32> to vector<8x8xf32>
    %95 = vector.shape_cast %92 : vector<8x8xf32> to vector<1x8x8xf32>
    tpu.vector_store %arg3[%c0_38, %c0_39, %c24], %95 {strides = array<i32>} : memref<1x8x128xf32, #tpu.memory_space<vmem>>, vector<1x8x8xf32>,
    %96 = vector.extract_strided_slice %75 {offsets = [4, 0, 0], sizes = [1, 8, 8], strides = [1, 1, 1]} : vector<16x8x8xf32> to vector<1x8x8xf32>
    %97 = vector.shape_cast %96 : vector<1x8x8xf32> to vector<8x8xf32>
    %c0_40 = arith.constant 0 : index
    %c0_41 = arith.constant 0 : index
    %c32 = arith.constant 32 : index
    %98 = vector.load %arg3[%c0_40, %c0_41, %c32] : memref<1x8x128xf32, #tpu.memory_space<vmem>>, vector<1x8x8xf32>
    %99 = vector.shape_cast %98 : vector<1x8x8xf32> to vector<8x8xf32>
    %100 = vector.shape_cast %97 : vector<8x8xf32> to vector<1x8x8xf32>
    tpu.vector_store %arg3[%c0_40, %c0_41, %c32], %100 {strides = array<i32>} : memref<1x8x128xf32, #tpu.memory_space<vmem>>, vector<1x8x8xf32>,
    %101 = vector.extract_strided_slice %75 {offsets = [5, 0, 0], sizes = [1, 8, 8], strides = [1, 1, 1]} : vector<16x8x8xf32> to vector<1x8x8xf32>
    %102 = vector.shape_cast %101 : vector<1x8x8xf32> to vector<8x8xf32>
    %c0_42 = arith.constant 0 : index
    %c0_43 = arith.constant 0 : index
    %c40 = arith.constant 40 : index
    %103 = vector.load %arg3[%c0_42, %c0_43, %c40] : memref<1x8x128xf32, #tpu.memory_space<vmem>>, vector<1x8x8xf32>
    %104 = vector.shape_cast %103 : vector<1x8x8xf32> to vector<8x8xf32>
    %105 = vector.shape_cast %102 : vector<8x8xf32> to vector<1x8x8xf32>
    tpu.vector_store %arg3[%c0_42, %c0_43, %c40], %105 {strides = array<i32>} : memref<1x8x128xf32, #tpu.memory_space<vmem>>, vector<1x8x8xf32>,
    %106 = vector.extract_strided_slice %75 {offsets = [6, 0, 0], sizes = [1, 8, 8], strides = [1, 1, 1]} : vector<16x8x8xf32> to vector<1x8x8xf32>
    %107 = vector.shape_cast %106 : vector<1x8x8xf32> to vector<8x8xf32>
    %c0_44 = arith.constant 0 : index
    %c0_45 = arith.constant 0 : index
    %c48 = arith.constant 48 : index
    %108 = vector.load %arg3[%c0_44, %c0_45, %c48] : memref<1x8x128xf32, #tpu.memory_space<vmem>>, vector<1x8x8xf32>
    %109 = vector.shape_cast %108 : vector<1x8x8xf32> to vector<8x8xf32>
    %110 = vector.shape_cast %107 : vector<8x8xf32> to vector<1x8x8xf32>
    tpu.vector_store %arg3[%c0_44, %c0_45, %c48], %110 {strides = array<i32>} : memref<1x8x128xf32, #tpu.memory_space<vmem>>, vector<1x8x8xf32>,
    %111 = vector.extract_strided_slice %75 {offsets = [7, 0, 0], sizes = [1, 8, 8], strides = [1, 1, 1]} : vector<16x8x8xf32> to vector<1x8x8xf32>
    %112 = vector.shape_cast %111 : vector<1x8x8xf32> to vector<8x8xf32>
    %c0_46 = arith.constant 0 : index
    %c0_47 = arith.constant 0 : index
    %c56 = arith.constant 56 : index
    %113 = vector.load %arg3[%c0_46, %c0_47, %c56] : memref<1x8x128xf32, #tpu.memory_space<vmem>>, vector<1x8x8xf32>
    %114 = vector.shape_cast %113 : vector<1x8x8xf32> to vector<8x8xf32>
    %115 = vector.shape_cast %112 : vector<8x8xf32> to vector<1x8x8xf32>
    tpu.vector_store %arg3[%c0_46, %c0_47, %c56], %115 {strides = array<i32>} : memref<1x8x128xf32, #tpu.memory_space<vmem>>, vector<1x8x8xf32>,
    %116 = vector.extract_strided_slice %75 {offsets = [8, 0, 0], sizes = [1, 8, 8], strides = [1, 1, 1]} : vector<16x8x8xf32> to vector<1x8x8xf32>
    %117 = vector.shape_cast %116 : vector<1x8x8xf32> to vector<8x8xf32>
    %c0_48 = arith.constant 0 : index
    %c0_49 = arith.constant 0 : index
    %c64 = arith.constant 64 : index
    %118 = vector.load %arg3[%c0_48, %c0_49, %c64] : memref<1x8x128xf32, #tpu.memory_space<vmem>>, vector<1x8x8xf32>
    %119 = vector.shape_cast %118 : vector<1x8x8xf32> to vector<8x8xf32>
    %120 = vector.shape_cast %117 : vector<8x8xf32> to vector<1x8x8xf32>
    tpu.vector_store %arg3[%c0_48, %c0_49, %c64], %120 {strides = array<i32>} : memref<1x8x128xf32, #tpu.memory_space<vmem>>, vector<1x8x8xf32>,
    %121 = vector.extract_strided_slice %75 {offsets = [9, 0, 0], sizes = [1, 8, 8], strides = [1, 1, 1]} : vector<16x8x8xf32> to vector<1x8x8xf32>
    %122 = vector.shape_cast %121 : vector<1x8x8xf32> to vector<8x8xf32>
    %c0_50 = arith.constant 0 : index
    %c0_51 = arith.constant 0 : index
    %c72 = arith.constant 72 : index
    %123 = vector.load %arg3[%c0_50, %c0_51, %c72] : memref<1x8x128xf32, #tpu.memory_space<vmem>>, vector<1x8x8xf32>
    %124 = vector.shape_cast %123 : vector<1x8x8xf32> to vector<8x8xf32>
    %125 = vector.shape_cast %122 : vector<8x8xf32> to vector<1x8x8xf32>
    tpu.vector_store %arg3[%c0_50, %c0_51, %c72], %125 {strides = array<i32>} : memref<1x8x128xf32, #tpu.memory_space<vmem>>, vector<1x8x8xf32>,
    %126 = vector.extract_strided_slice %75 {offsets = [10, 0, 0], sizes = [1, 8, 8], strides = [1, 1, 1]} : vector<16x8x8xf32> to vector<1x8x8xf32>
    %127 = vector.shape_cast %126 : vector<1x8x8xf32> to vector<8x8xf32>
    %c0_52 = arith.constant 0 : index
    %c0_53 = arith.constant 0 : index
    %c80 = arith.constant 80 : index
    %128 = vector.load %arg3[%c0_52, %c0_53, %c80] : memref<1x8x128xf32, #tpu.memory_space<vmem>>, vector<1x8x8xf32>
    %129 = vector.shape_cast %128 : vector<1x8x8xf32> to vector<8x8xf32>
    %130 = vector.shape_cast %127 : vector<8x8xf32> to vector<1x8x8xf32>
    tpu.vector_store %arg3[%c0_52, %c0_53, %c80], %130 {strides = array<i32>} : memref<1x8x128xf32, #tpu.memory_space<vmem>>, vector<1x8x8xf32>,
    %131 = vector.extract_strided_slice %75 {offsets = [11, 0, 0], sizes = [1, 8, 8], strides = [1, 1, 1]} : vector<16x8x8xf32> to vector<1x8x8xf32>
    %132 = vector.shape_cast %131 : vector<1x8x8xf32> to vector<8x8xf32>
    %c0_54 = arith.constant 0 : index
    %c0_55 = arith.constant 0 : index
    %c88 = arith.constant 88 : index
    %133 = vector.load %arg3[%c0_54, %c0_55, %c88] : memref<1x8x128xf32, #tpu.memory_space<vmem>>, vector<1x8x8xf32>
    %134 = vector.shape_cast %133 : vector<1x8x8xf32> to vector<8x8xf32>
    %135 = vector.shape_cast %132 : vector<8x8xf32> to vector<1x8x8xf32>
    tpu.vector_store %arg3[%c0_54, %c0_55, %c88], %135 {strides = array<i32>} : memref<1x8x128xf32, #tpu.memory_space<vmem>>, vector<1x8x8xf32>,
    %136 = vector.extract_strided_slice %75 {offsets = [12, 0, 0], sizes = [1, 8, 8], strides = [1, 1, 1]} : vector<16x8x8xf32> to vector<1x8x8xf32>
    %137 = vector.shape_cast %136 : vector<1x8x8xf32> to vector<8x8xf32>
    %c0_56 = arith.constant 0 : index
    %c0_57 = arith.constant 0 : index
    %c96 = arith.constant 96 : index
    %138 = vector.load %arg3[%c0_56, %c0_57, %c96] : memref<1x8x128xf32, #tpu.memory_space<vmem>>, vector<1x8x8xf32>
    %139 = vector.shape_cast %138 : vector<1x8x8xf32> to vector<8x8xf32>
    %140 = vector.shape_cast %137 : vector<8x8xf32> to vector<1x8x8xf32>
    tpu.vector_store %arg3[%c0_56, %c0_57, %c96], %140 {strides = array<i32>} : memref<1x8x128xf32, #tpu.memory_space<vmem>>, vector<1x8x8xf32>,
    %141 = vector.extract_strided_slice %75 {offsets = [13, 0, 0], sizes = [1, 8, 8], strides = [1, 1, 1]} : vector<16x8x8xf32> to vector<1x8x8xf32>
    %142 = vector.shape_cast %141 : vector<1x8x8xf32> to vector<8x8xf32>
    %c0_58 = arith.constant 0 : index
    %c0_59 = arith.constant 0 : index
    %c104 = arith.constant 104 : index
    %143 = vector.load %arg3[%c0_58, %c0_59, %c104] : memref<1x8x128xf32, #tpu.memory_space<vmem>>, vector<1x8x8xf32>
    %144 = vector.shape_cast %143 : vector<1x8x8xf32> to vector<8x8xf32>
    %145 = vector.shape_cast %142 : vector<8x8xf32> to vector<1x8x8xf32>
    tpu.vector_store %arg3[%c0_58, %c0_59, %c104], %145 {strides = array<i32>} : memref<1x8x128xf32, #tpu.memory_space<vmem>>, vector<1x8x8xf32>,
    %146 = vector.extract_strided_slice %75 {offsets = [14, 0, 0], sizes = [1, 8, 8], strides = [1, 1, 1]} : vector<16x8x8xf32> to vector<1x8x8xf32>
    %147 = vector.shape_cast %146 : vector<1x8x8xf32> to vector<8x8xf32>
    %c0_60 = arith.constant 0 : index
    %c0_61 = arith.constant 0 : index
    %c112 = arith.constant 112 : index
    %148 = vector.load %arg3[%c0_60, %c0_61, %c112] : memref<1x8x128xf32, #tpu.memory_space<vmem>>, vector<1x8x8xf32>
    %149 = vector.shape_cast %148 : vector<1x8x8xf32> to vector<8x8xf32>
    %150 = vector.shape_cast %147 : vector<8x8xf32> to vector<1x8x8xf32>
    tpu.vector_store %arg3[%c0_60, %c0_61, %c112], %150 {strides = array<i32>} : memref<1x8x128xf32, #tpu.memory_space<vmem>>, vector<1x8x8xf32>,
    %151 = vector.extract_strided_slice %75 {offsets = [15, 0, 0], sizes = [1, 8, 8], strides = [1, 1, 1]} : vector<16x8x8xf32> to vector<1x8x8xf32>
    %152 = vector.shape_cast %151 : vector<1x8x8xf32> to vector<8x8xf32>
    %c0_62 = arith.constant 0 : index
    %c0_63 = arith.constant 0 : index
    %c120 = arith.constant 120 : index
    %153 = vector.load %arg3[%c0_62, %c0_63, %c120] : memref<1x8x128xf32, #tpu.memory_space<vmem>>, vector<1x8x8xf32>
    %154 = vector.shape_cast %153 : vector<1x8x8xf32> to vector<8x8xf32>
    %155 = vector.shape_cast %152 : vector<8x8xf32> to vector<1x8x8xf32>
    tpu.vector_store %arg3[%c0_62, %c0_63, %c120], %155 {strides = array<i32>} : memref<1x8x128xf32, #tpu.memory_space<vmem>>, vector<1x8x8xf32>,
    return
  }
  func.func @transform_0(%arg0: i32) -> (i32, i32, i32) {
    %c0_i32 = arith.constant 0 : i32
    %c0_i32_0 = arith.constant 0 : i32
    %c0_i32_1 = arith.constant 0 : i32
    return %arg0, %c0_i32, %c0_i32_0 : i32, i32, i32
  }
  func.func @transform_1(%arg0: i32) -> (i32, i32, i32) {
    %c0_i32 = arith.constant 0 : i32
    %c0_i32_0 = arith.constant 0 : i32
    %c0_i32_1 = arith.constant 0 : i32
    return %arg0, %c0_i32, %c0_i32_0 : i32, i32, i32
  }
  func.func @transform_2(%arg0: i32) -> (i32, i32, i32) {
    %c0_i32 = arith.constant 0 : i32
    %c0_i32_0 = arith.constant 0 : i32
    %c0_i32_1 = arith.constant 0 : i32
    return %arg0, %c0_i32, %c0_i32_0 : i32, i32, i32
  }
}

</mosaic_0001>

<llo_original>
// kernel: tpu_custom_call.1
$region0: #{tpu_custom_call.1}
  #allocation0 [shape = 'u32[]', space=smem, size = 0x4, offset = 0x4, fixed_abs, tag = 'smem constant byte address 0x4 - core index']
  #allocation1 [shape = 'u32[144,128]{1,0:T(1,128)}', space=vmem, size = 0x12000, scoped, tag = 'internal scratch']
  %s0 = inlined_call_operand.vmem [shape: f32[32,8,16], index: 0, kind: input, shape index: {}]
  %s1 = inlined_call_operand.vmem [shape: f32[32,1,16], index: 1, kind: input, shape index: {}]
  %s2 = inlined_call_operand.hbm [shape: f32[2,8,128], index: 2, kind: output, shape index: {}]
  %s3 = sld [smem:[#allocation0]]
  $region41: #{tpu_custom_call.1} parent=0
    _
  %s5 = ssub.s32 1, %s3
  %s6 = scalar_select 0, %s5, %s3
  $region1: #{tpu_custom_call.1} parent=0
    #allocation2 [shape = 'u8[8192]{0}', space=vmem, size = 0x2000, scoped, tag = 'output window, operand 0']
    #allocation3 [shape = 's32[2]{0}', space=sflag, size = 0x8, scoped, tag = 'scoped memory for tpu_custom_call.1']
    %7 = vsyncpa [#allocation3], 0
    %s8 = scalar_lea.sflag [#allocation3], 1
    %9 = vsyncpa %s8, 0
    loop: start=0, step=1, limit=4
    $region2: #{tpu_custom_call.1} parent=1 // loop_pre_header
      _
    $region3: #{tpu_custom_call.1} parent=1 // loop_header
      %s11 = sphi 0, %s15
      %p12 = scmp.ge.s32.totalorder %s11, 4
      %s21 = sphi 0, %s23
      %s24 = sphi 0, %s21
      %s25 = sphi 0, %s24
      %s41 = sphi 0, %s25
      %s47 = sphi 0, %s49
      %s50 = sphi 0, %s47
      %s51 = sphi 0, %s50
      %s67 = sphi 0, %s51
      %s73 = sphi 0, %s75
      %s76 = sphi 0, %s73
      %s77 = sphi 0, %s76
      %s93 = sphi 0, %s77
    $region4: #{tpu_custom_call.1} parent=1 // loop_header_branch
      %14 = sbr.rel (%p12) target = $region8
    $region5: #{tpu_custom_call.1} parent=1 // loop_body
      %s16 = ssub.s32 %s11, 1
      %s17 = ssub.s32 %s11, 2
      %s18 = sadd.s32 %s11, 1
      %s19 = ssub.s32 %s11, %s18
      %p20 = scmp.eq.s32.totalorder %s19, 0
      %s22 = sadd.s32 %s21, 1
      %s23 = scalar_select %p20, %s21, %s22
      %p26 = pneg %p20
      %p27 = scmp.eq.s32.totalorder %s11, 1
      %p28 = por %p26, %p27
      %p29 = scmp.ne.s32.totalorder %s21, %s24
      %p30 = scmp.eq.s32.totalorder %s11, 0
      %p31 = por %p29, %p30
      %p32 = scmp.ne.s32.totalorder %s21, %s24
      %p33 = scmp.eq.s32.totalorder %s16, 1
      %p34 = por %p32, %p33
      %p35 = scmp.ne.s32.totalorder %s24, %s25
      %p36 = scmp.eq.s32.totalorder %s16, 0
      %p37 = por %p35, %p36
      %p38 = scmp.ne.s32.totalorder %s24, %s25
      %p39 = scmp.eq.s32.totalorder %s17, 1
      %p40 = por %p38, %p39
      %p42 = scmp.ne.s32.totalorder %s25, %s41
      %p43 = scmp.eq.s32.totalorder %s17, 0
      %p44 = por %p42, %p43
      %s45 = ssub.s32 %s11, %s18
      %p46 = scmp.eq.s32.totalorder %s45, 0
      %s48 = sadd.s32 %s47, 1
      %s49 = scalar_select %p46, %s47, %s48
      %p52 = pneg %p46
      %p53 = scmp.eq.s32.totalorder %s11, 1
      %p54 = por %p52, %p53
      %p55 = scmp.ne.s32.totalorder %s47, %s50
      %p56 = scmp.eq.s32.totalorder %s11, 0
      %p57 = por %p55, %p56
      %p58 = scmp.ne.s32.totalorder %s47, %s50
      %p59 = scmp.eq.s32.totalorder %s16, 1
      %p60 = por %p58, %p59
      %p61 = scmp.ne.s32.totalorder %s50, %s51
      %p62 = scmp.eq.s32.totalorder %s16, 0
      %p63 = por %p61, %p62
      %p64 = scmp.ne.s32.totalorder %s50, %s51
      %p65 = scmp.eq.s32.totalorder %s17, 1
      %p66 = por %p64, %p65
      %p68 = scmp.ne.s32.totalorder %s51, %s67
      %p69 = scmp.eq.s32.totalorder %s17, 0
      %p70 = por %p68, %p69
      %s71 = ssub.s32 %s11, %s18
      %p72 = scmp.eq.s32.totalorder %s71, 0
      %s74 = sadd.s32 %s73, 1
      %s75 = scalar_select %p72, %s73, %s74
      %p78 = pneg %p72
      %p79 = scmp.eq.s32.totalorder %s11, 1
      %p80 = por %p78, %p79
      %p81 = scmp.ne.s32.totalorder %s73, %s76
      %p82 = scmp.eq.s32.totalorder %s11, 0
      %p83 = por %p81, %p82
      %p84 = scmp.ne.s32.totalorder %s73, %s76
      %p85 = scmp.eq.s32.totalorder %s16, 1
      %p86 = por %p84, %p85
      %p87 = scmp.ne.s32.totalorder %s76, %s77
      %p88 = scmp.eq.s32.totalorder %s16, 0
      %p89 = por %p87, %p88
      %p90 = scmp.ne.s32.totalorder %s76, %s77
      %p91 = scmp.eq.s32.totalorder %s17, 1
      %p92 = por %p90, %p91
      %p94 = scmp.ne.s32.totalorder %s77, %s93
      %p95 = scmp.eq.s32.totalorder %s17, 0
      %p96 = por %p94, %p95
      %p97 = scmp.le.s32.totalorder 1, %s11
      %p98 = scmp.lt.s32.totalorder %s11, 3
      %p99 = pnand %p97, %p98
      %p100 = pneg %p99
      // Predicated region
      $region9: #{tpu_custom_call.1} parent=5 // pred_check
        _
      $region10: #{tpu_custom_call.1} parent=5 // pred_check_branch
        %102 = sbr.rel (%p99) target = $region12
      $region11: #{tpu_custom_call.1} parent=5 // pred_region
        %s103 = ssub.s32 %s11, 1
      $region12: #{tpu_custom_call.1} parent=5 // pred_fallthru
        _
      %p104 = scmp.lt.s32.totalorder %s11, 2
      // Predicated region
      $region13: #{tpu_custom_call.1} parent=5 // pred_check
        %p105 = pneg %p104
      $region14: #{tpu_custom_call.1} parent=5 // pred_check_branch
        %107 = sbr.rel (%p105) target = $region16
      $region15: #{tpu_custom_call.1} parent=5 // pred_region
        // Predicated region
        $region17: #{tpu_custom_call.1} parent=15 // pred_check
          %p108 = pneg %p31
        $region18: #{tpu_custom_call.1} parent=15 // pred_check_branch
          %110 = sbr.rel (%p108) target = $region20
        $region19: #{tpu_custom_call.1} parent=15 // pred_region
          %s111 = smul.u32 16, %s11
          %p112 = scmp.lt.s32.totalorder %s111, 31
          %s113 = scalar_select %p112, %s111, 31
          %s114 = smul.addr %s113, 8
          %s115 = scalar_lea.vmem %s0, %s114
          %s116 = smul.u32 16, %s11
        $region20: #{tpu_custom_call.1} parent=15 // pred_fallthru
          _
        // Predicated region
        $region21: #{tpu_custom_call.1} parent=15 // pred_check
          %p117 = pneg %p57
        $region22: #{tpu_custom_call.1} parent=15 // pred_check_branch
          %119 = sbr.rel (%p117) target = $region24
        $region23: #{tpu_custom_call.1} parent=15 // pred_region
          %s120 = smul.u32 16, %s11
          %p121 = scmp.lt.s32.totalorder %s120, 31
          %s122 = scalar_select %p121, %s120, 31
          %s123 = scalar_lea.vmem %s1, %s122
          %s124 = smul.u32 16, %s11
        $region24: #{tpu_custom_call.1} parent=15 // pred_fallthru
          _
      $region16: #{tpu_custom_call.1} parent=5 // pred_fallthru
        _
      %p125 = scmp.le.s32.totalorder 1, %s11
      %p126 = scmp.lt.s32.totalorder %s11, 3
      %p127 = pnand %p125, %p126
      %p128 = pneg %p127
      // Predicated region
      $region25: #{tpu_custom_call.1} parent=5 // pred_check
        _
      $region26: #{tpu_custom_call.1} parent=5 // pred_check_branch
        %130 = sbr.rel (%p127) target = $region28
      $region27: #{tpu_custom_call.1} parent=5 // pred_region
        %s131 = ssub.s32 %s11, 1
        %s132 = smul.u32 16, %s16
        %p133 = scmp.lt.s32.totalorder %s132, 31
        %s134 = scalar_select %p133, %s132, 31
        %s135 = smul.addr %s134, 8
        %s136 = scalar_lea.vmem %s0, %s135
        %p137 = pneg %p37
        %p138 = pneg %p34
        %s139 = smul.u32 16, %s16
        %p140 = scmp.lt.s32.totalorder %s139, 31
        %s141 = scalar_select %p140, %s139, 31
        %s142 = scalar_lea.vmem %s1, %s141
        %p143 = pneg %p63
        %p144 = pneg %p60
        %p145 = pneg %p89
        %p146 = pneg %p86
        %s147 = sand.u32 %s76, 1
        %s148 = scalar_lea.sflag [#allocation3], %s147
        %s149 = sand.u32 %s76, 1
        %s150 = smul.addr %s149, 8
        %s151 = scalar_lea.vmem [#allocation2], %s150
        %s152 = smul.u32 16, %s16
        %p153 = scmp.lt.s32.totalorder %s152, 31
        %s154 = scalar_select %p153, %s152, 31
        %s155 = smul.addr %s154, 8
        %s156 = scalar_lea.vmem %s0, %s155
        %s157 = smul.u32 16, %s16
        %s158 = smul.u32 16, %s16
        %p159 = scmp.lt.s32.totalorder %s158, 31
        %s160 = scalar_select %p159, %s158, 31
        %s161 = scalar_lea.vmem %s1, %s160
        %s162 = smul.u32 16, %s16
        %v164 = vld [vmem:[%s156] sm:$0xff]
        %v165 = vld [vmem:[%s156 + $0x8] sm:$0xff]
        %v166 = vld [vmem:[%s156 + $0x10] sm:$0xff]
        %v167 = vld [vmem:[%s156 + $0x18] sm:$0xff]
        %v168 = vld [vmem:[%s156 + $0x20] sm:$0xff]
        %v169 = vld [vmem:[%s156 + $0x28] sm:$0xff]
        %v170 = vld [vmem:[%s156 + $0x30] sm:$0xff]
        %v171 = vld [vmem:[%s156 + $0x38] sm:$0xff]
        %v172 = vld [vmem:[%s156 + $0x40] sm:$0xff]
        %v173 = vld [vmem:[%s156 + $0x48] sm:$0xff]
        %v174 = vld [vmem:[%s156 + $0x50] sm:$0xff]
        %v175 = vld [vmem:[%s156 + $0x58] sm:$0xff]
        %v176 = vld [vmem:[%s156 + $0x60] sm:$0xff]
        %v177 = vld [vmem:[%s156 + $0x68] sm:$0xff]
        %v178 = vld [vmem:[%s156 + $0x70] sm:$0xff]
        %v179 = vld [vmem:[%s156 + $0x78] sm:$0xff]
        %v180 = vld [vmem:[%s161] sm:$0x1]
        %v181 = vld [vmem:[%s161 + $0x1] sm:$0x1]
        %v182 = vld [vmem:[%s161 + $0x2] sm:$0x1]
        %v183 = vld [vmem:[%s161 + $0x3] sm:$0x1]
        %v184 = vld [vmem:[%s161 + $0x4] sm:$0x1]
        %v185 = vld [vmem:[%s161 + $0x5] sm:$0x1]
        %v186 = vld [vmem:[%s161 + $0x6] sm:$0x1]
        %v187 = vld [vmem:[%s161 + $0x7] sm:$0x1]
        %v188 = vld [vmem:[%s161 + $0x8] sm:$0x1]
        %v189 = vld [vmem:[%s161 + $0x9] sm:$0x1]
        %v190 = vld [vmem:[%s161 + $0xa] sm:$0x1]
        %v191 = vld [vmem:[%s161 + $0xb] sm:$0x1]
        %v192 = vld [vmem:[%s161 + $0xc] sm:$0x1]
        %v193 = vld [vmem:[%s161 + $0xd] sm:$0x1]
        %v194 = vld [vmem:[%s161 + $0xe] sm:$0x1]
        %v195 = vld [vmem:[%s161 + $0xf] sm:$0x1]
        %vm196 = vcmask 130048
        %v197 = vsel %vm196, %v164, 0.0
        %198 = vadd.xlane.f32.xlu0 %v197
        %v199 = vpop.xlane.xlu0 %198
        %v200 = vsel %vm196, %v165, 0.0
        %201 = vadd.xlane.f32.xlu0 %v200
        %v202 = vpop.xlane.xlu0 %201
        %v203 = vsel %vm196, %v166, 0.0
        %204 = vadd.xlane.f32.xlu0 %v203
        %v205 = vpop.xlane.xlu0 %204
        %v206 = vsel %vm196, %v167, 0.0
        %207 = vadd.xlane.f32.xlu0 %v206
        %v208 = vpop.xlane.xlu0 %207
        %v209 = vsel %vm196, %v168, 0.0
        %210 = vadd.xlane.f32.xlu0 %v209
        %v211 = vpop.xlane.xlu0 %210
        %v212 = vsel %vm196, %v169, 0.0
        %213 = vadd.xlane.f32.xlu0 %v212
        %v214 = vpop.xlane.xlu0 %213
        %v215 = vsel %vm196, %v170, 0.0
        %216 = vadd.xlane.f32.xlu0 %v215
        %v217 = vpop.xlane.xlu0 %216
        %v218 = vsel %vm196, %v171, 0.0
        %219 = vadd.xlane.f32.xlu0 %v218
        %v220 = vpop.xlane.xlu0 %219
        %v221 = vsel %vm196, %v172, 0.0
        %222 = vadd.xlane.f32.xlu0 %v221
        %v223 = vpop.xlane.xlu0 %222
        %v224 = vsel %vm196, %v173, 0.0
        %225 = vadd.xlane.f32.xlu0 %v224
        %v226 = vpop.xlane.xlu0 %225
        %v227 = vsel %vm196, %v174, 0.0
        %228 = vadd.xlane.f32.xlu0 %v227
        %v229 = vpop.xlane.xlu0 %228
        %v230 = vsel %vm196, %v175, 0.0
        %231 = vadd.xlane.f32.xlu0 %v230
        %v232 = vpop.xlane.xlu0 %231
        %v233 = vsel %vm196, %v176, 0.0
        %234 = vadd.xlane.f32.xlu0 %v233
        %v235 = vpop.xlane.xlu0 %234
        %v236 = vsel %vm196, %v177, 0.0
        %237 = vadd.xlane.f32.xlu0 %v236
        %v238 = vpop.xlane.xlu0 %237
        %v239 = vsel %vm196, %v178, 0.0
        %240 = vadd.xlane.f32.xlu0 %v239
        %v241 = vpop.xlane.xlu0 %240
        %v242 = vsel %vm196, %v179, 0.0
        %243 = vadd.xlane.f32.xlu0 %v242
        %v244 = vpop.xlane.xlu0 %243
        %v261 = vlaneseq
        %v262 = vshrl.u32 %v261, 7
        %v263 = vsub.s32 0, %v262
        %v264 = vrot.slane %v180, %v263
        %v265 = vlaneseq
        %v266 = vshrl.u32 %v265, 7
        %v267 = vsub.s32 0, %v266
        %v268 = vrot.slane %v181, %v267
        %v269 = vlaneseq
        %v270 = vshrl.u32 %v269, 7
        %v271 = vsub.s32 0, %v270
        %v272 = vrot.slane %v182, %v271
        %v273 = vlaneseq
        %v274 = vshrl.u32 %v273, 7
        %v275 = vsub.s32 0, %v274
        %v276 = vrot.slane %v183, %v275
        %v277 = vlaneseq
        %v278 = vshrl.u32 %v277, 7
        %v279 = vsub.s32 0, %v278
        %v280 = vrot.slane %v184, %v279
        %v281 = vlaneseq
        %v282 = vshrl.u32 %v281, 7
        %v283 = vsub.s32 0, %v282
        %v284 = vrot.slane %v185, %v283
        %v285 = vlaneseq
        %v286 = vshrl.u32 %v285, 7
        %v287 = vsub.s32 0, %v286
        %v288 = vrot.slane %v186, %v287
        %v289 = vlaneseq
        %v290 = vshrl.u32 %v289, 7
        %v291 = vsub.s32 0, %v290
        %v292 = vrot.slane %v187, %v291
        %v293 = vlaneseq
        %v294 = vshrl.u32 %v293, 7
        %v295 = vsub.s32 0, %v294
        %v296 = vrot.slane %v188, %v295
        %v297 = vlaneseq
        %v298 = vshrl.u32 %v297, 7
        %v299 = vsub.s32 0, %v298
        %v300 = vrot.slane %v189, %v299
        %v301 = vlaneseq
        %v302 = vshrl.u32 %v301, 7
        %v303 = vsub.s32 0, %v302
        %v304 = vrot.slane %v190, %v303
        %v305 = vlaneseq
        %v306 = vshrl.u32 %v305, 7
        %v307 = vsub.s32 0, %v306
        %v308 = vrot.slane %v191, %v307
        %v309 = vlaneseq
        %v310 = vshrl.u32 %v309, 7
        %v311 = vsub.s32 0, %v310
        %v312 = vrot.slane %v192, %v311
        %v313 = vlaneseq
        %v314 = vshrl.u32 %v313, 7
        %v315 = vsub.s32 0, %v314
        %v316 = vrot.slane %v193, %v315
        %v317 = vlaneseq
        %v318 = vshrl.u32 %v317, 7
        %v319 = vsub.s32 0, %v318
        %v320 = vrot.slane %v194, %v319
        %v321 = vlaneseq
        %v322 = vshrl.u32 %v321, 7
        %v323 = vsub.s32 0, %v322
        %v324 = vrot.slane %v195, %v323
        %v341 = vmul.f32 %v199, %v264
        %v342 = vmul.f32 %v202, %v268
        %v343 = vmul.f32 %v205, %v272
        %v344 = vmul.f32 %v208, %v276
        %v345 = vmul.f32 %v211, %v280
        %v346 = vmul.f32 %v214, %v284
        %v347 = vmul.f32 %v217, %v288
        %v348 = vmul.f32 %v220, %v292
        %v349 = vmul.f32 %v223, %v296
        %v350 = vmul.f32 %v226, %v300
        %v351 = vmul.f32 %v229, %v304
        %v352 = vmul.f32 %v232, %v308
        %v353 = vmul.f32 %v235, %v312
        %v354 = vmul.f32 %v238, %v316
        %v355 = vmul.f32 %v241, %v320
        %v356 = vmul.f32 %v244, %v324
        %vm357 = vcmp.eq.f32.partialorder %v164, 1.0
        %vm358 = vcmp.eq.f32.partialorder %v165, 1.0
        %vm359 = vcmp.eq.f32.partialorder %v166, 1.0
        %vm360 = vcmp.eq.f32.partialorder %v167, 1.0
        %vm361 = vcmp.eq.f32.partialorder %v168, 1.0
        %vm362 = vcmp.eq.f32.partialorder %v169, 1.0
        %vm363 = vcmp.eq.f32.partialorder %v170, 1.0
        %vm364 = vcmp.eq.f32.partialorder %v171, 1.0
        %vm365 = vcmp.eq.f32.partialorder %v172, 1.0
        %vm366 = vcmp.eq.f32.partialorder %v173, 1.0
        %vm367 = vcmp.eq.f32.partialorder %v174, 1.0
        %vm368 = vcmp.eq.f32.partialorder %v175, 1.0
        %vm369 = vcmp.eq.f32.partialorder %v176, 1.0
        %vm370 = vcmp.eq.f32.partialorder %v177, 1.0
        %vm371 = vcmp.eq.f32.partialorder %v178, 1.0
        %vm372 = vcmp.eq.f32.partialorder %v179, 1.0
        %v373 = vsel %vm357, %v341, 0.0
        %v374 = vsel %vm358, %v342, 0.0
        %v375 = vsel %vm359, %v343, 0.0
        %v376 = vsel %vm360, %v344, 0.0
        %v377 = vsel %vm361, %v345, 0.0
        %v378 = vsel %vm362, %v346, 0.0
        %v379 = vsel %vm363, %v347, 0.0
        %v380 = vsel %vm364, %v348, 0.0
        %v381 = vsel %vm365, %v349, 0.0
        %v382 = vsel %vm366, %v350, 0.0
        %v383 = vsel %vm367, %v351, 0.0
        %v384 = vsel %vm368, %v352, 0.0
        %v385 = vsel %vm369, %v353, 0.0
        %v386 = vsel %vm370, %v354, 0.0
        %v387 = vsel %vm371, %v355, 0.0
        %v388 = vsel %vm372, %v356, 0.0
        %v389 = vpack.c.bf16 %v373, %v373
        %v390 = vpack.c.bf16 %v374, %v374
        %v391 = vpack.c.bf16 %v375, %v375
        %v392 = vpack.c.bf16 %v376, %v376
        %v393 = vpack.c.bf16 %v377, %v377
        %v394 = vpack.c.bf16 %v378, %v378
        %v395 = vpack.c.bf16 %v379, %v379
        %v396 = vpack.c.bf16 %v380, %v380
        %v397 = vpack.c.bf16 %v381, %v381
        %v398 = vpack.c.bf16 %v382, %v382
        %v399 = vpack.c.bf16 %v383, %v383
        %v400 = vpack.c.bf16 %v384, %v384
        %v401 = vpack.c.bf16 %v385, %v385
        %v402 = vpack.c.bf16 %v386, %v386
        %v403 = vpack.c.bf16 %v387, %v387
        %v404 = vpack.c.bf16 %v388, %v388
        %v405 = vsel %vm357, %v199, 0.0
        %v406 = vsel %vm358, %v202, 0.0
        %v407 = vsel %vm359, %v205, 0.0
        %v408 = vsel %vm360, %v208, 0.0
        %v409 = vsel %vm361, %v211, 0.0
        %v410 = vsel %vm362, %v214, 0.0
        %v411 = vsel %vm363, %v217, 0.0
        %v412 = vsel %vm364, %v220, 0.0
        %v413 = vsel %vm365, %v223, 0.0
        %v414 = vsel %vm366, %v226, 0.0
        %v415 = vsel %vm367, %v229, 0.0
        %v416 = vsel %vm368, %v232, 0.0
        %v417 = vsel %vm369, %v235, 0.0
        %v418 = vsel %vm370, %v238, 0.0
        %v419 = vsel %vm371, %v241, 0.0
        %v420 = vsel %vm372, %v244, 0.0
        %v421 = vpack.c.bf16 %v405, %v405
        %v422 = vpack.c.bf16 %v406, %v406
        %v423 = vpack.c.bf16 %v407, %v407
        %v424 = vpack.c.bf16 %v408, %v408
        %v425 = vpack.c.bf16 %v409, %v409
        %v426 = vpack.c.bf16 %v410, %v410
        %v427 = vpack.c.bf16 %v411, %v411
        %v428 = vpack.c.bf16 %v412, %v412
        %v429 = vpack.c.bf16 %v413, %v413
        %v430 = vpack.c.bf16 %v414, %v414
        %v431 = vpack.c.bf16 %v415, %v415
        %v432 = vpack.c.bf16 %v416, %v416
        %v433 = vpack.c.bf16 %v417, %v417
        %v434 = vpack.c.bf16 %v418, %v418
        %v435 = vpack.c.bf16 %v419, %v419
        %v436 = vpack.c.bf16 %v420, %v420
        %vm437 = vcmp.eq.f32.partialorder %v164, 2.0
        %vm438 = vcmp.eq.f32.partialorder %v165, 2.0
        %vm439 = vcmp.eq.f32.partialorder %v166, 2.0
        %vm440 = vcmp.eq.f32.partialorder %v167, 2.0
        %vm441 = vcmp.eq.f32.partialorder %v168, 2.0
        %vm442 = vcmp.eq.f32.partialorder %v169, 2.0
        %vm443 = vcmp.eq.f32.partialorder %v170, 2.0
        %vm444 = vcmp.eq.f32.partialorder %v171, 2.0
        %vm445 = vcmp.eq.f32.partialorder %v172, 2.0
        %vm446 = vcmp.eq.f32.partialorder %v173, 2.0
        %vm447 = vcmp.eq.f32.partialorder %v174, 2.0
        %vm448 = vcmp.eq.f32.partialorder %v175, 2.0
        %vm449 = vcmp.eq.f32.partialorder %v176, 2.0
        %vm450 = vcmp.eq.f32.partialorder %v177, 2.0
        %vm451 = vcmp.eq.f32.partialorder %v178, 2.0
        %vm452 = vcmp.eq.f32.partialorder %v179, 2.0
        %v453 = vsel %vm437, %v341, 0.0
        %v454 = vsel %vm438, %v342, 0.0
        %v455 = vsel %vm439, %v343, 0.0
        %v456 = vsel %vm440, %v344, 0.0
        %v457 = vsel %vm441, %v345, 0.0
        %v458 = vsel %vm442, %v346, 0.0
        %v459 = vsel %vm443, %v347, 0.0
        %v460 = vsel %vm444, %v348, 0.0
        %v461 = vsel %vm445, %v349, 0.0
        %v462 = vsel %vm446, %v350, 0.0
        %v463 = vsel %vm447, %v351, 0.0
        %v464 = vsel %vm448, %v352, 0.0
        %v465 = vsel %vm449, %v353, 0.0
        %v466 = vsel %vm450, %v354, 0.0
        %v467 = vsel %vm451, %v355, 0.0
        %v468 = vsel %vm452, %v356, 0.0
        %v469 = vpack.c.bf16 %v453, %v453
        %v470 = vpack.c.bf16 %v454, %v454
        %v471 = vpack.c.bf16 %v455, %v455
        %v472 = vpack.c.bf16 %v456, %v456
        %v473 = vpack.c.bf16 %v457, %v457
        %v474 = vpack.c.bf16 %v458, %v458
        %v475 = vpack.c.bf16 %v459, %v459
        %v476 = vpack.c.bf16 %v460, %v460
        %v477 = vpack.c.bf16 %v461, %v461
        %v478 = vpack.c.bf16 %v462, %v462
        %v479 = vpack.c.bf16 %v463, %v463
        %v480 = vpack.c.bf16 %v464, %v464
        %v481 = vpack.c.bf16 %v465, %v465
        %v482 = vpack.c.bf16 %v466, %v466
        %v483 = vpack.c.bf16 %v467, %v467
        %v484 = vpack.c.bf16 %v468, %v468
        %v485 = vsel %vm437, %v199, 0.0
        %v486 = vsel %vm438, %v202, 0.0
        %v487 = vsel %vm439, %v205, 0.0
        %v488 = vsel %vm440, %v208, 0.0
        %v489 = vsel %vm441, %v211, 0.0
        %v490 = vsel %vm442, %v214, 0.0
        %v491 = vsel %vm443, %v217, 0.0
        %v492 = vsel %vm444, %v220, 0.0
        %v493 = vsel %vm445, %v223, 0.0
        %v494 = vsel %vm446, %v226, 0.0
        %v495 = vsel %vm447, %v229, 0.0
        %v496 = vsel %vm448, %v232, 0.0
        %v497 = vsel %vm449, %v235, 0.0
        %v498 = vsel %vm450, %v238, 0.0
        %v499 = vsel %vm451, %v241, 0.0
        %v500 = vsel %vm452, %v244, 0.0
        %v501 = vpack.c.bf16 %v485, %v485
        %v502 = vpack.c.bf16 %v486, %v486
        %v503 = vpack.c.bf16 %v487, %v487
        %v504 = vpack.c.bf16 %v488, %v488
        %v505 = vpack.c.bf16 %v489, %v489
        %v506 = vpack.c.bf16 %v490, %v490
        %v507 = vpack.c.bf16 %v491, %v491
        %v508 = vpack.c.bf16 %v492, %v492
        %v509 = vpack.c.bf16 %v493, %v493
        %v510 = vpack.c.bf16 %v494, %v494
        %v511 = vpack.c.bf16 %v495, %v495
        %v512 = vpack.c.bf16 %v496, %v496
        %v513 = vpack.c.bf16 %v497, %v497
        %v514 = vpack.c.bf16 %v498, %v498
        %v515 = vpack.c.bf16 %v499, %v499
        %v516 = vpack.c.bf16 %v500, %v500
        %v518 = vsel %vm196, %v469, 0
        %v521 = vsel %vm196, %v501, 0
        %523 = vmatprep.subr.bf16.mxu0 0
        %524 = vmatpush1.bf16.xpose.msra.mxu0 %v521
        %525 = vmatprep.subr.bf16.mxu0 0
        %526 = vmatpush1.bf16.xpose.msra.mxu0 0
        %527 = vmatprep.subr.bf16.mxu0 0
        %528 = vmatpush1.bf16.xpose.msra.mxu0 0
        %529 = vmatprep.subr.bf16.mxu0 0
        %530 = vmatpush1.bf16.xpose.msra.mxu0 0
        %531 = vmatprep.subr.bf16.mxu0 0
        %532 = vmatpush1.bf16.xpose.msra.mxu0 0
        %533 = vmatprep.subr.bf16.mxu0 0
        %534 = vmatpush1.bf16.xpose.msra.mxu0 0
        %535 = vmatprep.subr.bf16.mxu0 0
        %536 = vmatpush1.bf16.xpose.msra.mxu0 0
        %537 = vmatprep.subr.bf16.mxu0 0
        %538 = vmatpush1.bf16.xpose.msra.mxu0 0
        %539 = vmatprep.subr.bf16.mxu0 0
        %540 = vmatpush1.bf16.xpose.msra.mxu0 0
        %541 = vmatprep.subr.bf16.mxu0 0
        %542 = vmatpush1.bf16.xpose.msra.mxu0 0
        %543 = vmatprep.subr.bf16.mxu0 0
        %544 = vmatpush1.bf16.xpose.msra.mxu0 0
        %545 = vmatprep.subr.bf16.mxu0 0
        %546 = vmatpush1.bf16.xpose.msra.mxu0 0
        %547 = vmatprep.subr.bf16.mxu0 0
        %548 = vmatpush1.bf16.xpose.msra.mxu0 0
        %549 = vmatprep.subr.bf16.mxu0 0
        %550 = vmatpush1.bf16.xpose.msra.mxu0 0
        %551 = vmatprep.subr.bf16.mxu0 0
        %552 = vmatpush1.bf16.xpose.msra.mxu0 0
        %553 = vmatprep.subr.bf16.mxu0 0
        %554 = vmatpush1.bf16.xpose.msra.mxu0 0
        %555 = vmatprep.mubr.bf16.mxu0 0
        %556 = vmatmul.mubr.bf16.gmra.mrb[0].mxu0 %v518
        %v557 = vpop.f32.mrb[0].mxu0
        %v558 = vadd.f32 0.0, %v557
        %v559 = vpop.f32.mrb[0].mxu0
        %v560 = vpop.f32.mrb[0].mxu0
        %v561 = vpop.f32.mrb[0].mxu0
        %562 = vdwg.mxu0
        %v564 = vsel %vm196, %v470, 0
        %v567 = vsel %vm196, %v502, 0
        %569 = vmatprep.subr.bf16.mxu0 0
        %570 = vmatpush1.bf16.xpose.msra.mxu0 %v567
        %571 = vmatprep.subr.bf16.mxu0 0
        %572 = vmatpush1.bf16.xpose.msra.mxu0 0
        %573 = vmatprep.subr.bf16.mxu0 0
        %574 = vmatpush1.bf16.xpose.msra.mxu0 0
        %575 = vmatprep.subr.bf16.mxu0 0
        %576 = vmatpush1.bf16.xpose.msra.mxu0 0
        %577 = vmatprep.subr.bf16.mxu0 0
        %578 = vmatpush1.bf16.xpose.msra.mxu0 0
        %579 = vmatprep.subr.bf16.mxu0 0
        %580 = vmatpush1.bf16.xpose.msra.mxu0 0
        %581 = vmatprep.subr.bf16.mxu0 0
        %582 = vmatpush1.bf16.xpose.msra.mxu0 0
        %583 = vmatprep.subr.bf16.mxu0 0
        %584 = vmatpush1.bf16.xpose.msra.mxu0 0
        %585 = vmatprep.subr.bf16.mxu0 0
        %586 = vmatpush1.bf16.xpose.msra.mxu0 0
        %587 = vmatprep.subr.bf16.mxu0 0
        %588 = vmatpush1.bf16.xpose.msra.mxu0 0
        %589 = vmatprep.subr.bf16.mxu0 0
        %590 = vmatpush1.bf16.xpose.msra.mxu0 0
        %591 = vmatprep.subr.bf16.mxu0 0
        %592 = vmatpush1.bf16.xpose.msra.mxu0 0
        %593 = vmatprep.subr.bf16.mxu0 0
        %594 = vmatpush1.bf16.xpose.msra.mxu0 0
        %595 = vmatprep.subr.bf16.mxu0 0
        %596 = vmatpush1.bf16.xpose.msra.mxu0 0
        %597 = vmatprep.subr.bf16.mxu0 0
        %598 = vmatpush1.bf16.xpose.msra.mxu0 0
        %599 = vmatprep.subr.bf16.mxu0 0
        %600 = vmatpush1.bf16.xpose.msra.mxu0 0
        %601 = vmatprep.mubr.bf16.mxu0 0
        %602 = vmatmul.mubr.bf16.gmra.mrb[0].mxu0 %v564
        %v603 = vpop.f32.mrb[0].mxu0
        %v604 = vadd.f32 0.0, %v603
        %v605 = vpop.f32.mrb[0].mxu0
        %v606 = vpop.f32.mrb[0].mxu0
        %v607 = vpop.f32.mrb[0].mxu0
        %608 = vdwg.mxu0
        %v610 = vsel %vm196, %v471, 0
        %v613 = vsel %vm196, %v503, 0
        %615 = vmatprep.subr.bf16.mxu0 0
        %616 = vmatpush1.bf16.xpose.msra.mxu0 %v613
        %617 = vmatprep.subr.bf16.mxu0 0
        %618 = vmatpush1.bf16.xpose.msra.mxu0 0
        %619 = vmatprep.subr.bf16.mxu0 0
        %620 = vmatpush1.bf16.xpose.msra.mxu0 0
        %621 = vmatprep.subr.bf16.mxu0 0
        %622 = vmatpush1.bf16.xpose.msra.mxu0 0
        %623 = vmatprep.subr.bf16.mxu0 0
        %624 = vmatpush1.bf16.xpose.msra.mxu0 0
        %625 = vmatprep.subr.bf16.mxu0 0
        %626 = vmatpush1.bf16.xpose.msra.mxu0 0
        %627 = vmatprep.subr.bf16.mxu0 0
        %628 = vmatpush1.bf16.xpose.msra.mxu0 0
        %629 = vmatprep.subr.bf16.mxu0 0
        %630 = vmatpush1.bf16.xpose.msra.mxu0 0
        %631 = vmatprep.subr.bf16.mxu0 0
        %632 = vmatpush1.bf16.xpose.msra.mxu0 0
        %633 = vmatprep.subr.bf16.mxu0 0
        %634 = vmatpush1.bf16.xpose.msra.mxu0 0
        %635 = vmatprep.subr.bf16.mxu0 0
        %636 = vmatpush1.bf16.xpose.msra.mxu0 0
        %637 = vmatprep.subr.bf16.mxu0 0
        %638 = vmatpush1.bf16.xpose.msra.mxu0 0
        %639 = vmatprep.subr.bf16.mxu0 0
        %640 = vmatpush1.bf16.xpose.msra.mxu0 0
        %641 = vmatprep.subr.bf16.mxu0 0
        %642 = vmatpush1.bf16.xpose.msra.mxu0 0
        %643 = vmatprep.subr.bf16.mxu0 0
        %644 = vmatpush1.bf16.xpose.msra.mxu0 0
        %645 = vmatprep.subr.bf16.mxu0 0
        %646 = vmatpush1.bf16.xpose.msra.mxu0 0
        %647 = vmatprep.mubr.bf16.mxu0 0
        %648 = vmatmul.mubr.bf16.gmra.mrb[0].mxu0 %v610
        %v649 = vpop.f32.mrb[0].mxu0
        %v650 = vadd.f32 0.0, %v649
        %v651 = vpop.f32.mrb[0].mxu0
        %v652 = vpop.f32.mrb[0].mxu0
        %v653 = vpop.f32.mrb[0].mxu0
        %654 = vdwg.mxu0
        %v656 = vsel %vm196, %v472, 0
        %v659 = vsel %vm196, %v504, 0
        %661 = vmatprep.subr.bf16.mxu0 0
        %662 = vmatpush1.bf16.xpose.msra.mxu0 %v659
        %663 = vmatprep.subr.bf16.mxu0 0
        %664 = vmatpush1.bf16.xpose.msra.mxu0 0
        %665 = vmatprep.subr.bf16.mxu0 0
        %666 = vmatpush1.bf16.xpose.msra.mxu0 0
        %667 = vmatprep.subr.bf16.mxu0 0
        %668 = vmatpush1.bf16.xpose.msra.mxu0 0
        %669 = vmatprep.subr.bf16.mxu0 0
        %670 = vmatpush1.bf16.xpose.msra.mxu0 0
        %671 = vmatprep.subr.bf16.mxu0 0
        %672 = vmatpush1.bf16.xpose.msra.mxu0 0
        %673 = vmatprep.subr.bf16.mxu0 0
        %674 = vmatpush1.bf16.xpose.msra.mxu0 0
        %675 = vmatprep.subr.bf16.mxu0 0
        %676 = vmatpush1.bf16.xpose.msra.mxu0 0
        %677 = vmatprep.subr.bf16.mxu0 0
        %678 = vmatpush1.bf16.xpose.msra.mxu0 0
        %679 = vmatprep.subr.bf16.mxu0 0
        %680 = vmatpush1.bf16.xpose.msra.mxu0 0
        %681 = vmatprep.subr.bf16.mxu0 0
        %682 = vmatpush1.bf16.xpose.msra.mxu0 0
        %683 = vmatprep.subr.bf16.mxu0 0
        %684 = vmatpush1.bf16.xpose.msra.mxu0 0
        %685 = vmatprep.subr.bf16.mxu0 0
        %686 = vmatpush1.bf16.xpose.msra.mxu0 0
        %687 = vmatprep.subr.bf16.mxu0 0
        %688 = vmatpush1.bf16.xpose.msra.mxu0 0
        %689 = vmatprep.subr.bf16.mxu0 0
        %690 = vmatpush1.bf16.xpose.msra.mxu0 0
        %691 = vmatprep.subr.bf16.mxu0 0
        %692 = vmatpush1.bf16.xpose.msra.mxu0 0
        %693 = vmatprep.mubr.bf16.mxu0 0
        %694 = vmatmul.mubr.bf16.gmra.mrb[0].mxu0 %v656
        %v695 = vpop.f32.mrb[0].mxu0
        %v696 = vadd.f32 0.0, %v695
        %v697 = vpop.f32.mrb[0].mxu0
        %v698 = vpop.f32.mrb[0].mxu0
        %v699 = vpop.f32.mrb[0].mxu0
        %700 = vdwg.mxu0
        %v702 = vsel %vm196, %v473, 0
        %v705 = vsel %vm196, %v505, 0
        %707 = vmatprep.subr.bf16.mxu0 0
        %708 = vmatpush1.bf16.xpose.msra.mxu0 %v705
        %709 = vmatprep.subr.bf16.mxu0 0
        %710 = vmatpush1.bf16.xpose.msra.mxu0 0
        %711 = vmatprep.subr.bf16.mxu0 0
        %712 = vmatpush1.bf16.xpose.msra.mxu0 0
        %713 = vmatprep.subr.bf16.mxu0 0
        %714 = vmatpush1.bf16.xpose.msra.mxu0 0
        %715 = vmatprep.subr.bf16.mxu0 0
        %716 = vmatpush1.bf16.xpose.msra.mxu0 0
        %717 = vmatprep.subr.bf16.mxu0 0
        %718 = vmatpush1.bf16.xpose.msra.mxu0 0
        %719 = vmatprep.subr.bf16.mxu0 0
        %720 = vmatpush1.bf16.xpose.msra.mxu0 0
        %721 = vmatprep.subr.bf16.mxu0 0
        %722 = vmatpush1.bf16.xpose.msra.mxu0 0
        %723 = vmatprep.subr.bf16.mxu0 0
        %724 = vmatpush1.bf16.xpose.msra.mxu0 0
        %725 = vmatprep.subr.bf16.mxu0 0
        %726 = vmatpush1.bf16.xpose.msra.mxu0 0
        %727 = vmatprep.subr.bf16.mxu0 0
        %728 = vmatpush1.bf16.xpose.msra.mxu0 0
        %729 = vmatprep.subr.bf16.mxu0 0
        %730 = vmatpush1.bf16.xpose.msra.mxu0 0
        %731 = vmatprep.subr.bf16.mxu0 0
        %732 = vmatpush1.bf16.xpose.msra.mxu0 0
        %733 = vmatprep.subr.bf16.mxu0 0
        %734 = vmatpush1.bf16.xpose.msra.mxu0 0
        %735 = vmatprep.subr.bf16.mxu0 0
        %736 = vmatpush1.bf16.xpose.msra.mxu0 0
        %737 = vmatprep.subr.bf16.mxu0 0
        %738 = vmatpush1.bf16.xpose.msra.mxu0 0
        %739 = vmatprep.mubr.bf16.mxu0 0
        %740 = vmatmul.mubr.bf16.gmra.mrb[0].mxu0 %v702
        %v741 = vpop.f32.mrb[0].mxu0
        %v742 = vadd.f32 0.0, %v741
        %v743 = vpop.f32.mrb[0].mxu0
        %v744 = vpop.f32.mrb[0].mxu0
        %v745 = vpop.f32.mrb[0].mxu0
        %746 = vdwg.mxu0
        %v748 = vsel %vm196, %v474, 0
        %v751 = vsel %vm196, %v506, 0
        %753 = vmatprep.subr.bf16.mxu0 0
        %754 = vmatpush1.bf16.xpose.msra.mxu0 %v751
        %755 = vmatprep.subr.bf16.mxu0 0
        %756 = vmatpush1.bf16.xpose.msra.mxu0 0
        %757 = vmatprep.subr.bf16.mxu0 0
        %758 = vmatpush1.bf16.xpose.msra.mxu0 0
        %759 = vmatprep.subr.bf16.mxu0 0
        %760 = vmatpush1.bf16.xpose.msra.mxu0 0
        %761 = vmatprep.subr.bf16.mxu0 0
        %762 = vmatpush1.bf16.xpose.msra.mxu0 0
        %763 = vmatprep.subr.bf16.mxu0 0
        %764 = vmatpush1.bf16.xpose.msra.mxu0 0
        %765 = vmatprep.subr.bf16.mxu0 0
        %766 = vmatpush1.bf16.xpose.msra.mxu0 0
        %767 = vmatprep.subr.bf16.mxu0 0
        %768 = vmatpush1.bf16.xpose.msra.mxu0 0
        %769 = vmatprep.subr.bf16.mxu0 0
        %770 = vmatpush1.bf16.xpose.msra.mxu0 0
        %771 = vmatprep.subr.bf16.mxu0 0
        %772 = vmatpush1.bf16.xpose.msra.mxu0 0
        %773 = vmatprep.subr.bf16.mxu0 0
        %774 = vmatpush1.bf16.xpose.msra.mxu0 0
        %775 = vmatprep.subr.bf16.mxu0 0
        %776 = vmatpush1.bf16.xpose.msra.mxu0 0
        %777 = vmatprep.subr.bf16.mxu0 0
        %778 = vmatpush1.bf16.xpose.msra.mxu0 0
        %779 = vmatprep.subr.bf16.mxu0 0
        %780 = vmatpush1.bf16.xpose.msra.mxu0 0
        %781 = vmatprep.subr.bf16.mxu0 0
        %782 = vmatpush1.bf16.xpose.msra.mxu0 0
        %783 = vmatprep.subr.bf16.mxu0 0
        %784 = vmatpush1.bf16.xpose.msra.mxu0 0
        %785 = vmatprep.mubr.bf16.mxu0 0
        %786 = vmatmul.mubr.bf16.gmra.mrb[0].mxu0 %v748
        %v787 = vpop.f32.mrb[0].mxu0
        %v788 = vadd.f32 0.0, %v787
        %v789 = vpop.f32.mrb[0].mxu0
        %v790 = vpop.f32.mrb[0].mxu0
        %v791 = vpop.f32.mrb[0].mxu0
        %792 = vdwg.mxu0
        %v794 = vsel %vm196, %v475, 0
        %v797 = vsel %vm196, %v507, 0
        %799 = vmatprep.subr.bf16.mxu0 0
        %800 = vmatpush1.bf16.xpose.msra.mxu0 %v797
        %801 = vmatprep.subr.bf16.mxu0 0
        %802 = vmatpush1.bf16.xpose.msra.mxu0 0
        %803 = vmatprep.subr.bf16.mxu0 0
        %804 = vmatpush1.bf16.xpose.msra.mxu0 0
        %805 = vmatprep.subr.bf16.mxu0 0
        %806 = vmatpush1.bf16.xpose.msra.mxu0 0
        %807 = vmatprep.subr.bf16.mxu0 0
        %808 = vmatpush1.bf16.xpose.msra.mxu0 0
        %809 = vmatprep.subr.bf16.mxu0 0
        %810 = vmatpush1.bf16.xpose.msra.mxu0 0
        %811 = vmatprep.subr.bf16.mxu0 0
        %812 = vmatpush1.bf16.xpose.msra.mxu0 0
        %813 = vmatprep.subr.bf16.mxu0 0
        %814 = vmatpush1.bf16.xpose.msra.mxu0 0
        %815 = vmatprep.subr.bf16.mxu0 0
        %816 = vmatpush1.bf16.xpose.msra.mxu0 0
        %817 = vmatprep.subr.bf16.mxu0 0
        %818 = vmatpush1.bf16.xpose.msra.mxu0 0
        %819 = vmatprep.subr.bf16.mxu0 0
        %820 = vmatpush1.bf16.xpose.msra.mxu0 0
        %821 = vmatprep.subr.bf16.mxu0 0
        %822 = vmatpush1.bf16.xpose.msra.mxu0 0
        %823 = vmatprep.subr.bf16.mxu0 0
        %824 = vmatpush1.bf16.xpose.msra.mxu0 0
        %825 = vmatprep.subr.bf16.mxu0 0
        %826 = vmatpush1.bf16.xpose.msra.mxu0 0
        %827 = vmatprep.subr.bf16.mxu0 0
        %828 = vmatpush1.bf16.xpose.msra.mxu0 0
        %829 = vmatprep.subr.bf16.mxu0 0
        %830 = vmatpush1.bf16.xpose.msra.mxu0 0
        %831 = vmatprep.mubr.bf16.mxu0 0
        %832 = vmatmul.mubr.bf16.gmra.mrb[0].mxu0 %v794
        %v833 = vpop.f32.mrb[0].mxu0
        %v834 = vadd.f32 0.0, %v833
        %v835 = vpop.f32.mrb[0].mxu0
        %v836 = vpop.f32.mrb[0].mxu0
        %v837 = vpop.f32.mrb[0].mxu0
        %838 = vdwg.mxu0
        %v840 = vsel %vm196, %v476, 0
        %v843 = vsel %vm196, %v508, 0
        %845 = vmatprep.subr.bf16.mxu0 0
        %846 = vmatpush1.bf16.xpose.msra.mxu0 %v843
        %847 = vmatprep.subr.bf16.mxu0 0
        %848 = vmatpush1.bf16.xpose.msra.mxu0 0
        %849 = vmatprep.subr.bf16.mxu0 0
        %850 = vmatpush1.bf16.xpose.msra.mxu0 0
        %851 = vmatprep.subr.bf16.mxu0 0
        %852 = vmatpush1.bf16.xpose.msra.mxu0 0
        %853 = vmatprep.subr.bf16.mxu0 0
        %854 = vmatpush1.bf16.xpose.msra.mxu0 0
        %855 = vmatprep.subr.bf16.mxu0 0
        %856 = vmatpush1.bf16.xpose.msra.mxu0 0
        %857 = vmatprep.subr.bf16.mxu0 0
        %858 = vmatpush1.bf16.xpose.msra.mxu0 0
        %859 = vmatprep.subr.bf16.mxu0 0
        %860 = vmatpush1.bf16.xpose.msra.mxu0 0
        %861 = vmatprep.subr.bf16.mxu0 0
        %862 = vmatpush1.bf16.xpose.msra.mxu0 0
        %863 = vmatprep.subr.bf16.mxu0 0
        %864 = vmatpush1.bf16.xpose.msra.mxu0 0
        %865 = vmatprep.subr.bf16.mxu0 0
        %866 = vmatpush1.bf16.xpose.msra.mxu0 0
        %867 = vmatprep.subr.bf16.mxu0 0
        %868 = vmatpush1.bf16.xpose.msra.mxu0 0
        %869 = vmatprep.subr.bf16.mxu0 0
        %870 = vmatpush1.bf16.xpose.msra.mxu0 0
        %871 = vmatprep.subr.bf16.mxu0 0
        %872 = vmatpush1.bf16.xpose.msra.mxu0 0
        %873 = vmatprep.subr.bf16.mxu0 0
        %874 = vmatpush1.bf16.xpose.msra.mxu0 0
        %875 = vmatprep.subr.bf16.mxu0 0
        %876 = vmatpush1.bf16.xpose.msra.mxu0 0
        %877 = vmatprep.mubr.bf16.mxu0 0
        %878 = vmatmul.mubr.bf16.gmra.mrb[0].mxu0 %v840
        %v879 = vpop.f32.mrb[0].mxu0
        %v880 = vadd.f32 0.0, %v879
        %v881 = vpop.f32.mrb[0].mxu0
        %v882 = vpop.f32.mrb[0].mxu0
        %v883 = vpop.f32.mrb[0].mxu0
        %884 = vdwg.mxu0
        %v886 = vsel %vm196, %v477, 0
        %v889 = vsel %vm196, %v509, 0
        %891 = vmatprep.subr.bf16.mxu0 0
        %892 = vmatpush1.bf16.xpose.msra.mxu0 %v889
        %893 = vmatprep.subr.bf16.mxu0 0
        %894 = vmatpush1.bf16.xpose.msra.mxu0 0
        %895 = vmatprep.subr.bf16.mxu0 0
        %896 = vmatpush1.bf16.xpose.msra.mxu0 0
        %897 = vmatprep.subr.bf16.mxu0 0
        %898 = vmatpush1.bf16.xpose.msra.mxu0 0
        %899 = vmatprep.subr.bf16.mxu0 0
        %900 = vmatpush1.bf16.xpose.msra.mxu0 0
        %901 = vmatprep.subr.bf16.mxu0 0
        %902 = vmatpush1.bf16.xpose.msra.mxu0 0
        %903 = vmatprep.subr.bf16.mxu0 0
        %904 = vmatpush1.bf16.xpose.msra.mxu0 0
        %905 = vmatprep.subr.bf16.mxu0 0
        %906 = vmatpush1.bf16.xpose.msra.mxu0 0
        %907 = vmatprep.subr.bf16.mxu0 0
        %908 = vmatpush1.bf16.xpose.msra.mxu0 0
        %909 = vmatprep.subr.bf16.mxu0 0
        %910 = vmatpush1.bf16.xpose.msra.mxu0 0
        %911 = vmatprep.subr.bf16.mxu0 0
        %912 = vmatpush1.bf16.xpose.msra.mxu0 0
        %913 = vmatprep.subr.bf16.mxu0 0
        %914 = vmatpush1.bf16.xpose.msra.mxu0 0
        %915 = vmatprep.subr.bf16.mxu0 0
        %916 = vmatpush1.bf16.xpose.msra.mxu0 0
        %917 = vmatprep.subr.bf16.mxu0 0
        %918 = vmatpush1.bf16.xpose.msra.mxu0 0
        %919 = vmatprep.subr.bf16.mxu0 0
        %920 = vmatpush1.bf16.xpose.msra.mxu0 0
        %921 = vmatprep.subr.bf16.mxu0 0
        %922 = vmatpush1.bf16.xpose.msra.mxu0 0
        %923 = vmatprep.mubr.bf16.mxu0 0
        %924 = vmatmul.mubr.bf16.gmra.mrb[0].mxu0 %v886
        %v925 = vpop.f32.mrb[0].mxu0
        %v926 = vadd.f32 0.0, %v925
        %v927 = vpop.f32.mrb[0].mxu0
        %v928 = vpop.f32.mrb[0].mxu0
        %v929 = vpop.f32.mrb[0].mxu0
        %930 = vdwg.mxu0
        %v932 = vsel %vm196, %v478, 0
        %v935 = vsel %vm196, %v510, 0
        %937 = vmatprep.subr.bf16.mxu0 0
        %938 = vmatpush1.bf16.xpose.msra.mxu0 %v935
        %939 = vmatprep.subr.bf16.mxu0 0
        %940 = vmatpush1.bf16.xpose.msra.mxu0 0
        %941 = vmatprep.subr.bf16.mxu0 0
        %942 = vmatpush1.bf16.xpose.msra.mxu0 0
        %943 = vmatprep.subr.bf16.mxu0 0
        %944 = vmatpush1.bf16.xpose.msra.mxu0 0
        %945 = vmatprep.subr.bf16.mxu0 0
        %946 = vmatpush1.bf16.xpose.msra.mxu0 0
        %947 = vmatprep.subr.bf16.mxu0 0
        %948 = vmatpush1.bf16.xpose.msra.mxu0 0
        %949 = vmatprep.subr.bf16.mxu0 0
        %950 = vmatpush1.bf16.xpose.msra.mxu0 0
        %951 = vmatprep.subr.bf16.mxu0 0
        %952 = vmatpush1.bf16.xpose.msra.mxu0 0
        %953 = vmatprep.subr.bf16.mxu0 0
        %954 = vmatpush1.bf16.xpose.msra.mxu0 0
        %955 = vmatprep.subr.bf16.mxu0 0
        %956 = vmatpush1.bf16.xpose.msra.mxu0 0
        %957 = vmatprep.subr.bf16.mxu0 0
        %958 = vmatpush1.bf16.xpose.msra.mxu0 0
        %959 = vmatprep.subr.bf16.mxu0 0
        %960 = vmatpush1.bf16.xpose.msra.mxu0 0
        %961 = vmatprep.subr.bf16.mxu0 0
        %962 = vmatpush1.bf16.xpose.msra.mxu0 0
        %963 = vmatprep.subr.bf16.mxu0 0
        %964 = vmatpush1.bf16.xpose.msra.mxu0 0
        %965 = vmatprep.subr.bf16.mxu0 0
        %966 = vmatpush1.bf16.xpose.msra.mxu0 0
        %967 = vmatprep.subr.bf16.mxu0 0
        %968 = vmatpush1.bf16.xpose.msra.mxu0 0
        %969 = vmatprep.mubr.bf16.mxu0 0
        %970 = vmatmul.mubr.bf16.gmra.mrb[0].mxu0 %v932
        %v971 = vpop.f32.mrb[0].mxu0
        %v972 = vadd.f32 0.0, %v971
        %v973 = vpop.f32.mrb[0].mxu0
        %v974 = vpop.f32.mrb[0].mxu0
        %v975 = vpop.f32.mrb[0].mxu0
        %976 = vdwg.mxu0
        %v978 = vsel %vm196, %v479, 0
        %v981 = vsel %vm196, %v511, 0
        %983 = vmatprep.subr.bf16.mxu0 0
        %984 = vmatpush1.bf16.xpose.msra.mxu0 %v981
        %985 = vmatprep.subr.bf16.mxu0 0
        %986 = vmatpush1.bf16.xpose.msra.mxu0 0
        %987 = vmatprep.subr.bf16.mxu0 0
        %988 = vmatpush1.bf16.xpose.msra.mxu0 0
        %989 = vmatprep.subr.bf16.mxu0 0
        %990 = vmatpush1.bf16.xpose.msra.mxu0 0
        %991 = vmatprep.subr.bf16.mxu0 0
        %992 = vmatpush1.bf16.xpose.msra.mxu0 0
        %993 = vmatprep.subr.bf16.mxu0 0
        %994 = vmatpush1.bf16.xpose.msra.mxu0 0
        %995 = vmatprep.subr.bf16.mxu0 0
        %996 = vmatpush1.bf16.xpose.msra.mxu0 0
        %997 = vmatprep.subr.bf16.mxu0 0
        %998 = vmatpush1.bf16.xpose.msra.mxu0 0
        %999 = vmatprep.subr.bf16.mxu0 0
        %1000 = vmatpush1.bf16.xpose.msra.mxu0 0
        %1001 = vmatprep.subr.bf16.mxu0 0
        %1002 = vmatpush1.bf16.xpose.msra.mxu0 0
        %1003 = vmatprep.subr.bf16.mxu0 0
        %1004 = vmatpush1.bf16.xpose.msra.mxu0 0
        %1005 = vmatprep.subr.bf16.mxu0 0
        %1006 = vmatpush1.bf16.xpose.msra.mxu0 0
        %1007 = vmatprep.subr.bf16.mxu0 0
        %1008 = vmatpush1.bf16.xpose.msra.mxu0 0
        %1009 = vmatprep.subr.bf16.mxu0 0
        %1010 = vmatpush1.bf16.xpose.msra.mxu0 0
        %1011 = vmatprep.subr.bf16.mxu0 0
        %1012 = vmatpush1.bf16.xpose.msra.mxu0 0
        %1013 = vmatprep.subr.bf16.mxu0 0
        %1014 = vmatpush1.bf16.xpose.msra.mxu0 0
        %1015 = vmatprep.mubr.bf16.mxu0 0
        %1016 = vmatmul.mubr.bf16.gmra.mrb[0].mxu0 %v978
        %v1017 = vpop.f32.mrb[0].mxu0
        %v1018 = vadd.f32 0.0, %v1017
        %v1019 = vpop.f32.mrb[0].mxu0
        %v1020 = vpop.f32.mrb[0].mxu0
        %v1021 = vpop.f32.mrb[0].mxu0
        %1022 = vdwg.mxu0
        %v1024 = vsel %vm196, %v480, 0
        %v1027 = vsel %vm196, %v512, 0
        %1029 = vmatprep.subr.bf16.mxu0 0
        %1030 = vmatpush1.bf16.xpose.msra.mxu0 %v1027
        %1031 = vmatprep.subr.bf16.mxu0 0
        %1032 = vmatpush1.bf16.xpose.msra.mxu0 0
        %1033 = vmatprep.subr.bf16.mxu0 0
        %1034 = vmatpush1.bf16.xpose.msra.mxu0 0
        %1035 = vmatprep.subr.bf16.mxu0 0
        %1036 = vmatpush1.bf16.xpose.msra.mxu0 0
        %1037 = vmatprep.subr.bf16.mxu0 0
        %1038 = vmatpush1.bf16.xpose.msra.mxu0 0
        %1039 = vmatprep.subr.bf16.mxu0 0
        %1040 = vmatpush1.bf16.xpose.msra.mxu0 0
        %1041 = vmatprep.subr.bf16.mxu0 0
        %1042 = vmatpush1.bf16.xpose.msra.mxu0 0
        %1043 = vmatprep.subr.bf16.mxu0 0
        %1044 = vmatpush1.bf16.xpose.msra.mxu0 0
        %1045 = vmatprep.subr.bf16.mxu0 0
        %1046 = vmatpush1.bf16.xpose.msra.mxu0 0
        %1047 = vmatprep.subr.bf16.mxu0 0
        %1048 = vmatpush1.bf16.xpose.msra.mxu0 0
        %1049 = vmatprep.subr.bf16.mxu0 0
        %1050 = vmatpush1.bf16.xpose.msra.mxu0 0
        %1051 = vmatprep.subr.bf16.mxu0 0
        %1052 = vmatpush1.bf16.xpose.msra.mxu0 0
        %1053 = vmatprep.subr.bf16.mxu0 0
        %1054 = vmatpush1.bf16.xpose.msra.mxu0 0
        %1055 = vmatprep.subr.bf16.mxu0 0
        %1056 = vmatpush1.bf16.xpose.msra.mxu0 0
        %1057 = vmatprep.subr.bf16.mxu0 0
        %1058 = vmatpush1.bf16.xpose.msra.mxu0 0
        %1059 = vmatprep.subr.bf16.mxu0 0
        %1060 = vmatpush1.bf16.xpose.msra.mxu0 0
        %1061 = vmatprep.mubr.bf16.mxu0 0
        %1062 = vmatmul.mubr.bf16.gmra.mrb[0].mxu0 %v1024
        %v1063 = vpop.f32.mrb[0].mxu0
        %v1064 = vadd.f32 0.0, %v1063
        %v1065 = vpop.f32.mrb[0].mxu0
        %v1066 = vpop.f32.mrb[0].mxu0
        %v1067 = vpop.f32.mrb[0].mxu0
        %1068 = vdwg.mxu0
        %v1070 = vsel %vm196, %v481, 0
        %v1073 = vsel %vm196, %v513, 0
        %1075 = vmatprep.subr.bf16.mxu0 0
        %1076 = vmatpush1.bf16.xpose.msra.mxu0 %v1073
        %1077 = vmatprep.subr.bf16.mxu0 0
        %1078 = vmatpush1.bf16.xpose.msra.mxu0 0
        %1079 = vmatprep.subr.bf16.mxu0 0
        %1080 = vmatpush1.bf16.xpose.msra.mxu0 0
        %1081 = vmatprep.subr.bf16.mxu0 0
        %1082 = vmatpush1.bf16.xpose.msra.mxu0 0
        %1083 = vmatprep.subr.bf16.mxu0 0
        %1084 = vmatpush1.bf16.xpose.msra.mxu0 0
        %1085 = vmatprep.subr.bf16.mxu0 0
        %1086 = vmatpush1.bf16.xpose.msra.mxu0 0
        %1087 = vmatprep.subr.bf16.mxu0 0
        %1088 = vmatpush1.bf16.xpose.msra.mxu0 0
        %1089 = vmatprep.subr.bf16.mxu0 0
        %1090 = vmatpush1.bf16.xpose.msra.mxu0 0
        %1091 = vmatprep.subr.bf16.mxu0 0
        %1092 = vmatpush1.bf16.xpose.msra.mxu0 0
        %1093 = vmatprep.subr.bf16.mxu0 0
        %1094 = vmatpush1.bf16.xpose.msra.mxu0 0
        %1095 = vmatprep.subr.bf16.mxu0 0
        %1096 = vmatpush1.bf16.xpose.msra.mxu0 0
        %1097 = vmatprep.subr.bf16.mxu0 0
        %1098 = vmatpush1.bf16.xpose.msra.mxu0 0
        %1099 = vmatprep.subr.bf16.mxu0 0
        %1100 = vmatpush1.bf16.xpose.msra.mxu0 0
        %1101 = vmatprep.subr.bf16.mxu0 0
        %1102 = vmatpush1.bf16.xpose.msra.mxu0 0
        %1103 = vmatprep.subr.bf16.mxu0 0
        %1104 = vmatpush1.bf16.xpose.msra.mxu0 0
        %1105 = vmatprep.subr.bf16.mxu0 0
        %1106 = vmatpush1.bf16.xpose.msra.mxu0 0
        %1107 = vmatprep.mubr.bf16.mxu0 0
        %1108 = vmatmul.mubr.bf16.gmra.mrb[0].mxu0 %v1070
        %v1109 = vpop.f32.mrb[0].mxu0
        %v1110 = vadd.f32 0.0, %v1109
        %v1111 = vpop.f32.mrb[0].mxu0
        %v1112 = vpop.f32.mrb[0].mxu0
        %v1113 = vpop.f32.mrb[0].mxu0
        %1114 = vdwg.mxu0
        %v1116 = vsel %vm196, %v482, 0
        %v1119 = vsel %vm196, %v514, 0
        %1121 = vmatprep.subr.bf16.mxu0 0
        %1122 = vmatpush1.bf16.xpose.msra.mxu0 %v1119
        %1123 = vmatprep.subr.bf16.mxu0 0
        %1124 = vmatpush1.bf16.xpose.msra.mxu0 0
        %1125 = vmatprep.subr.bf16.mxu0 0
        %1126 = vmatpush1.bf16.xpose.msra.mxu0 0
        %1127 = vmatprep.subr.bf16.mxu0 0
        %1128 = vmatpush1.bf16.xpose.msra.mxu0 0
        %1129 = vmatprep.subr.bf16.mxu0 0
        %1130 = vmatpush1.bf16.xpose.msra.mxu0 0
        %1131 = vmatprep.subr.bf16.mxu0 0
        %1132 = vmatpush1.bf16.xpose.msra.mxu0 0
        %1133 = vmatprep.subr.bf16.mxu0 0
        %1134 = vmatpush1.bf16.xpose.msra.mxu0 0
        %1135 = vmatprep.subr.bf16.mxu0 0
        %1136 = vmatpush1.bf16.xpose.msra.mxu0 0
        %1137 = vmatprep.subr.bf16.mxu0 0
        %1138 = vmatpush1.bf16.xpose.msra.mxu0 0
        %1139 = vmatprep.subr.bf16.mxu0 0
        %1140 = vmatpush1.bf16.xpose.msra.mxu0 0
        %1141 = vmatprep.subr.bf16.mxu0 0
        %1142 = vmatpush1.bf16.xpose.msra.mxu0 0
        %1143 = vmatprep.subr.bf16.mxu0 0
        %1144 = vmatpush1.bf16.xpose.msra.mxu0 0
        %1145 = vmatprep.subr.bf16.mxu0 0
        %1146 = vmatpush1.bf16.xpose.msra.mxu0 0
        %1147 = vmatprep.subr.bf16.mxu0 0
        %1148 = vmatpush1.bf16.xpose.msra.mxu0 0
        %1149 = vmatprep.subr.bf16.mxu0 0
        %1150 = vmatpush1.bf16.xpose.msra.mxu0 0
        %1151 = vmatprep.subr.bf16.mxu0 0
        %1152 = vmatpush1.bf16.xpose.msra.mxu0 0
        %1153 = vmatprep.mubr.bf16.mxu0 0
        %1154 = vmatmul.mubr.bf16.gmra.mrb[0].mxu0 %v1116
        %v1155 = vpop.f32.mrb[0].mxu0
        %v1156 = vadd.f32 0.0, %v1155
        %v1157 = vpop.f32.mrb[0].mxu0
        %v1158 = vpop.f32.mrb[0].mxu0
        %v1159 = vpop.f32.mrb[0].mxu0
        %1160 = vdwg.mxu0
        %v1162 = vsel %vm196, %v483, 0
        %v1165 = vsel %vm196, %v515, 0
        %1167 = vmatprep.subr.bf16.mxu0 0
        %1168 = vmatpush1.bf16.xpose.msra.mxu0 %v1165
        %1169 = vmatprep.subr.bf16.mxu0 0
        %1170 = vmatpush1.bf16.xpose.msra.mxu0 0
        %1171 = vmatprep.subr.bf16.mxu0 0
        %1172 = vmatpush1.bf16.xpose.msra.mxu0 0
        %1173 = vmatprep.subr.bf16.mxu0 0
        %1174 = vmatpush1.bf16.xpose.msra.mxu0 0
        %1175 = vmatprep.subr.bf16.mxu0 0
        %1176 = vmatpush1.bf16.xpose.msra.mxu0 0
        %1177 = vmatprep.subr.bf16.mxu0 0
        %1178 = vmatpush1.bf16.xpose.msra.mxu0 0
        %1179 = vmatprep.subr.bf16.mxu0 0
        %1180 = vmatpush1.bf16.xpose.msra.mxu0 0
        %1181 = vmatprep.subr.bf16.mxu0 0
        %1182 = vmatpush1.bf16.xpose.msra.mxu0 0
        %1183 = vmatprep.subr.bf16.mxu0 0
        %1184 = vmatpush1.bf16.xpose.msra.mxu0 0
        %1185 = vmatprep.subr.bf16.mxu0 0
        %1186 = vmatpush1.bf16.xpose.msra.mxu0 0
        %1187 = vmatprep.subr.bf16.mxu0 0
        %1188 = vmatpush1.bf16.xpose.msra.mxu0 0
        %1189 = vmatprep.subr.bf16.mxu0 0
        %1190 = vmatpush1.bf16.xpose.msra.mxu0 0
        %1191 = vmatprep.subr.bf16.mxu0 0
        %1192 = vmatpush1.bf16.xpose.msra.mxu0 0
        %1193 = vmatprep.subr.bf16.mxu0 0
        %1194 = vmatpush1.bf16.xpose.msra.mxu0 0
        %1195 = vmatprep.subr.bf16.mxu0 0
        %1196 = vmatpush1.bf16.xpose.msra.mxu0 0
        %1197 = vmatprep.subr.bf16.mxu0 0
        %1198 = vmatpush1.bf16.xpose.msra.mxu0 0
        %1199 = vmatprep.mubr.bf16.mxu0 0
        %1200 = vmatmul.mubr.bf16.gmra.mrb[0].mxu0 %v1162
        %v1201 = vpop.f32.mrb[0].mxu0
        %v1202 = vadd.f32 0.0, %v1201
        %v1203 = vpop.f32.mrb[0].mxu0
        %v1204 = vpop.f32.mrb[0].mxu0
        %v1205 = vpop.f32.mrb[0].mxu0
        %1206 = vdwg.mxu0
        %v1208 = vsel %vm196, %v484, 0
        %v1211 = vsel %vm196, %v516, 0
        %1213 = vmatprep.subr.bf16.mxu0 0
        %1214 = vmatpush1.bf16.xpose.msra.mxu0 %v1211
        %1215 = vmatprep.subr.bf16.mxu0 0
        %1216 = vmatpush1.bf16.xpose.msra.mxu0 0
        %1217 = vmatprep.subr.bf16.mxu0 0
        %1218 = vmatpush1.bf16.xpose.msra.mxu0 0
        %1219 = vmatprep.subr.bf16.mxu0 0
        %1220 = vmatpush1.bf16.xpose.msra.mxu0 0
        %1221 = vmatprep.subr.bf16.mxu0 0
        %1222 = vmatpush1.bf16.xpose.msra.mxu0 0
        %1223 = vmatprep.subr.bf16.mxu0 0
        %1224 = vmatpush1.bf16.xpose.msra.mxu0 0
        %1225 = vmatprep.subr.bf16.mxu0 0
        %1226 = vmatpush1.bf16.xpose.msra.mxu0 0
        %1227 = vmatprep.subr.bf16.mxu0 0
        %1228 = vmatpush1.bf16.xpose.msra.mxu0 0
        %1229 = vmatprep.subr.bf16.mxu0 0
        %1230 = vmatpush1.bf16.xpose.msra.mxu0 0
        %1231 = vmatprep.subr.bf16.mxu0 0
        %1232 = vmatpush1.bf16.xpose.msra.mxu0 0
        %1233 = vmatprep.subr.bf16.mxu0 0
        %1234 = vmatpush1.bf16.xpose.msra.mxu0 0
        %1235 = vmatprep.subr.bf16.mxu0 0
        %1236 = vmatpush1.bf16.xpose.msra.mxu0 0
        %1237 = vmatprep.subr.bf16.mxu0 0
        %1238 = vmatpush1.bf16.xpose.msra.mxu0 0
        %1239 = vmatprep.subr.bf16.mxu0 0
        %1240 = vmatpush1.bf16.xpose.msra.mxu0 0
        %1241 = vmatprep.subr.bf16.mxu0 0
        %1242 = vmatpush1.bf16.xpose.msra.mxu0 0
        %1243 = vmatprep.subr.bf16.mxu0 0
        %1244 = vmatpush1.bf16.xpose.msra.mxu0 0
        %1245 = vmatprep.mubr.bf16.mxu0 0
        %1246 = vmatmul.mubr.bf16.gmra.mrb[0].mxu0 %v1208
        %v1247 = vpop.f32.mrb[0].mxu0
        %v1248 = vadd.f32 0.0, %v1247
        %v1249 = vpop.f32.mrb[0].mxu0
        %v1250 = vpop.f32.mrb[0].mxu0
        %v1251 = vpop.f32.mrb[0].mxu0
        %1252 = vdwg.mxu0
        %v1254 = vsel %vm196, %v389, 0
        %v1257 = vsel %vm196, %v421, 0
        %1259 = vmatprep.subr.bf16.mxu0 0
        %1260 = vmatpush1.bf16.xpose.msra.mxu0 %v1257
        %1261 = vmatprep.subr.bf16.mxu0 0
        %1262 = vmatpush1.bf16.xpose.msra.mxu0 0
        %1263 = vmatprep.subr.bf16.mxu0 0
        %1264 = vmatpush1.bf16.xpose.msra.mxu0 0
        %1265 = vmatprep.subr.bf16.mxu0 0
        %1266 = vmatpush1.bf16.xpose.msra.mxu0 0
        %1267 = vmatprep.subr.bf16.mxu0 0
        %1268 = vmatpush1.bf16.xpose.msra.mxu0 0
        %1269 = vmatprep.subr.bf16.mxu0 0
        %1270 = vmatpush1.bf16.xpose.msra.mxu0 0
        %1271 = vmatprep.subr.bf16.mxu0 0
        %1272 = vmatpush1.bf16.xpose.msra.mxu0 0
        %1273 = vmatprep.subr.bf16.mxu0 0
        %1274 = vmatpush1.bf16.xpose.msra.mxu0 0
        %1275 = vmatprep.subr.bf16.mxu0 0
        %1276 = vmatpush1.bf16.xpose.msra.mxu0 0
        %1277 = vmatprep.subr.bf16.mxu0 0
        %1278 = vmatpush1.bf16.xpose.msra.mxu0 0
        %1279 = vmatprep.subr.bf16.mxu0 0
        %1280 = vmatpush1.bf16.xpose.msra.mxu0 0
        %1281 = vmatprep.subr.bf16.mxu0 0
        %1282 = vmatpush1.bf16.xpose.msra.mxu0 0
        %1283 = vmatprep.subr.bf16.mxu0 0
        %1284 = vmatpush1.bf16.xpose.msra.mxu0 0
        %1285 = vmatprep.subr.bf16.mxu0 0
        %1286 = vmatpush1.bf16.xpose.msra.mxu0 0
        %1287 = vmatprep.subr.bf16.mxu0 0
        %1288 = vmatpush1.bf16.xpose.msra.mxu0 0
        %1289 = vmatprep.subr.bf16.mxu0 0
        %1290 = vmatpush1.bf16.xpose.msra.mxu0 0
        %1291 = vmatprep.mubr.bf16.mxu0 0
        %1292 = vmatmul.mubr.bf16.gmra.mrb[0].mxu0 %v1254
        %v1293 = vpop.f32.mrb[0].mxu0
        %v1294 = vadd.f32 %v558, %v1293
        %v1295 = vpop.f32.mrb[0].mxu0
        %v1296 = vpop.f32.mrb[0].mxu0
        %v1297 = vpop.f32.mrb[0].mxu0
        %1298 = vdwg.mxu0
        %v1300 = vsel %vm196, %v390, 0
        %v1303 = vsel %vm196, %v422, 0
        %1305 = vmatprep.subr.bf16.mxu0 0
        %1306 = vmatpush1.bf16.xpose.msra.mxu0 %v1303
        %1307 = vmatprep.subr.bf16.mxu0 0
        %1308 = vmatpush1.bf16.xpose.msra.mxu0 0
        %1309 = vmatprep.subr.bf16.mxu0 0
        %1310 = vmatpush1.bf16.xpose.msra.mxu0 0
        %1311 = vmatprep.subr.bf16.mxu0 0
        %1312 = vmatpush1.bf16.xpose.msra.mxu0 0
        %1313 = vmatprep.subr.bf16.mxu0 0
        %1314 = vmatpush1.bf16.xpose.msra.mxu0 0
        %1315 = vmatprep.subr.bf16.mxu0 0
        %1316 = vmatpush1.bf16.xpose.msra.mxu0 0
        %1317 = vmatprep.subr.bf16.mxu0 0
        %1318 = vmatpush1.bf16.xpose.msra.mxu0 0
        %1319 = vmatprep.subr.bf16.mxu0 0
        %1320 = vmatpush1.bf16.xpose.msra.mxu0 0
        %1321 = vmatprep.subr.bf16.mxu0 0
        %1322 = vmatpush1.bf16.xpose.msra.mxu0 0
        %1323 = vmatprep.subr.bf16.mxu0 0
        %1324 = vmatpush1.bf16.xpose.msra.mxu0 0
        %1325 = vmatprep.subr.bf16.mxu0 0
        %1326 = vmatpush1.bf16.xpose.msra.mxu0 0
        %1327 = vmatprep.subr.bf16.mxu0 0
        %1328 = vmatpush1.bf16.xpose.msra.mxu0 0
        %1329 = vmatprep.subr.bf16.mxu0 0
        %1330 = vmatpush1.bf16.xpose.msra.mxu0 0
        %1331 = vmatprep.subr.bf16.mxu0 0
        %1332 = vmatpush1.bf16.xpose.msra.mxu0 0
        %1333 = vmatprep.subr.bf16.mxu0 0
        %1334 = vmatpush1.bf16.xpose.msra.mxu0 0
        %1335 = vmatprep.subr.bf16.mxu0 0
        %1336 = vmatpush1.bf16.xpose.msra.mxu0 0
        %1337 = vmatprep.mubr.bf16.mxu0 0
        %1338 = vmatmul.mubr.bf16.gmra.mrb[0].mxu0 %v1300
        %v1339 = vpop.f32.mrb[0].mxu0
        %v1340 = vadd.f32 %v604, %v1339
        %v1341 = vpop.f32.mrb[0].mxu0
        %v1342 = vpop.f32.mrb[0].mxu0
        %v1343 = vpop.f32.mrb[0].mxu0
        %1344 = vdwg.mxu0
        %v1346 = vsel %vm196, %v391, 0
        %v1349 = vsel %vm196, %v423, 0
        %1351 = vmatprep.subr.bf16.mxu0 0
        %1352 = vmatpush1.bf16.xpose.msra.mxu0 %v1349
        %1353 = vmatprep.subr.bf16.mxu0 0
        %1354 = vmatpush1.bf16.xpose.msra.mxu0 0
        %1355 = vmatprep.subr.bf16.mxu0 0
        %1356 = vmatpush1.bf16.xpose.msra.mxu0 0
        %1357 = vmatprep.subr.bf16.mxu0 0
        %1358 = vmatpush1.bf16.xpose.msra.mxu0 0
        %1359 = vmatprep.subr.bf16.mxu0 0
        %1360 = vmatpush1.bf16.xpose.msra.mxu0 0
        %1361 = vmatprep.subr.bf16.mxu0 0
        %1362 = vmatpush1.bf16.xpose.msra.mxu0 0
        %1363 = vmatprep.subr.bf16.mxu0 0
        %1364 = vmatpush1.bf16.xpose.msra.mxu0 0
        %1365 = vmatprep.subr.bf16.mxu0 0
        %1366 = vmatpush1.bf16.xpose.msra.mxu0 0
        %1367 = vmatprep.subr.bf16.mxu0 0
        %1368 = vmatpush1.bf16.xpose.msra.mxu0 0
        %1369 = vmatprep.subr.bf16.mxu0 0
        %1370 = vmatpush1.bf16.xpose.msra.mxu0 0
        %1371 = vmatprep.subr.bf16.mxu0 0
        %1372 = vmatpush1.bf16.xpose.msra.mxu0 0
        %1373 = vmatprep.subr.bf16.mxu0 0
        %1374 = vmatpush1.bf16.xpose.msra.mxu0 0
        %1375 = vmatprep.subr.bf16.mxu0 0
        %1376 = vmatpush1.bf16.xpose.msra.mxu0 0
        %1377 = vmatprep.subr.bf16.mxu0 0
        %1378 = vmatpush1.bf16.xpose.msra.mxu0 0
        %1379 = vmatprep.subr.bf16.mxu0 0
        %1380 = vmatpush1.bf16.xpose.msra.mxu0 0
        %1381 = vmatprep.subr.bf16.mxu0 0
        %1382 = vmatpush1.bf16.xpose.msra.mxu0 0
        %1383 = vmatprep.mubr.bf16.mxu0 0
        %1384 = vmatmul.mubr.bf16.gmra.mrb[0].mxu0 %v1346
        %v1385 = vpop.f32.mrb[0].mxu0
        %v1386 = vadd.f32 %v650, %v1385
        %v1387 = vpop.f32.mrb[0].mxu0
        %v1388 = vpop.f32.mrb[0].mxu0
        %v1389 = vpop.f32.mrb[0].mxu0
        %1390 = vdwg.mxu0
        %v1392 = vsel %vm196, %v392, 0
        %v1395 = vsel %vm196, %v424, 0
        %1397 = vmatprep.subr.bf16.mxu0 0
        %1398 = vmatpush1.bf16.xpose.msra.mxu0 %v1395
        %1399 = vmatprep.subr.bf16.mxu0 0
        %1400 = vmatpush1.bf16.xpose.msra.mxu0 0
        %1401 = vmatprep.subr.bf16.mxu0 0
        %1402 = vmatpush1.bf16.xpose.msra.mxu0 0
        %1403 = vmatprep.subr.bf16.mxu0 0
        %1404 = vmatpush1.bf16.xpose.msra.mxu0 0
        %1405 = vmatprep.subr.bf16.mxu0 0
        %1406 = vmatpush1.bf16.xpose.msra.mxu0 0
        %1407 = vmatprep.subr.bf16.mxu0 0
        %1408 = vmatpush1.bf16.xpose.msra.mxu0 0
        %1409 = vmatprep.subr.bf16.mxu0 0
        %1410 = vmatpush1.bf16.xpose.msra.mxu0 0
        %1411 = vmatprep.subr.bf16.mxu0 0
        %1412 = vmatpush1.bf16.xpose.msra.mxu0 0
        %1413 = vmatprep.subr.bf16.mxu0 0
        %1414 = vmatpush1.bf16.xpose.msra.mxu0 0
        %1415 = vmatprep.subr.bf16.mxu0 0
        %1416 = vmatpush1.bf16.xpose.msra.mxu0 0
        %1417 = vmatprep.subr.bf16.mxu0 0
        %1418 = vmatpush1.bf16.xpose.msra.mxu0 0
        %1419 = vmatprep.subr.bf16.mxu0 0
        %1420 = vmatpush1.bf16.xpose.msra.mxu0 0
        %1421 = vmatprep.subr.bf16.mxu0 0
        %1422 = vmatpush1.bf16.xpose.msra.mxu0 0
        %1423 = vmatprep.subr.bf16.mxu0 0
        %1424 = vmatpush1.bf16.xpose.msra.mxu0 0
        %1425 = vmatprep.subr.bf16.mxu0 0
        %1426 = vmatpush1.bf16.xpose.msra.mxu0 0
        %1427 = vmatprep.subr.bf16.mxu0 0
        %1428 = vmatpush1.bf16.xpose.msra.mxu0 0
        %1429 = vmatprep.mubr.bf16.mxu0 0
        %1430 = vmatmul.mubr.bf16.gmra.mrb[0].mxu0 %v1392
        %v1431 = vpop.f32.mrb[0].mxu0
        %v1432 = vadd.f32 %v696, %v1431
        %v1433 = vpop.f32.mrb[0].mxu0
        %v1434 = vpop.f32.mrb[0].mxu0
        %v1435 = vpop.f32.mrb[0].mxu0
        %1436 = vdwg.mxu0
        %v1438 = vsel %vm196, %v393, 0
        %v1441 = vsel %vm196, %v425, 0
        %1443 = vmatprep.subr.bf16.mxu0 0
        %1444 = vmatpush1.bf16.xpose.msra.mxu0 %v1441
        %1445 = vmatprep.subr.bf16.mxu0 0
        %1446 = vmatpush1.bf16.xpose.msra.mxu0 0
        %1447 = vmatprep.subr.bf16.mxu0 0
        %1448 = vmatpush1.bf16.xpose.msra.mxu0 0
        %1449 = vmatprep.subr.bf16.mxu0 0
        %1450 = vmatpush1.bf16.xpose.msra.mxu0 0
        %1451 = vmatprep.subr.bf16.mxu0 0
        %1452 = vmatpush1.bf16.xpose.msra.mxu0 0
        %1453 = vmatprep.subr.bf16.mxu0 0
        %1454 = vmatpush1.bf16.xpose.msra.mxu0 0
        %1455 = vmatprep.subr.bf16.mxu0 0
        %1456 = vmatpush1.bf16.xpose.msra.mxu0 0
        %1457 = vmatprep.subr.bf16.mxu0 0
        %1458 = vmatpush1.bf16.xpose.msra.mxu0 0
        %1459 = vmatprep.subr.bf16.mxu0 0
        %1460 = vmatpush1.bf16.xpose.msra.mxu0 0
        %1461 = vmatprep.subr.bf16.mxu0 0
        %1462 = vmatpush1.bf16.xpose.msra.mxu0 0
        %1463 = vmatprep.subr.bf16.mxu0 0
        %1464 = vmatpush1.bf16.xpose.msra.mxu0 0
        %1465 = vmatprep.subr.bf16.mxu0 0
        %1466 = vmatpush1.bf16.xpose.msra.mxu0 0
        %1467 = vmatprep.subr.bf16.mxu0 0
        %1468 = vmatpush1.bf16.xpose.msra.mxu0 0
        %1469 = vmatprep.subr.bf16.mxu0 0
        %1470 = vmatpush1.bf16.xpose.msra.mxu0 0
        %1471 = vmatprep.subr.bf16.mxu0 0
        %1472 = vmatpush1.bf16.xpose.msra.mxu0 0
        %1473 = vmatprep.subr.bf16.mxu0 0
        %1474 = vmatpush1.bf16.xpose.msra.mxu0 0
        %1475 = vmatprep.mubr.bf16.mxu0 0
        %1476 = vmatmul.mubr.bf16.gmra.mrb[0].mxu0 %v1438
        %v1477 = vpop.f32.mrb[0].mxu0
        %v1478 = vadd.f32 %v742, %v1477
        %v1479 = vpop.f32.mrb[0].mxu0
        %v1480 = vpop.f32.mrb[0].mxu0
        %v1481 = vpop.f32.mrb[0].mxu0
        %1482 = vdwg.mxu0
        %v1484 = vsel %vm196, %v394, 0
        %v1487 = vsel %vm196, %v426, 0
        %1489 = vmatprep.subr.bf16.mxu0 0
        %1490 = vmatpush1.bf16.xpose.msra.mxu0 %v1487
        %1491 = vmatprep.subr.bf16.mxu0 0
        %1492 = vmatpush1.bf16.xpose.msra.mxu0 0
        %1493 = vmatprep.subr.bf16.mxu0 0
        %1494 = vmatpush1.bf16.xpose.msra.mxu0 0
        %1495 = vmatprep.subr.bf16.mxu0 0
        %1496 = vmatpush1.bf16.xpose.msra.mxu0 0
        %1497 = vmatprep.subr.bf16.mxu0 0
        %1498 = vmatpush1.bf16.xpose.msra.mxu0 0
        %1499 = vmatprep.subr.bf16.mxu0 0
        %1500 = vmatpush1.bf16.xpose.msra.mxu0 0
        %1501 = vmatprep.subr.bf16.mxu0 0
        %1502 = vmatpush1.bf16.xpose.msra.mxu0 0
        %1503 = vmatprep.subr.bf16.mxu0 0
        %1504 = vmatpush1.bf16.xpose.msra.mxu0 0
        %1505 = vmatprep.subr.bf16.mxu0 0
        %1506 = vmatpush1.bf16.xpose.msra.mxu0 0
        %1507 = vmatprep.subr.bf16.mxu0 0
        %1508 = vmatpush1.bf16.xpose.msra.mxu0 0
        %1509 = vmatprep.subr.bf16.mxu0 0
        %1510 = vmatpush1.bf16.xpose.msra.mxu0 0
        %1511 = vmatprep.subr.bf16.mxu0 0
        %1512 = vmatpush1.bf16.xpose.msra.mxu0 0
        %1513 = vmatprep.subr.bf16.mxu0 0
        %1514 = vmatpush1.bf16.xpose.msra.mxu0 0
        %1515 = vmatprep.subr.bf16.mxu0 0
        %1516 = vmatpush1.bf16.xpose.msra.mxu0 0
        %1517 = vmatprep.subr.bf16.mxu0 0
        %1518 = vmatpush1.bf16.xpose.msra.mxu0 0
        %1519 = vmatprep.subr.bf16.mxu0 0
        %1520 = vmatpush1.bf16.xpose.msra.mxu0 0
        %1521 = vmatprep.mubr.bf16.mxu0 0
        %1522 = vmatmul.mubr.bf16.gmra.mrb[0].mxu0 %v1484
        %v1523 = vpop.f32.mrb[0].mxu0
        %v1524 = vadd.f32 %v788, %v1523
        %v1525 = vpop.f32.mrb[0].mxu0
        %v1526 = vpop.f32.mrb[0].mxu0
        %v1527 = vpop.f32.mrb[0].mxu0
        %1528 = vdwg.mxu0
        %v1530 = vsel %vm196, %v395, 0
        %v1533 = vsel %vm196, %v427, 0
        %1535 = vmatprep.subr.bf16.mxu0 0
        %1536 = vmatpush1.bf16.xpose.msra.mxu0 %v1533
        %1537 = vmatprep.subr.bf16.mxu0 0
        %1538 = vmatpush1.bf16.xpose.msra.mxu0 0
        %1539 = vmatprep.subr.bf16.mxu0 0
        %1540 = vmatpush1.bf16.xpose.msra.mxu0 0
        %1541 = vmatprep.subr.bf16.mxu0 0
        %1542 = vmatpush1.bf16.xpose.msra.mxu0 0
        %1543 = vmatprep.subr.bf16.mxu0 0
        %1544 = vmatpush1.bf16.xpose.msra.mxu0 0
        %1545 = vmatprep.subr.bf16.mxu0 0
        %1546 = vmatpush1.bf16.xpose.msra.mxu0 0
        %1547 = vmatprep.subr.bf16.mxu0 0
        %1548 = vmatpush1.bf16.xpose.msra.mxu0 0
        %1549 = vmatprep.subr.bf16.mxu0 0
        %1550 = vmatpush1.bf16.xpose.msra.mxu0 0
        %1551 = vmatprep.subr.bf16.mxu0 0
        %1552 = vmatpush1.bf16.xpose.msra.mxu0 0
        %1553 = vmatprep.subr.bf16.mxu0 0
        %1554 = vmatpush1.bf16.xpose.msra.mxu0 0
        %1555 = vmatprep.subr.bf16.mxu0 0
        %1556 = vmatpush1.bf16.xpose.msra.mxu0 0
        %1557 = vmatprep.subr.bf16.mxu0 0
        %1558 = vmatpush1.bf16.xpose.msra.mxu0 0
        %1559 = vmatprep.subr.bf16.mxu0 0
        %1560 = vmatpush1.bf16.xpose.msra.mxu0 0
        %1561 = vmatprep.subr.bf16.mxu0 0
        %1562 = vmatpush1.bf16.xpose.msra.mxu0 0
        %1563 = vmatprep.subr.bf16.mxu0 0
        %1564 = vmatpush1.bf16.xpose.msra.mxu0 0
        %1565 = vmatprep.subr.bf16.mxu0 0
        %1566 = vmatpush1.bf16.xpose.msra.mxu0 0
        %1567 = vmatprep.mubr.bf16.mxu0 0
        %1568 = vmatmul.mubr.bf16.gmra.mrb[0].mxu0 %v1530
        %v1569 = vpop.f32.mrb[0].mxu0
        %v1570 = vadd.f32 %v834, %v1569
        %v1571 = vpop.f32.mrb[0].mxu0
        %v1572 = vpop.f32.mrb[0].mxu0
        %v1573 = vpop.f32.mrb[0].mxu0
        %1574 = vdwg.mxu0
        %v1576 = vsel %vm196, %v396, 0
        %v1579 = vsel %vm196, %v428, 0
        %1581 = vmatprep.subr.bf16.mxu0 0
        %1582 = vmatpush1.bf16.xpose.msra.mxu0 %v1579
        %1583 = vmatprep.subr.bf16.mxu0 0
        %1584 = vmatpush1.bf16.xpose.msra.mxu0 0
        %1585 = vmatprep.subr.bf16.mxu0 0
        %1586 = vmatpush1.bf16.xpose.msra.mxu0 0
        %1587 = vmatprep.subr.bf16.mxu0 0
        %1588 = vmatpush1.bf16.xpose.msra.mxu0 0
        %1589 = vmatprep.subr.bf16.mxu0 0
        %1590 = vmatpush1.bf16.xpose.msra.mxu0 0
        %1591 = vmatprep.subr.bf16.mxu0 0
        %1592 = vmatpush1.bf16.xpose.msra.mxu0 0
        %1593 = vmatprep.subr.bf16.mxu0 0
        %1594 = vmatpush1.bf16.xpose.msra.mxu0 0
        %1595 = vmatprep.subr.bf16.mxu0 0
        %1596 = vmatpush1.bf16.xpose.msra.mxu0 0
        %1597 = vmatprep.subr.bf16.mxu0 0
        %1598 = vmatpush1.bf16.xpose.msra.mxu0 0
        %1599 = vmatprep.subr.bf16.mxu0 0
        %1600 = vmatpush1.bf16.xpose.msra.mxu0 0
        %1601 = vmatprep.subr.bf16.mxu0 0
        %1602 = vmatpush1.bf16.xpose.msra.mxu0 0
        %1603 = vmatprep.subr.bf16.mxu0 0
        %1604 = vmatpush1.bf16.xpose.msra.mxu0 0
        %1605 = vmatprep.subr.bf16.mxu0 0
        %1606 = vmatpush1.bf16.xpose.msra.mxu0 0
        %1607 = vmatprep.subr.bf16.mxu0 0
        %1608 = vmatpush1.bf16.xpose.msra.mxu0 0
        %1609 = vmatprep.subr.bf16.mxu0 0
        %1610 = vmatpush1.bf16.xpose.msra.mxu0 0
        %1611 = vmatprep.subr.bf16.mxu0 0
        %1612 = vmatpush1.bf16.xpose.msra.mxu0 0
        %1613 = vmatprep.mubr.bf16.mxu0 0
        %1614 = vmatmul.mubr.bf16.gmra.mrb[0].mxu0 %v1576
        %v1615 = vpop.f32.mrb[0].mxu0
        %v1616 = vadd.f32 %v880, %v1615
        %v1617 = vpop.f32.mrb[0].mxu0
        %v1618 = vpop.f32.mrb[0].mxu0
        %v1619 = vpop.f32.mrb[0].mxu0
        %1620 = vdwg.mxu0
        %v1622 = vsel %vm196, %v397, 0
        %v1625 = vsel %vm196, %v429, 0
        %1627 = vmatprep.subr.bf16.mxu0 0
        %1628 = vmatpush1.bf16.xpose.msra.mxu0 %v1625
        %1629 = vmatprep.subr.bf16.mxu0 0
        %1630 = vmatpush1.bf16.xpose.msra.mxu0 0
        %1631 = vmatprep.subr.bf16.mxu0 0
        %1632 = vmatpush1.bf16.xpose.msra.mxu0 0
        %1633 = vmatprep.subr.bf16.mxu0 0
        %1634 = vmatpush1.bf16.xpose.msra.mxu0 0
        %1635 = vmatprep.subr.bf16.mxu0 0
        %1636 = vmatpush1.bf16.xpose.msra.mxu0 0
        %1637 = vmatprep.subr.bf16.mxu0 0
        %1638 = vmatpush1.bf16.xpose.msra.mxu0 0
        %1639 = vmatprep.subr.bf16.mxu0 0
        %1640 = vmatpush1.bf16.xpose.msra.mxu0 0
        %1641 = vmatprep.subr.bf16.mxu0 0
        %1642 = vmatpush1.bf16.xpose.msra.mxu0 0
        %1643 = vmatprep.subr.bf16.mxu0 0
        %1644 = vmatpush1.bf16.xpose.msra.mxu0 0
        %1645 = vmatprep.subr.bf16.mxu0 0
        %1646 = vmatpush1.bf16.xpose.msra.mxu0 0
        %1647 = vmatprep.subr.bf16.mxu0 0
        %1648 = vmatpush1.bf16.xpose.msra.mxu0 0
        %1649 = vmatprep.subr.bf16.mxu0 0
        %1650 = vmatpush1.bf16.xpose.msra.mxu0 0
        %1651 = vmatprep.subr.bf16.mxu0 0
        %1652 = vmatpush1.bf16.xpose.msra.mxu0 0
        %1653 = vmatprep.subr.bf16.mxu0 0
        %1654 = vmatpush1.bf16.xpose.msra.mxu0 0
        %1655 = vmatprep.subr.bf16.mxu0 0
        %1656 = vmatpush1.bf16.xpose.msra.mxu0 0
        %1657 = vmatprep.subr.bf16.mxu0 0
        %1658 = vmatpush1.bf16.xpose.msra.mxu0 0
        %1659 = vmatprep.mubr.bf16.mxu0 0
        %1660 = vmatmul.mubr.bf16.gmra.mrb[0].mxu0 %v1622
        %v1661 = vpop.f32.mrb[0].mxu0
        %v1662 = vadd.f32 %v926, %v1661
        %v1663 = vpop.f32.mrb[0].mxu0
        %v1664 = vpop.f32.mrb[0].mxu0
        %v1665 = vpop.f32.mrb[0].mxu0
        %1666 = vdwg.mxu0
        %v1668 = vsel %vm196, %v398, 0
        %v1671 = vsel %vm196, %v430, 0
        %1673 = vmatprep.subr.bf16.mxu0 0
        %1674 = vmatpush1.bf16.xpose.msra.mxu0 %v1671
        %1675 = vmatprep.subr.bf16.mxu0 0
        %1676 = vmatpush1.bf16.xpose.msra.mxu0 0
        %1677 = vmatprep.subr.bf16.mxu0 0
        %1678 = vmatpush1.bf16.xpose.msra.mxu0 0
        %1679 = vmatprep.subr.bf16.mxu0 0
        %1680 = vmatpush1.bf16.xpose.msra.mxu0 0
        %1681 = vmatprep.subr.bf16.mxu0 0
        %1682 = vmatpush1.bf16.xpose.msra.mxu0 0
        %1683 = vmatprep.subr.bf16.mxu0 0
        %1684 = vmatpush1.bf16.xpose.msra.mxu0 0
        %1685 = vmatprep.subr.bf16.mxu0 0
        %1686 = vmatpush1.bf16.xpose.msra.mxu0 0
        %1687 = vmatprep.subr.bf16.mxu0 0
        %1688 = vmatpush1.bf16.xpose.msra.mxu0 0
        %1689 = vmatprep.subr.bf16.mxu0 0
        %1690 = vmatpush1.bf16.xpose.msra.mxu0 0
        %1691 = vmatprep.subr.bf16.mxu0 0
        %1692 = vmatpush1.bf16.xpose.msra.mxu0 0
        %1693 = vmatprep.subr.bf16.mxu0 0
        %1694 = vmatpush1.bf16.xpose.msra.mxu0 0
        %1695 = vmatprep.subr.bf16.mxu0 0
        %1696 = vmatpush1.bf16.xpose.msra.mxu0 0
        %1697 = vmatprep.subr.bf16.mxu0 0
        %1698 = vmatpush1.bf16.xpose.msra.mxu0 0
        %1699 = vmatprep.subr.bf16.mxu0 0
        %1700 = vmatpush1.bf16.xpose.msra.mxu0 0
        %1701 = vmatprep.subr.bf16.mxu0 0
        %1702 = vmatpush1.bf16.xpose.msra.mxu0 0
        %1703 = vmatprep.subr.bf16.mxu0 0
        %1704 = vmatpush1.bf16.xpose.msra.mxu0 0
        %1705 = vmatprep.mubr.bf16.mxu0 0
        %1706 = vmatmul.mubr.bf16.gmra.mrb[0].mxu0 %v1668
        %v1707 = vpop.f32.mrb[0].mxu0
        %v1708 = vadd.f32 %v972, %v1707
        %v1709 = vpop.f32.mrb[0].mxu0
        %v1710 = vpop.f32.mrb[0].mxu0
        %v1711 = vpop.f32.mrb[0].mxu0
        %1712 = vdwg.mxu0
        %v1714 = vsel %vm196, %v399, 0
        %v1717 = vsel %vm196, %v431, 0
        %1719 = vmatprep.subr.bf16.mxu0 0
        %1720 = vmatpush1.bf16.xpose.msra.mxu0 %v1717
        %1721 = vmatprep.subr.bf16.mxu0 0
        %1722 = vmatpush1.bf16.xpose.msra.mxu0 0
        %1723 = vmatprep.subr.bf16.mxu0 0
        %1724 = vmatpush1.bf16.xpose.msra.mxu0 0
        %1725 = vmatprep.subr.bf16.mxu0 0
        %1726 = vmatpush1.bf16.xpose.msra.mxu0 0
        %1727 = vmatprep.subr.bf16.mxu0 0
        %1728 = vmatpush1.bf16.xpose.msra.mxu0 0
        %1729 = vmatprep.subr.bf16.mxu0 0
        %1730 = vmatpush1.bf16.xpose.msra.mxu0 0
        %1731 = vmatprep.subr.bf16.mxu0 0
        %1732 = vmatpush1.bf16.xpose.msra.mxu0 0
        %1733 = vmatprep.subr.bf16.mxu0 0
        %1734 = vmatpush1.bf16.xpose.msra.mxu0 0
        %1735 = vmatprep.subr.bf16.mxu0 0
        %1736 = vmatpush1.bf16.xpose.msra.mxu0 0
        %1737 = vmatprep.subr.bf16.mxu0 0
        %1738 = vmatpush1.bf16.xpose.msra.mxu0 0
        %1739 = vmatprep.subr.bf16.mxu0 0
        %1740 = vmatpush1.bf16.xpose.msra.mxu0 0
        %1741 = vmatprep.subr.bf16.mxu0 0
        %1742 = vmatpush1.bf16.xpose.msra.mxu0 0
        %1743 = vmatprep.subr.bf16.mxu0 0
        %1744 = vmatpush1.bf16.xpose.msra.mxu0 0
        %1745 = vmatprep.subr.bf16.mxu0 0
        %1746 = vmatpush1.bf16.xpose.msra.mxu0 0
        %1747 = vmatprep.subr.bf16.mxu0 0
        %1748 = vmatpush1.bf16.xpose.msra.mxu0 0
        %1749 = vmatprep.subr.bf16.mxu0 0
        %1750 = vmatpush1.bf16.xpose.msra.mxu0 0
        %1751 = vmatprep.mubr.bf16.mxu0 0
        %1752 = vmatmul.mubr.bf16.gmra.mrb[0].mxu0 %v1714
        %v1753 = vpop.f32.mrb[0].mxu0
        %v1754 = vadd.f32 %v1018, %v1753
        %v1755 = vpop.f32.mrb[0].mxu0
        %v1756 = vpop.f32.mrb[0].mxu0
        %v1757 = vpop.f32.mrb[0].mxu0
        %1758 = vdwg.mxu0
        %v1760 = vsel %vm196, %v400, 0
        %v1763 = vsel %vm196, %v432, 0
        %1765 = vmatprep.subr.bf16.mxu0 0
        %1766 = vmatpush1.bf16.xpose.msra.mxu0 %v1763
        %1767 = vmatprep.subr.bf16.mxu0 0
        %1768 = vmatpush1.bf16.xpose.msra.mxu0 0
        %1769 = vmatprep.subr.bf16.mxu0 0
        %1770 = vmatpush1.bf16.xpose.msra.mxu0 0
        %1771 = vmatprep.subr.bf16.mxu0 0
        %1772 = vmatpush1.bf16.xpose.msra.mxu0 0
        %1773 = vmatprep.subr.bf16.mxu0 0
        %1774 = vmatpush1.bf16.xpose.msra.mxu0 0
        %1775 = vmatprep.subr.bf16.mxu0 0
        %1776 = vmatpush1.bf16.xpose.msra.mxu0 0
        %1777 = vmatprep.subr.bf16.mxu0 0
        %1778 = vmatpush1.bf16.xpose.msra.mxu0 0
        %1779 = vmatprep.subr.bf16.mxu0 0
        %1780 = vmatpush1.bf16.xpose.msra.mxu0 0
        %1781 = vmatprep.subr.bf16.mxu0 0
        %1782 = vmatpush1.bf16.xpose.msra.mxu0 0
        %1783 = vmatprep.subr.bf16.mxu0 0
        %1784 = vmatpush1.bf16.xpose.msra.mxu0 0
        %1785 = vmatprep.subr.bf16.mxu0 0
        %1786 = vmatpush1.bf16.xpose.msra.mxu0 0
        %1787 = vmatprep.subr.bf16.mxu0 0
        %1788 = vmatpush1.bf16.xpose.msra.mxu0 0
        %1789 = vmatprep.subr.bf16.mxu0 0
        %1790 = vmatpush1.bf16.xpose.msra.mxu0 0
        %1791 = vmatprep.subr.bf16.mxu0 0
        %1792 = vmatpush1.bf16.xpose.msra.mxu0 0
        %1793 = vmatprep.subr.bf16.mxu0 0
        %1794 = vmatpush1.bf16.xpose.msra.mxu0 0
        %1795 = vmatprep.subr.bf16.mxu0 0
        %1796 = vmatpush1.bf16.xpose.msra.mxu0 0
        %1797 = vmatprep.mubr.bf16.mxu0 0
        %1798 = vmatmul.mubr.bf16.gmra.mrb[0].mxu0 %v1760
        %v1799 = vpop.f32.mrb[0].mxu0
        %v1800 = vadd.f32 %v1064, %v1799
        %v1801 = vpop.f32.mrb[0].mxu0
        %v1802 = vpop.f32.mrb[0].mxu0
        %v1803 = vpop.f32.mrb[0].mxu0
        %1804 = vdwg.mxu0
        %v1806 = vsel %vm196, %v401, 0
        %v1809 = vsel %vm196, %v433, 0
        %1811 = vmatprep.subr.bf16.mxu0 0
        %1812 = vmatpush1.bf16.xpose.msra.mxu0 %v1809
        %1813 = vmatprep.subr.bf16.mxu0 0
        %1814 = vmatpush1.bf16.xpose.msra.mxu0 0
        %1815 = vmatprep.subr.bf16.mxu0 0
        %1816 = vmatpush1.bf16.xpose.msra.mxu0 0
        %1817 = vmatprep.subr.bf16.mxu0 0
        %1818 = vmatpush1.bf16.xpose.msra.mxu0 0
        %1819 = vmatprep.subr.bf16.mxu0 0
        %1820 = vmatpush1.bf16.xpose.msra.mxu0 0
        %1821 = vmatprep.subr.bf16.mxu0 0
        %1822 = vmatpush1.bf16.xpose.msra.mxu0 0
        %1823 = vmatprep.subr.bf16.mxu0 0
        %1824 = vmatpush1.bf16.xpose.msra.mxu0 0
        %1825 = vmatprep.subr.bf16.mxu0 0
        %1826 = vmatpush1.bf16.xpose.msra.mxu0 0
        %1827 = vmatprep.subr.bf16.mxu0 0
        %1828 = vmatpush1.bf16.xpose.msra.mxu0 0
        %1829 = vmatprep.subr.bf16.mxu0 0
        %1830 = vmatpush1.bf16.xpose.msra.mxu0 0
        %1831 = vmatprep.subr.bf16.mxu0 0
        %1832 = vmatpush1.bf16.xpose.msra.mxu0 0
        %1833 = vmatprep.subr.bf16.mxu0 0
        %1834 = vmatpush1.bf16.xpose.msra.mxu0 0
        %1835 = vmatprep.subr.bf16.mxu0 0
        %1836 = vmatpush1.bf16.xpose.msra.mxu0 0
        %1837 = vmatprep.subr.bf16.mxu0 0
        %1838 = vmatpush1.bf16.xpose.msra.mxu0 0
        %1839 = vmatprep.subr.bf16.mxu0 0
        %1840 = vmatpush1.bf16.xpose.msra.mxu0 0
        %1841 = vmatprep.subr.bf16.mxu0 0
        %1842 = vmatpush1.bf16.xpose.msra.mxu0 0
        %1843 = vmatprep.mubr.bf16.mxu0 0
        %1844 = vmatmul.mubr.bf16.gmra.mrb[0].mxu0 %v1806
        %v1845 = vpop.f32.mrb[0].mxu0
        %v1846 = vadd.f32 %v1110, %v1845
        %v1847 = vpop.f32.mrb[0].mxu0
        %v1848 = vpop.f32.mrb[0].mxu0
        %v1849 = vpop.f32.mrb[0].mxu0
        %1850 = vdwg.mxu0
        %v1852 = vsel %vm196, %v402, 0
        %v1855 = vsel %vm196, %v434, 0
        %1857 = vmatprep.subr.bf16.mxu0 0
        %1858 = vmatpush1.bf16.xpose.msra.mxu0 %v1855
        %1859 = vmatprep.subr.bf16.mxu0 0
        %1860 = vmatpush1.bf16.xpose.msra.mxu0 0
        %1861 = vmatprep.subr.bf16.mxu0 0
        %1862 = vmatpush1.bf16.xpose.msra.mxu0 0
        %1863 = vmatprep.subr.bf16.mxu0 0
        %1864 = vmatpush1.bf16.xpose.msra.mxu0 0
        %1865 = vmatprep.subr.bf16.mxu0 0
        %1866 = vmatpush1.bf16.xpose.msra.mxu0 0
        %1867 = vmatprep.subr.bf16.mxu0 0
        %1868 = vmatpush1.bf16.xpose.msra.mxu0 0
        %1869 = vmatprep.subr.bf16.mxu0 0
        %1870 = vmatpush1.bf16.xpose.msra.mxu0 0
        %1871 = vmatprep.subr.bf16.mxu0 0
        %1872 = vmatpush1.bf16.xpose.msra.mxu0 0
        %1873 = vmatprep.subr.bf16.mxu0 0
        %1874 = vmatpush1.bf16.xpose.msra.mxu0 0
        %1875 = vmatprep.subr.bf16.mxu0 0
        %1876 = vmatpush1.bf16.xpose.msra.mxu0 0
        %1877 = vmatprep.subr.bf16.mxu0 0
        %1878 = vmatpush1.bf16.xpose.msra.mxu0 0
        %1879 = vmatprep.subr.bf16.mxu0 0
        %1880 = vmatpush1.bf16.xpose.msra.mxu0 0
        %1881 = vmatprep.subr.bf16.mxu0 0
        %1882 = vmatpush1.bf16.xpose.msra.mxu0 0
        %1883 = vmatprep.subr.bf16.mxu0 0
        %1884 = vmatpush1.bf16.xpose.msra.mxu0 0
        %1885 = vmatprep.subr.bf16.mxu0 0
        %1886 = vmatpush1.bf16.xpose.msra.mxu0 0
        %1887 = vmatprep.subr.bf16.mxu0 0
        %1888 = vmatpush1.bf16.xpose.msra.mxu0 0
        %1889 = vmatprep.mubr.bf16.mxu0 0
        %1890 = vmatmul.mubr.bf16.gmra.mrb[0].mxu0 %v1852
        %v1891 = vpop.f32.mrb[0].mxu0
        %v1892 = vadd.f32 %v1156, %v1891
        %v1893 = vpop.f32.mrb[0].mxu0
        %v1894 = vpop.f32.mrb[0].mxu0
        %v1895 = vpop.f32.mrb[0].mxu0
        %1896 = vdwg.mxu0
        %v1898 = vsel %vm196, %v403, 0
        %v1901 = vsel %vm196, %v435, 0
        %1903 = vmatprep.subr.bf16.mxu0 0
        %1904 = vmatpush1.bf16.xpose.msra.mxu0 %v1901
        %1905 = vmatprep.subr.bf16.mxu0 0
        %1906 = vmatpush1.bf16.xpose.msra.mxu0 0
        %1907 = vmatprep.subr.bf16.mxu0 0
        %1908 = vmatpush1.bf16.xpose.msra.mxu0 0
        %1909 = vmatprep.subr.bf16.mxu0 0
        %1910 = vmatpush1.bf16.xpose.msra.mxu0 0
        %1911 = vmatprep.subr.bf16.mxu0 0
        %1912 = vmatpush1.bf16.xpose.msra.mxu0 0
        %1913 = vmatprep.subr.bf16.mxu0 0
        %1914 = vmatpush1.bf16.xpose.msra.mxu0 0
        %1915 = vmatprep.subr.bf16.mxu0 0
        %1916 = vmatpush1.bf16.xpose.msra.mxu0 0
        %1917 = vmatprep.subr.bf16.mxu0 0
        %1918 = vmatpush1.bf16.xpose.msra.mxu0 0
        %1919 = vmatprep.subr.bf16.mxu0 0
        %1920 = vmatpush1.bf16.xpose.msra.mxu0 0
        %1921 = vmatprep.subr.bf16.mxu0 0
        %1922 = vmatpush1.bf16.xpose.msra.mxu0 0
        %1923 = vmatprep.subr.bf16.mxu0 0
        %1924 = vmatpush1.bf16.xpose.msra.mxu0 0
        %1925 = vmatprep.subr.bf16.mxu0 0
        %1926 = vmatpush1.bf16.xpose.msra.mxu0 0
        %1927 = vmatprep.subr.bf16.mxu0 0
        %1928 = vmatpush1.bf16.xpose.msra.mxu0 0
        %1929 = vmatprep.subr.bf16.mxu0 0
        %1930 = vmatpush1.bf16.xpose.msra.mxu0 0
        %1931 = vmatprep.subr.bf16.mxu0 0
        %1932 = vmatpush1.bf16.xpose.msra.mxu0 0
        %1933 = vmatprep.subr.bf16.mxu0 0
        %1934 = vmatpush1.bf16.xpose.msra.mxu0 0
        %1935 = vmatprep.mubr.bf16.mxu0 0
        %1936 = vmatmul.mubr.bf16.gmra.mrb[0].mxu0 %v1898
        %v1937 = vpop.f32.mrb[0].mxu0
        %v1938 = vadd.f32 %v1202, %v1937
        %v1939 = vpop.f32.mrb[0].mxu0
        %v1940 = vpop.f32.mrb[0].mxu0
        %v1941 = vpop.f32.mrb[0].mxu0
        %1942 = vdwg.mxu0
        %v1944 = vsel %vm196, %v404, 0
        %v1947 = vsel %vm196, %v436, 0
        %1949 = vmatprep.subr.bf16.mxu0 0
        %1950 = vmatpush1.bf16.xpose.msra.mxu0 %v1947
        %1951 = vmatprep.subr.bf16.mxu0 0
        %1952 = vmatpush1.bf16.xpose.msra.mxu0 0
        %1953 = vmatprep.subr.bf16.mxu0 0
        %1954 = vmatpush1.bf16.xpose.msra.mxu0 0
        %1955 = vmatprep.subr.bf16.mxu0 0
        %1956 = vmatpush1.bf16.xpose.msra.mxu0 0
        %1957 = vmatprep.subr.bf16.mxu0 0
        %1958 = vmatpush1.bf16.xpose.msra.mxu0 0
        %1959 = vmatprep.subr.bf16.mxu0 0
        %1960 = vmatpush1.bf16.xpose.msra.mxu0 0
        %1961 = vmatprep.subr.bf16.mxu0 0
        %1962 = vmatpush1.bf16.xpose.msra.mxu0 0
        %1963 = vmatprep.subr.bf16.mxu0 0
        %1964 = vmatpush1.bf16.xpose.msra.mxu0 0
        %1965 = vmatprep.subr.bf16.mxu0 0
        %1966 = vmatpush1.bf16.xpose.msra.mxu0 0
        %1967 = vmatprep.subr.bf16.mxu0 0
        %1968 = vmatpush1.bf16.xpose.msra.mxu0 0
        %1969 = vmatprep.subr.bf16.mxu0 0
        %1970 = vmatpush1.bf16.xpose.msra.mxu0 0
        %1971 = vmatprep.subr.bf16.mxu0 0
        %1972 = vmatpush1.bf16.xpose.msra.mxu0 0
        %1973 = vmatprep.subr.bf16.mxu0 0
        %1974 = vmatpush1.bf16.xpose.msra.mxu0 0
        %1975 = vmatprep.subr.bf16.mxu0 0
        %1976 = vmatpush1.bf16.xpose.msra.mxu0 0
        %1977 = vmatprep.subr.bf16.mxu0 0
        %1978 = vmatpush1.bf16.xpose.msra.mxu0 0
        %1979 = vmatprep.subr.bf16.mxu0 0
        %1980 = vmatpush1.bf16.xpose.msra.mxu0 0
        %1981 = vmatprep.mubr.bf16.mxu0 0
        %1982 = vmatmul.mubr.bf16.gmra.mrb[0].mxu0 %v1944
        %v1983 = vpop.f32.mrb[0].mxu0
        %v1984 = vadd.f32 %v1248, %v1983
        %v1985 = vpop.f32.mrb[0].mxu0
        %v1986 = vpop.f32.mrb[0].mxu0
        %v1987 = vpop.f32.mrb[0].mxu0
        %1988 = vdwg.mxu0
        %vm1989 = vcmp.eq.f32.partialorder %v164, 3.0
        %vm1990 = vcmp.eq.f32.partialorder %v165, 3.0
        %vm1991 = vcmp.eq.f32.partialorder %v166, 3.0
        %vm1992 = vcmp.eq.f32.partialorder %v167, 3.0
        %vm1993 = vcmp.eq.f32.partialorder %v168, 3.0
        %vm1994 = vcmp.eq.f32.partialorder %v169, 3.0
        %vm1995 = vcmp.eq.f32.partialorder %v170, 3.0
        %vm1996 = vcmp.eq.f32.partialorder %v171, 3.0
        %vm1997 = vcmp.eq.f32.partialorder %v172, 3.0
        %vm1998 = vcmp.eq.f32.partialorder %v173, 3.0
        %vm1999 = vcmp.eq.f32.partialorder %v174, 3.0
        %vm2000 = vcmp.eq.f32.partialorder %v175, 3.0
        %vm2001 = vcmp.eq.f32.partialorder %v176, 3.0
        %vm2002 = vcmp.eq.f32.partialorder %v177, 3.0
        %vm2003 = vcmp.eq.f32.partialorder %v178, 3.0
        %vm2004 = vcmp.eq.f32.partialorder %v179, 3.0
        %v2005 = vsel %vm1989, %v341, 0.0
        %v2006 = vsel %vm1990, %v342, 0.0
        %v2007 = vsel %vm1991, %v343, 0.0
        %v2008 = vsel %vm1992, %v344, 0.0
        %v2009 = vsel %vm1993, %v345, 0.0
        %v2010 = vsel %vm1994, %v346, 0.0
        %v2011 = vsel %vm1995, %v347, 0.0
        %v2012 = vsel %vm1996, %v348, 0.0
        %v2013 = vsel %vm1997, %v349, 0.0
        %v2014 = vsel %vm1998, %v350, 0.0
        %v2015 = vsel %vm1999, %v351, 0.0
        %v2016 = vsel %vm2000, %v352, 0.0
        %v2017 = vsel %vm2001, %v353, 0.0
        %v2018 = vsel %vm2002, %v354, 0.0
        %v2019 = vsel %vm2003, %v355, 0.0
        %v2020 = vsel %vm2004, %v356, 0.0
        %v2021 = vpack.c.bf16 %v2005, %v2005
        %v2022 = vpack.c.bf16 %v2006, %v2006
        %v2023 = vpack.c.bf16 %v2007, %v2007
        %v2024 = vpack.c.bf16 %v2008, %v2008
        %v2025 = vpack.c.bf16 %v2009, %v2009
        %v2026 = vpack.c.bf16 %v2010, %v2010
        %v2027 = vpack.c.bf16 %v2011, %v2011
        %v2028 = vpack.c.bf16 %v2012, %v2012
        %v2029 = vpack.c.bf16 %v2013, %v2013
        %v2030 = vpack.c.bf16 %v2014, %v2014
        %v2031 = vpack.c.bf16 %v2015, %v2015
        %v2032 = vpack.c.bf16 %v2016, %v2016
        %v2033 = vpack.c.bf16 %v2017, %v2017
        %v2034 = vpack.c.bf16 %v2018, %v2018
        %v2035 = vpack.c.bf16 %v2019, %v2019
        %v2036 = vpack.c.bf16 %v2020, %v2020
        %v2037 = vsel %vm1989, %v199, 0.0
        %v2038 = vsel %vm1990, %v202, 0.0
        %v2039 = vsel %vm1991, %v205, 0.0
        %v2040 = vsel %vm1992, %v208, 0.0
        %v2041 = vsel %vm1993, %v211, 0.0
        %v2042 = vsel %vm1994, %v214, 0.0
        %v2043 = vsel %vm1995, %v217, 0.0
        %v2044 = vsel %vm1996, %v220, 0.0
        %v2045 = vsel %vm1997, %v223, 0.0
        %v2046 = vsel %vm1998, %v226, 0.0
        %v2047 = vsel %vm1999, %v229, 0.0
        %v2048 = vsel %vm2000, %v232, 0.0
        %v2049 = vsel %vm2001, %v235, 0.0
        %v2050 = vsel %vm2002, %v238, 0.0
        %v2051 = vsel %vm2003, %v241, 0.0
        %v2052 = vsel %vm2004, %v244, 0.0
        %v2053 = vpack.c.bf16 %v2037, %v2037
        %v2054 = vpack.c.bf16 %v2038, %v2038
        %v2055 = vpack.c.bf16 %v2039, %v2039
        %v2056 = vpack.c.bf16 %v2040, %v2040
        %v2057 = vpack.c.bf16 %v2041, %v2041
        %v2058 = vpack.c.bf16 %v2042, %v2042
        %v2059 = vpack.c.bf16 %v2043, %v2043
        %v2060 = vpack.c.bf16 %v2044, %v2044
        %v2061 = vpack.c.bf16 %v2045, %v2045
        %v2062 = vpack.c.bf16 %v2046, %v2046
        %v2063 = vpack.c.bf16 %v2047, %v2047
        %v2064 = vpack.c.bf16 %v2048, %v2048
        %v2065 = vpack.c.bf16 %v2049, %v2049
        %v2066 = vpack.c.bf16 %v2050, %v2050
        %v2067 = vpack.c.bf16 %v2051, %v2051
        %v2068 = vpack.c.bf16 %v2052, %v2052
        %v2070 = vsel %vm196, %v2021, 0
        %v2073 = vsel %vm196, %v2053, 0
        %2075 = vmatprep.subr.bf16.mxu0 0
        %2076 = vmatpush1.bf16.xpose.msra.mxu0 %v2073
        %2077 = vmatprep.subr.bf16.mxu0 0
        %2078 = vmatpush1.bf16.xpose.msra.mxu0 0
        %2079 = vmatprep.subr.bf16.mxu0 0
        %2080 = vmatpush1.bf16.xpose.msra.mxu0 0
        %2081 = vmatprep.subr.bf16.mxu0 0
        %2082 = vmatpush1.bf16.xpose.msra.mxu0 0
        %2083 = vmatprep.subr.bf16.mxu0 0
        %2084 = vmatpush1.bf16.xpose.msra.mxu0 0
        %2085 = vmatprep.subr.bf16.mxu0 0
        %2086 = vmatpush1.bf16.xpose.msra.mxu0 0
        %2087 = vmatprep.subr.bf16.mxu0 0
        %2088 = vmatpush1.bf16.xpose.msra.mxu0 0
        %2089 = vmatprep.subr.bf16.mxu0 0
        %2090 = vmatpush1.bf16.xpose.msra.mxu0 0
        %2091 = vmatprep.subr.bf16.mxu0 0
        %2092 = vmatpush1.bf16.xpose.msra.mxu0 0
        %2093 = vmatprep.subr.bf16.mxu0 0
        %2094 = vmatpush1.bf16.xpose.msra.mxu0 0
        %2095 = vmatprep.subr.bf16.mxu0 0
        %2096 = vmatpush1.bf16.xpose.msra.mxu0 0
        %2097 = vmatprep.subr.bf16.mxu0 0
        %2098 = vmatpush1.bf16.xpose.msra.mxu0 0
        %2099 = vmatprep.subr.bf16.mxu0 0
        %2100 = vmatpush1.bf16.xpose.msra.mxu0 0
        %2101 = vmatprep.subr.bf16.mxu0 0
        %2102 = vmatpush1.bf16.xpose.msra.mxu0 0
        %2103 = vmatprep.subr.bf16.mxu0 0
        %2104 = vmatpush1.bf16.xpose.msra.mxu0 0
        %2105 = vmatprep.subr.bf16.mxu0 0
        %2106 = vmatpush1.bf16.xpose.msra.mxu0 0
        %2107 = vmatprep.mubr.bf16.mxu0 0
        %2108 = vmatmul.mubr.bf16.gmra.mrb[0].mxu0 %v2070
        %v2109 = vpop.f32.mrb[0].mxu0
        %v2110 = vadd.f32 0.0, %v2109
        %v2111 = vpop.f32.mrb[0].mxu0
        %v2112 = vpop.f32.mrb[0].mxu0
        %v2113 = vpop.f32.mrb[0].mxu0
        %2114 = vdwg.mxu0
        %v2116 = vsel %vm196, %v2022, 0
        %v2119 = vsel %vm196, %v2054, 0
        %2121 = vmatprep.subr.bf16.mxu0 0
        %2122 = vmatpush1.bf16.xpose.msra.mxu0 %v2119
        %2123 = vmatprep.subr.bf16.mxu0 0
        %2124 = vmatpush1.bf16.xpose.msra.mxu0 0
        %2125 = vmatprep.subr.bf16.mxu0 0
        %2126 = vmatpush1.bf16.xpose.msra.mxu0 0
        %2127 = vmatprep.subr.bf16.mxu0 0
        %2128 = vmatpush1.bf16.xpose.msra.mxu0 0
        %2129 = vmatprep.subr.bf16.mxu0 0
        %2130 = vmatpush1.bf16.xpose.msra.mxu0 0
        %2131 = vmatprep.subr.bf16.mxu0 0
        %2132 = vmatpush1.bf16.xpose.msra.mxu0 0
        %2133 = vmatprep.subr.bf16.mxu0 0
        %2134 = vmatpush1.bf16.xpose.msra.mxu0 0
        %2135 = vmatprep.subr.bf16.mxu0 0
        %2136 = vmatpush1.bf16.xpose.msra.mxu0 0
        %2137 = vmatprep.subr.bf16.mxu0 0
        %2138 = vmatpush1.bf16.xpose.msra.mxu0 0
        %2139 = vmatprep.subr.bf16.mxu0 0
        %2140 = vmatpush1.bf16.xpose.msra.mxu0 0
        %2141 = vmatprep.subr.bf16.mxu0 0
        %2142 = vmatpush1.bf16.xpose.msra.mxu0 0
        %2143 = vmatprep.subr.bf16.mxu0 0
        %2144 = vmatpush1.bf16.xpose.msra.mxu0 0
        %2145 = vmatprep.subr.bf16.mxu0 0
        %2146 = vmatpush1.bf16.xpose.msra.mxu0 0
        %2147 = vmatprep.subr.bf16.mxu0 0
        %2148 = vmatpush1.bf16.xpose.msra.mxu0 0
        %2149 = vmatprep.subr.bf16.mxu0 0
        %2150 = vmatpush1.bf16.xpose.msra.mxu0 0
        %2151 = vmatprep.subr.bf16.mxu0 0
        %2152 = vmatpush1.bf16.xpose.msra.mxu0 0
        %2153 = vmatprep.mubr.bf16.mxu0 0
        %2154 = vmatmul.mubr.bf16.gmra.mrb[0].mxu0 %v2116
        %v2155 = vpop.f32.mrb[0].mxu0
        %v2156 = vadd.f32 0.0, %v2155
        %v2157 = vpop.f32.mrb[0].mxu0
        %v2158 = vpop.f32.mrb[0].mxu0
        %v2159 = vpop.f32.mrb[0].mxu0
        %2160 = vdwg.mxu0
        %v2162 = vsel %vm196, %v2023, 0
        %v2165 = vsel %vm196, %v2055, 0
        %2167 = vmatprep.subr.bf16.mxu0 0
        %2168 = vmatpush1.bf16.xpose.msra.mxu0 %v2165
        %2169 = vmatprep.subr.bf16.mxu0 0
        %2170 = vmatpush1.bf16.xpose.msra.mxu0 0
        %2171 = vmatprep.subr.bf16.mxu0 0
        %2172 = vmatpush1.bf16.xpose.msra.mxu0 0
        %2173 = vmatprep.subr.bf16.mxu0 0
        %2174 = vmatpush1.bf16.xpose.msra.mxu0 0
        %2175 = vmatprep.subr.bf16.mxu0 0
        %2176 = vmatpush1.bf16.xpose.msra.mxu0 0
        %2177 = vmatprep.subr.bf16.mxu0 0
        %2178 = vmatpush1.bf16.xpose.msra.mxu0 0
        %2179 = vmatprep.subr.bf16.mxu0 0
        %2180 = vmatpush1.bf16.xpose.msra.mxu0 0
        %2181 = vmatprep.subr.bf16.mxu0 0
        %2182 = vmatpush1.bf16.xpose.msra.mxu0 0
        %2183 = vmatprep.subr.bf16.mxu0 0
        %2184 = vmatpush1.bf16.xpose.msra.mxu0 0
        %2185 = vmatprep.subr.bf16.mxu0 0
        %2186 = vmatpush1.bf16.xpose.msra.mxu0 0
        %2187 = vmatprep.subr.bf16.mxu0 0
        %2188 = vmatpush1.bf16.xpose.msra.mxu0 0
        %2189 = vmatprep.subr.bf16.mxu0 0
        %2190 = vmatpush1.bf16.xpose.msra.mxu0 0
        %2191 = vmatprep.subr.bf16.mxu0 0
        %2192 = vmatpush1.bf16.xpose.msra.mxu0 0
        %2193 = vmatprep.subr.bf16.mxu0 0
        %2194 = vmatpush1.bf16.xpose.msra.mxu0 0
        %2195 = vmatprep.subr.bf16.mxu0 0
        %2196 = vmatpush1.bf16.xpose.msra.mxu0 0
        %2197 = vmatprep.subr.bf16.mxu0 0
        %2198 = vmatpush1.bf16.xpose.msra.mxu0 0
        %2199 = vmatprep.mubr.bf16.mxu0 0
        %2200 = vmatmul.mubr.bf16.gmra.mrb[0].mxu0 %v2162
        %v2201 = vpop.f32.mrb[0].mxu0
        %v2202 = vadd.f32 0.0, %v2201
        %v2203 = vpop.f32.mrb[0].mxu0
        %v2204 = vpop.f32.mrb[0].mxu0
        %v2205 = vpop.f32.mrb[0].mxu0
        %2206 = vdwg.mxu0
        %v2208 = vsel %vm196, %v2024, 0
        %v2211 = vsel %vm196, %v2056, 0
        %2213 = vmatprep.subr.bf16.mxu0 0
        %2214 = vmatpush1.bf16.xpose.msra.mxu0 %v2211
        %2215 = vmatprep.subr.bf16.mxu0 0
        %2216 = vmatpush1.bf16.xpose.msra.mxu0 0
        %2217 = vmatprep.subr.bf16.mxu0 0
        %2218 = vmatpush1.bf16.xpose.msra.mxu0 0
        %2219 = vmatprep.subr.bf16.mxu0 0
        %2220 = vmatpush1.bf16.xpose.msra.mxu0 0
        %2221 = vmatprep.subr.bf16.mxu0 0
        %2222 = vmatpush1.bf16.xpose.msra.mxu0 0
        %2223 = vmatprep.subr.bf16.mxu0 0
        %2224 = vmatpush1.bf16.xpose.msra.mxu0 0
        %2225 = vmatprep.subr.bf16.mxu0 0
        %2226 = vmatpush1.bf16.xpose.msra.mxu0 0
        %2227 = vmatprep.subr.bf16.mxu0 0
        %2228 = vmatpush1.bf16.xpose.msra.mxu0 0
        %2229 = vmatprep.subr.bf16.mxu0 0
        %2230 = vmatpush1.bf16.xpose.msra.mxu0 0
        %2231 = vmatprep.subr.bf16.mxu0 0
        %2232 = vmatpush1.bf16.xpose.msra.mxu0 0
        %2233 = vmatprep.subr.bf16.mxu0 0
        %2234 = vmatpush1.bf16.xpose.msra.mxu0 0
        %2235 = vmatprep.subr.bf16.mxu0 0
        %2236 = vmatpush1.bf16.xpose.msra.mxu0 0
        %2237 = vmatprep.subr.bf16.mxu0 0
        %2238 = vmatpush1.bf16.xpose.msra.mxu0 0
        %2239 = vmatprep.subr.bf16.mxu0 0
        %2240 = vmatpush1.bf16.xpose.msra.mxu0 0
        %2241 = vmatprep.subr.bf16.mxu0 0
        %2242 = vmatpush1.bf16.xpose.msra.mxu0 0
        %2243 = vmatprep.subr.bf16.mxu0 0
        %2244 = vmatpush1.bf16.xpose.msra.mxu0 0
        %2245 = vmatprep.mubr.bf16.mxu0 0
        %2246 = vmatmul.mubr.bf16.gmra.mrb[0].mxu0 %v2208
        %v2247 = vpop.f32.mrb[0].mxu0
        %v2248 = vadd.f32 0.0, %v2247
        %v2249 = vpop.f32.mrb[0].mxu0
        %v2250 = vpop.f32.mrb[0].mxu0
        %v2251 = vpop.f32.mrb[0].mxu0
        %2252 = vdwg.mxu0
        %v2254 = vsel %vm196, %v2025, 0
        %v2257 = vsel %vm196, %v2057, 0
        %2259 = vmatprep.subr.bf16.mxu0 0
        %2260 = vmatpush1.bf16.xpose.msra.mxu0 %v2257
        %2261 = vmatprep.subr.bf16.mxu0 0
        %2262 = vmatpush1.bf16.xpose.msra.mxu0 0
        %2263 = vmatprep.subr.bf16.mxu0 0
        %2264 = vmatpush1.bf16.xpose.msra.mxu0 0
        %2265 = vmatprep.subr.bf16.mxu0 0
        %2266 = vmatpush1.bf16.xpose.msra.mxu0 0
        %2267 = vmatprep.subr.bf16.mxu0 0
        %2268 = vmatpush1.bf16.xpose.msra.mxu0 0
        %2269 = vmatprep.subr.bf16.mxu0 0
        %2270 = vmatpush1.bf16.xpose.msra.mxu0 0
        %2271 = vmatprep.subr.bf16.mxu0 0
        %2272 = vmatpush1.bf16.xpose.msra.mxu0 0
        %2273 = vmatprep.subr.bf16.mxu0 0
        %2274 = vmatpush1.bf16.xpose.msra.mxu0 0
        %2275 = vmatprep.subr.bf16.mxu0 0
        %2276 = vmatpush1.bf16.xpose.msra.mxu0 0
        %2277 = vmatprep.subr.bf16.mxu0 0
        %2278 = vmatpush1.bf16.xpose.msra.mxu0 0
        %2279 = vmatprep.subr.bf16.mxu0 0
        %2280 = vmatpush1.bf16.xpose.msra.mxu0 0
        %2281 = vmatprep.subr.bf16.mxu0 0
        %2282 = vmatpush1.bf16.xpose.msra.mxu0 0
        %2283 = vmatprep.subr.bf16.mxu0 0
        %2284 = vmatpush1.bf16.xpose.msra.mxu0 0
        %2285 = vmatprep.subr.bf16.mxu0 0
        %2286 = vmatpush1.bf16.xpose.msra.mxu0 0
        %2287 = vmatprep.subr.bf16.mxu0 0
        %2288 = vmatpush1.bf16.xpose.msra.mxu0 0
        %2289 = vmatprep.subr.bf16.mxu0 0
        %2290 = vmatpush1.bf16.xpose.msra.mxu0 0
        %2291 = vmatprep.mubr.bf16.mxu0 0
        %2292 = vmatmul.mubr.bf16.gmra.mrb[0].mxu0 %v2254
        %v2293 = vpop.f32.mrb[0].mxu0
        %v2294 = vadd.f32 0.0, %v2293
        %v2295 = vpop.f32.mrb[0].mxu0
        %v2296 = vpop.f32.mrb[0].mxu0
        %v2297 = vpop.f32.mrb[0].mxu0
        %2298 = vdwg.mxu0
        %v2300 = vsel %vm196, %v2026, 0
        %v2303 = vsel %vm196, %v2058, 0
        %2305 = vmatprep.subr.bf16.mxu0 0
        %2306 = vmatpush1.bf16.xpose.msra.mxu0 %v2303
        %2307 = vmatprep.subr.bf16.mxu0 0
        %2308 = vmatpush1.bf16.xpose.msra.mxu0 0
        %2309 = vmatprep.subr.bf16.mxu0 0
        %2310 = vmatpush1.bf16.xpose.msra.mxu0 0
        %2311 = vmatprep.subr.bf16.mxu0 0
        %2312 = vmatpush1.bf16.xpose.msra.mxu0 0
        %2313 = vmatprep.subr.bf16.mxu0 0
        %2314 = vmatpush1.bf16.xpose.msra.mxu0 0
        %2315 = vmatprep.subr.bf16.mxu0 0
        %2316 = vmatpush1.bf16.xpose.msra.mxu0 0
        %2317 = vmatprep.subr.bf16.mxu0 0
        %2318 = vmatpush1.bf16.xpose.msra.mxu0 0
        %2319 = vmatprep.subr.bf16.mxu0 0
        %2320 = vmatpush1.bf16.xpose.msra.mxu0 0
        %2321 = vmatprep.subr.bf16.mxu0 0
        %2322 = vmatpush1.bf16.xpose.msra.mxu0 0
        %2323 = vmatprep.subr.bf16.mxu0 0
        %2324 = vmatpush1.bf16.xpose.msra.mxu0 0
        %2325 = vmatprep.subr.bf16.mxu0 0
        %2326 = vmatpush1.bf16.xpose.msra.mxu0 0
        %2327 = vmatprep.subr.bf16.mxu0 0
        %2328 = vmatpush1.bf16.xpose.msra.mxu0 0
        %2329 = vmatprep.subr.bf16.mxu0 0
        %2330 = vmatpush1.bf16.xpose.msra.mxu0 0
        %2331 = vmatprep.subr.bf16.mxu0 0
        %2332 = vmatpush1.bf16.xpose.msra.mxu0 0
        %2333 = vmatprep.subr.bf16.mxu0 0
        %2334 = vmatpush1.bf16.xpose.msra.mxu0 0
        %2335 = vmatprep.subr.bf16.mxu0 0
        %2336 = vmatpush1.bf16.xpose.msra.mxu0 0
        %2337 = vmatprep.mubr.bf16.mxu0 0
        %2338 = vmatmul.mubr.bf16.gmra.mrb[0].mxu0 %v2300
        %v2339 = vpop.f32.mrb[0].mxu0
        %v2340 = vadd.f32 0.0, %v2339
        %v2341 = vpop.f32.mrb[0].mxu0
        %v2342 = vpop.f32.mrb[0].mxu0
        %v2343 = vpop.f32.mrb[0].mxu0
        %2344 = vdwg.mxu0
        %v2346 = vsel %vm196, %v2027, 0
        %v2349 = vsel %vm196, %v2059, 0
        %2351 = vmatprep.subr.bf16.mxu0 0
        %2352 = vmatpush1.bf16.xpose.msra.mxu0 %v2349
        %2353 = vmatprep.subr.bf16.mxu0 0
        %2354 = vmatpush1.bf16.xpose.msra.mxu0 0
        %2355 = vmatprep.subr.bf16.mxu0 0
        %2356 = vmatpush1.bf16.xpose.msra.mxu0 0
        %2357 = vmatprep.subr.bf16.mxu0 0
        %2358 = vmatpush1.bf16.xpose.msra.mxu0 0
        %2359 = vmatprep.subr.bf16.mxu0 0
        %2360 = vmatpush1.bf16.xpose.msra.mxu0 0
        %2361 = vmatprep.subr.bf16.mxu0 0
        %2362 = vmatpush1.bf16.xpose.msra.mxu0 0
        %2363 = vmatprep.subr.bf16.mxu0 0
        %2364 = vmatpush1.bf16.xpose.msra.mxu0 0
        %2365 = vmatprep.subr.bf16.mxu0 0
        %2366 = vmatpush1.bf16.xpose.msra.mxu0 0
        %2367 = vmatprep.subr.bf16.mxu0 0
        %2368 = vmatpush1.bf16.xpose.msra.mxu0 0
        %2369 = vmatprep.subr.bf16.mxu0 0
        %2370 = vmatpush1.bf16.xpose.msra.mxu0 0
        %2371 = vmatprep.subr.bf16.mxu0 0
        %2372 = vmatpush1.bf16.xpose.msra.mxu0 0
        %2373 = vmatprep.subr.bf16.mxu0 0
        %2374 = vmatpush1.bf16.xpose.msra.mxu0 0
        %2375 = vmatprep.subr.bf16.mxu0 0
        %2376 = vmatpush1.bf16.xpose.msra.mxu0 0
        %2377 = vmatprep.subr.bf16.mxu0 0
        %2378 = vmatpush1.bf16.xpose.msra.mxu0 0
        %2379 = vmatprep.subr.bf16.mxu0 0
        %2380 = vmatpush1.bf16.xpose.msra.mxu0 0
        %2381 = vmatprep.subr.bf16.mxu0 0
        %2382 = vmatpush1.bf16.xpose.msra.mxu0 0
        %2383 = vmatprep.mubr.bf16.mxu0 0
        %2384 = vmatmul.mubr.bf16.gmra.mrb[0].mxu0 %v2346
        %v2385 = vpop.f32.mrb[0].mxu0
        %v2386 = vadd.f32 0.0, %v2385
        %v2387 = vpop.f32.mrb[0].mxu0
        %v2388 = vpop.f32.mrb[0].mxu0
        %v2389 = vpop.f32.mrb[0].mxu0
        %2390 = vdwg.mxu0
        %v2392 = vsel %vm196, %v2028, 0
        %v2395 = vsel %vm196, %v2060, 0
        %2397 = vmatprep.subr.bf16.mxu0 0
        %2398 = vmatpush1.bf16.xpose.msra.mxu0 %v2395
        %2399 = vmatprep.subr.bf16.mxu0 0
        %2400 = vmatpush1.bf16.xpose.msra.mxu0 0
        %2401 = vmatprep.subr.bf16.mxu0 0
        %2402 = vmatpush1.bf16.xpose.msra.mxu0 0
        %2403 = vmatprep.subr.bf16.mxu0 0
        %2404 = vmatpush1.bf16.xpose.msra.mxu0 0
        %2405 = vmatprep.subr.bf16.mxu0 0
        %2406 = vmatpush1.bf16.xpose.msra.mxu0 0
        %2407 = vmatprep.subr.bf16.mxu0 0
        %2408 = vmatpush1.bf16.xpose.msra.mxu0 0
        %2409 = vmatprep.subr.bf16.mxu0 0
        %2410 = vmatpush1.bf16.xpose.msra.mxu0 0
        %2411 = vmatprep.subr.bf16.mxu0 0
        %2412 = vmatpush1.bf16.xpose.msra.mxu0 0
        %2413 = vmatprep.subr.bf16.mxu0 0
        %2414 = vmatpush1.bf16.xpose.msra.mxu0 0
        %2415 = vmatprep.subr.bf16.mxu0 0
        %2416 = vmatpush1.bf16.xpose.msra.mxu0 0
        %2417 = vmatprep.subr.bf16.mxu0 0
        %2418 = vmatpush1.bf16.xpose.msra.mxu0 0
        %2419 = vmatprep.subr.bf16.mxu0 0
        %2420 = vmatpush1.bf16.xpose.msra.mxu0 0
        %2421 = vmatprep.subr.bf16.mxu0 0
        %2422 = vmatpush1.bf16.xpose.msra.mxu0 0
        %2423 = vmatprep.subr.bf16.mxu0 0
        %2424 = vmatpush1.bf16.xpose.msra.mxu0 0
        %2425 = vmatprep.subr.bf16.mxu0 0
        %2426 = vmatpush1.bf16.xpose.msra.mxu0 0
        %2427 = vmatprep.subr.bf16.mxu0 0
        %2428 = vmatpush1.bf16.xpose.msra.mxu0 0
        %2429 = vmatprep.mubr.bf16.mxu0 0
        %2430 = vmatmul.mubr.bf16.gmra.mrb[0].mxu0 %v2392
        %v2431 = vpop.f32.mrb[0].mxu0
        %v2432 = vadd.f32 0.0, %v2431
        %v2433 = vpop.f32.mrb[0].mxu0
        %v2434 = vpop.f32.mrb[0].mxu0
        %v2435 = vpop.f32.mrb[0].mxu0
        %2436 = vdwg.mxu0
        %v2438 = vsel %vm196, %v2029, 0
        %v2441 = vsel %vm196, %v2061, 0
        %2443 = vmatprep.subr.bf16.mxu0 0
        %2444 = vmatpush1.bf16.xpose.msra.mxu0 %v2441
        %2445 = vmatprep.subr.bf16.mxu0 0
        %2446 = vmatpush1.bf16.xpose.msra.mxu0 0
        %2447 = vmatprep.subr.bf16.mxu0 0
        %2448 = vmatpush1.bf16.xpose.msra.mxu0 0
        %2449 = vmatprep.subr.bf16.mxu0 0
        %2450 = vmatpush1.bf16.xpose.msra.mxu0 0
        %2451 = vmatprep.subr.bf16.mxu0 0
        %2452 = vmatpush1.bf16.xpose.msra.mxu0 0
        %2453 = vmatprep.subr.bf16.mxu0 0
        %2454 = vmatpush1.bf16.xpose.msra.mxu0 0
        %2455 = vmatprep.subr.bf16.mxu0 0
        %2456 = vmatpush1.bf16.xpose.msra.mxu0 0
        %2457 = vmatprep.subr.bf16.mxu0 0
        %2458 = vmatpush1.bf16.xpose.msra.mxu0 0
        %2459 = vmatprep.subr.bf16.mxu0 0
        %2460 = vmatpush1.bf16.xpose.msra.mxu0 0
        %2461 = vmatprep.subr.bf16.mxu0 0
        %2462 = vmatpush1.bf16.xpose.msra.mxu0 0
        %2463 = vmatprep.subr.bf16.mxu0 0
        %2464 = vmatpush1.bf16.xpose.msra.mxu0 0
        %2465 = vmatprep.subr.bf16.mxu0 0
        %2466 = vmatpush1.bf16.xpose.msra.mxu0 0
        %2467 = vmatprep.subr.bf16.mxu0 0
        %2468 = vmatpush1.bf16.xpose.msra.mxu0 0
        %2469 = vmatprep.subr.bf16.mxu0 0
        %2470 = vmatpush1.bf16.xpose.msra.mxu0 0
        %2471 = vmatprep.subr.bf16.mxu0 0
        %2472 = vmatpush1.bf16.xpose.msra.mxu0 0
        %2473 = vmatprep.subr.bf16.mxu0 0
        %2474 = vmatpush1.bf16.xpose.msra.mxu0 0
        %2475 = vmatprep.mubr.bf16.mxu0 0
        %2476 = vmatmul.mubr.bf16.gmra.mrb[0].mxu0 %v2438
        %v2477 = vpop.f32.mrb[0].mxu0
        %v2478 = vadd.f32 0.0, %v2477
        %v2479 = vpop.f32.mrb[0].mxu0
        %v2480 = vpop.f32.mrb[0].mxu0
        %v2481 = vpop.f32.mrb[0].mxu0
        %2482 = vdwg.mxu0
        %v2484 = vsel %vm196, %v2030, 0
        %v2487 = vsel %vm196, %v2062, 0
        %2489 = vmatprep.subr.bf16.mxu0 0
        %2490 = vmatpush1.bf16.xpose.msra.mxu0 %v2487
        %2491 = vmatprep.subr.bf16.mxu0 0
        %2492 = vmatpush1.bf16.xpose.msra.mxu0 0
        %2493 = vmatprep.subr.bf16.mxu0 0
        %2494 = vmatpush1.bf16.xpose.msra.mxu0 0
        %2495 = vmatprep.subr.bf16.mxu0 0
        %2496 = vmatpush1.bf16.xpose.msra.mxu0 0
        %2497 = vmatprep.subr.bf16.mxu0 0
        %2498 = vmatpush1.bf16.xpose.msra.mxu0 0
        %2499 = vmatprep.subr.bf16.mxu0 0
        %2500 = vmatpush1.bf16.xpose.msra.mxu0 0
        %2501 = vmatprep.subr.bf16.mxu0 0
        %2502 = vmatpush1.bf16.xpose.msra.mxu0 0
        %2503 = vmatprep.subr.bf16.mxu0 0
        %2504 = vmatpush1.bf16.xpose.msra.mxu0 0
        %2505 = vmatprep.subr.bf16.mxu0 0
        %2506 = vmatpush1.bf16.xpose.msra.mxu0 0
        %2507 = vmatprep.subr.bf16.mxu0 0
        %2508 = vmatpush1.bf16.xpose.msra.mxu0 0
        %2509 = vmatprep.subr.bf16.mxu0 0
        %2510 = vmatpush1.bf16.xpose.msra.mxu0 0
        %2511 = vmatprep.subr.bf16.mxu0 0
        %2512 = vmatpush1.bf16.xpose.msra.mxu0 0
        %2513 = vmatprep.subr.bf16.mxu0 0
        %2514 = vmatpush1.bf16.xpose.msra.mxu0 0
        %2515 = vmatprep.subr.bf16.mxu0 0
        %2516 = vmatpush1.bf16.xpose.msra.mxu0 0
        %2517 = vmatprep.subr.bf16.mxu0 0
        %2518 = vmatpush1.bf16.xpose.msra.mxu0 0
        %2519 = vmatprep.subr.bf16.mxu0 0
        %2520 = vmatpush1.bf16.xpose.msra.mxu0 0
        %2521 = vmatprep.mubr.bf16.mxu0 0
        %2522 = vmatmul.mubr.bf16.gmra.mrb[0].mxu0 %v2484
        %v2523 = vpop.f32.mrb[0].mxu0
        %v2524 = vadd.f32 0.0, %v2523
        %v2525 = vpop.f32.mrb[0].mxu0
        %v2526 = vpop.f32.mrb[0].mxu0
        %v2527 = vpop.f32.mrb[0].mxu0
        %2528 = vdwg.mxu0
        %v2530 = vsel %vm196, %v2031, 0
        %v2533 = vsel %vm196, %v2063, 0
        %2535 = vmatprep.subr.bf16.mxu0 0
        %2536 = vmatpush1.bf16.xpose.msra.mxu0 %v2533
        %2537 = vmatprep.subr.bf16.mxu0 0
        %2538 = vmatpush1.bf16.xpose.msra.mxu0 0
        %2539 = vmatprep.subr.bf16.mxu0 0
        %2540 = vmatpush1.bf16.xpose.msra.mxu0 0
        %2541 = vmatprep.subr.bf16.mxu0 0
        %2542 = vmatpush1.bf16.xpose.msra.mxu0 0
        %2543 = vmatprep.subr.bf16.mxu0 0
        %2544 = vmatpush1.bf16.xpose.msra.mxu0 0
        %2545 = vmatprep.subr.bf16.mxu0 0
        %2546 = vmatpush1.bf16.xpose.msra.mxu0 0
        %2547 = vmatprep.subr.bf16.mxu0 0
        %2548 = vmatpush1.bf16.xpose.msra.mxu0 0
        %2549 = vmatprep.subr.bf16.mxu0 0
        %2550 = vmatpush1.bf16.xpose.msra.mxu0 0
        %2551 = vmatprep.subr.bf16.mxu0 0
        %2552 = vmatpush1.bf16.xpose.msra.mxu0 0
        %2553 = vmatprep.subr.bf16.mxu0 0
        %2554 = vmatpush1.bf16.xpose.msra.mxu0 0
        %2555 = vmatprep.subr.bf16.mxu0 0
        %2556 = vmatpush1.bf16.xpose.msra.mxu0 0
        %2557 = vmatprep.subr.bf16.mxu0 0
        %2558 = vmatpush1.bf16.xpose.msra.mxu0 0
        %2559 = vmatprep.subr.bf16.mxu0 0
        %2560 = vmatpush1.bf16.xpose.msra.mxu0 0
        %2561 = vmatprep.subr.bf16.mxu0 0
        %2562 = vmatpush1.bf16.xpose.msra.mxu0 0
        %2563 = vmatprep.subr.bf16.mxu0 0
        %2564 = vmatpush1.bf16.xpose.msra.mxu0 0
        %2565 = vmatprep.subr.bf16.mxu0 0
        %2566 = vmatpush1.bf16.xpose.msra.mxu0 0
        %2567 = vmatprep.mubr.bf16.mxu0 0
        %2568 = vmatmul.mubr.bf16.gmra.mrb[0].mxu0 %v2530
        %v2569 = vpop.f32.mrb[0].mxu0
        %v2570 = vadd.f32 0.0, %v2569
        %v2571 = vpop.f32.mrb[0].mxu0
        %v2572 = vpop.f32.mrb[0].mxu0
        %v2573 = vpop.f32.mrb[0].mxu0
        %2574 = vdwg.mxu0
        %v2576 = vsel %vm196, %v2032, 0
        %v2579 = vsel %vm196, %v2064, 0
        %2581 = vmatprep.subr.bf16.mxu0 0
        %2582 = vmatpush1.bf16.xpose.msra.mxu0 %v2579
        %2583 = vmatprep.subr.bf16.mxu0 0
        %2584 = vmatpush1.bf16.xpose.msra.mxu0 0
        %2585 = vmatprep.subr.bf16.mxu0 0
        %2586 = vmatpush1.bf16.xpose.msra.mxu0 0
        %2587 = vmatprep.subr.bf16.mxu0 0
        %2588 = vmatpush1.bf16.xpose.msra.mxu0 0
        %2589 = vmatprep.subr.bf16.mxu0 0
        %2590 = vmatpush1.bf16.xpose.msra.mxu0 0
        %2591 = vmatprep.subr.bf16.mxu0 0
        %2592 = vmatpush1.bf16.xpose.msra.mxu0 0
        %2593 = vmatprep.subr.bf16.mxu0 0
        %2594 = vmatpush1.bf16.xpose.msra.mxu0 0
        %2595 = vmatprep.subr.bf16.mxu0 0
        %2596 = vmatpush1.bf16.xpose.msra.mxu0 0
        %2597 = vmatprep.subr.bf16.mxu0 0
        %2598 = vmatpush1.bf16.xpose.msra.mxu0 0
        %2599 = vmatprep.subr.bf16.mxu0 0
        %2600 = vmatpush1.bf16.xpose.msra.mxu0 0
        %2601 = vmatprep.subr.bf16.mxu0 0
        %2602 = vmatpush1.bf16.xpose.msra.mxu0 0
        %2603 = vmatprep.subr.bf16.mxu0 0
        %2604 = vmatpush1.bf16.xpose.msra.mxu0 0
        %2605 = vmatprep.subr.bf16.mxu0 0
        %2606 = vmatpush1.bf16.xpose.msra.mxu0 0
        %2607 = vmatprep.subr.bf16.mxu0 0
        %2608 = vmatpush1.bf16.xpose.msra.mxu0 0
        %2609 = vmatprep.subr.bf16.mxu0 0
        %2610 = vmatpush1.bf16.xpose.msra.mxu0 0
        %2611 = vmatprep.subr.bf16.mxu0 0
        %2612 = vmatpush1.bf16.xpose.msra.mxu0 0
        %2613 = vmatprep.mubr.bf16.mxu0 0
        %2614 = vmatmul.mubr.bf16.gmra.mrb[0].mxu0 %v2576
        %v2615 = vpop.f32.mrb[0].mxu0
        %v2616 = vadd.f32 0.0, %v2615
        %v2617 = vpop.f32.mrb[0].mxu0
        %v2618 = vpop.f32.mrb[0].mxu0
        %v2619 = vpop.f32.mrb[0].mxu0
        %2620 = vdwg.mxu0
        %v2622 = vsel %vm196, %v2033, 0
        %v2625 = vsel %vm196, %v2065, 0
        %2627 = vmatprep.subr.bf16.mxu0 0
        %2628 = vmatpush1.bf16.xpose.msra.mxu0 %v2625
        %2629 = vmatprep.subr.bf16.mxu0 0
        %2630 = vmatpush1.bf16.xpose.msra.mxu0 0
        %2631 = vmatprep.subr.bf16.mxu0 0
        %2632 = vmatpush1.bf16.xpose.msra.mxu0 0
        %2633 = vmatprep.subr.bf16.mxu0 0
        %2634 = vmatpush1.bf16.xpose.msra.mxu0 0
        %2635 = vmatprep.subr.bf16.mxu0 0
        %2636 = vmatpush1.bf16.xpose.msra.mxu0 0
        %2637 = vmatprep.subr.bf16.mxu0 0
        %2638 = vmatpush1.bf16.xpose.msra.mxu0 0
        %2639 = vmatprep.subr.bf16.mxu0 0
        %2640 = vmatpush1.bf16.xpose.msra.mxu0 0
        %2641 = vmatprep.subr.bf16.mxu0 0
        %2642 = vmatpush1.bf16.xpose.msra.mxu0 0
        %2643 = vmatprep.subr.bf16.mxu0 0
        %2644 = vmatpush1.bf16.xpose.msra.mxu0 0
        %2645 = vmatprep.subr.bf16.mxu0 0
        %2646 = vmatpush1.bf16.xpose.msra.mxu0 0
        %2647 = vmatprep.subr.bf16.mxu0 0
        %2648 = vmatpush1.bf16.xpose.msra.mxu0 0
        %2649 = vmatprep.subr.bf16.mxu0 0
        %2650 = vmatpush1.bf16.xpose.msra.mxu0 0
        %2651 = vmatprep.subr.bf16.mxu0 0
        %2652 = vmatpush1.bf16.xpose.msra.mxu0 0
        %2653 = vmatprep.subr.bf16.mxu0 0
        %2654 = vmatpush1.bf16.xpose.msra.mxu0 0
        %2655 = vmatprep.subr.bf16.mxu0 0
        %2656 = vmatpush1.bf16.xpose.msra.mxu0 0
        %2657 = vmatprep.subr.bf16.mxu0 0
        %2658 = vmatpush1.bf16.xpose.msra.mxu0 0
        %2659 = vmatprep.mubr.bf16.mxu0 0
        %2660 = vmatmul.mubr.bf16.gmra.mrb[0].mxu0 %v2622
        %v2661 = vpop.f32.mrb[0].mxu0
        %v2662 = vadd.f32 0.0, %v2661
        %v2663 = vpop.f32.mrb[0].mxu0
        %v2664 = vpop.f32.mrb[0].mxu0
        %v2665 = vpop.f32.mrb[0].mxu0
        %2666 = vdwg.mxu0
        %v2668 = vsel %vm196, %v2034, 0
        %v2671 = vsel %vm196, %v2066, 0
        %2673 = vmatprep.subr.bf16.mxu0 0
        %2674 = vmatpush1.bf16.xpose.msra.mxu0 %v2671
        %2675 = vmatprep.subr.bf16.mxu0 0
        %2676 = vmatpush1.bf16.xpose.msra.mxu0 0
        %2677 = vmatprep.subr.bf16.mxu0 0
        %2678 = vmatpush1.bf16.xpose.msra.mxu0 0
        %2679 = vmatprep.subr.bf16.mxu0 0
        %2680 = vmatpush1.bf16.xpose.msra.mxu0 0
        %2681 = vmatprep.subr.bf16.mxu0 0
        %2682 = vmatpush1.bf16.xpose.msra.mxu0 0
        %2683 = vmatprep.subr.bf16.mxu0 0
        %2684 = vmatpush1.bf16.xpose.msra.mxu0 0
        %2685 = vmatprep.subr.bf16.mxu0 0
        %2686 = vmatpush1.bf16.xpose.msra.mxu0 0
        %2687 = vmatprep.subr.bf16.mxu0 0
        %2688 = vmatpush1.bf16.xpose.msra.mxu0 0
        %2689 = vmatprep.subr.bf16.mxu0 0
        %2690 = vmatpush1.bf16.xpose.msra.mxu0 0
        %2691 = vmatprep.subr.bf16.mxu0 0
        %2692 = vmatpush1.bf16.xpose.msra.mxu0 0
        %2693 = vmatprep.subr.bf16.mxu0 0
        %2694 = vmatpush1.bf16.xpose.msra.mxu0 0
        %2695 = vmatprep.subr.bf16.mxu0 0
        %2696 = vmatpush1.bf16.xpose.msra.mxu0 0
        %2697 = vmatprep.subr.bf16.mxu0 0
        %2698 = vmatpush1.bf16.xpose.msra.mxu0 0
        %2699 = vmatprep.subr.bf16.mxu0 0
        %2700 = vmatpush1.bf16.xpose.msra.mxu0 0
        %2701 = vmatprep.subr.bf16.mxu0 0
        %2702 = vmatpush1.bf16.xpose.msra.mxu0 0
        %2703 = vmatprep.subr.bf16.mxu0 0
        %2704 = vmatpush1.bf16.xpose.msra.mxu0 0
        %2705 = vmatprep.mubr.bf16.mxu0 0
        %2706 = vmatmul.mubr.bf16.gmra.mrb[0].mxu0 %v2668
        %v2707 = vpop.f32.mrb[0].mxu0
        %v2708 = vadd.f32 0.0, %v2707
        %v2709 = vpop.f32.mrb[0].mxu0
        %v2710 = vpop.f32.mrb[0].mxu0
        %v2711 = vpop.f32.mrb[0].mxu0
        %2712 = vdwg.mxu0
        %v2714 = vsel %vm196, %v2035, 0
        %v2717 = vsel %vm196, %v2067, 0
        %2719 = vmatprep.subr.bf16.mxu0 0
        %2720 = vmatpush1.bf16.xpose.msra.mxu0 %v2717
        %2721 = vmatprep.subr.bf16.mxu0 0
        %2722 = vmatpush1.bf16.xpose.msra.mxu0 0
        %2723 = vmatprep.subr.bf16.mxu0 0
        %2724 = vmatpush1.bf16.xpose.msra.mxu0 0
        %2725 = vmatprep.subr.bf16.mxu0 0
        %2726 = vmatpush1.bf16.xpose.msra.mxu0 0
        %2727 = vmatprep.subr.bf16.mxu0 0
        %2728 = vmatpush1.bf16.xpose.msra.mxu0 0
        %2729 = vmatprep.subr.bf16.mxu0 0
        %2730 = vmatpush1.bf16.xpose.msra.mxu0 0
        %2731 = vmatprep.subr.bf16.mxu0 0
        %2732 = vmatpush1.bf16.xpose.msra.mxu0 0
        %2733 = vmatprep.subr.bf16.mxu0 0
        %2734 = vmatpush1.bf16.xpose.msra.mxu0 0
        %2735 = vmatprep.subr.bf16.mxu0 0
        %2736 = vmatpush1.bf16.xpose.msra.mxu0 0
        %2737 = vmatprep.subr.bf16.mxu0 0
        %2738 = vmatpush1.bf16.xpose.msra.mxu0 0
        %2739 = vmatprep.subr.bf16.mxu0 0
        %2740 = vmatpush1.bf16.xpose.msra.mxu0 0
        %2741 = vmatprep.subr.bf16.mxu0 0
        %2742 = vmatpush1.bf16.xpose.msra.mxu0 0
        %2743 = vmatprep.subr.bf16.mxu0 0
        %2744 = vmatpush1.bf16.xpose.msra.mxu0 0
        %2745 = vmatprep.subr.bf16.mxu0 0
        %2746 = vmatpush1.bf16.xpose.msra.mxu0 0
        %2747 = vmatprep.subr.bf16.mxu0 0
        %2748 = vmatpush1.bf16.xpose.msra.mxu0 0
        %2749 = vmatprep.subr.bf16.mxu0 0
        %2750 = vmatpush1.bf16.xpose.msra.mxu0 0
        %2751 = vmatprep.mubr.bf16.mxu0 0
        %2752 = vmatmul.mubr.bf16.gmra.mrb[0].mxu0 %v2714
        %v2753 = vpop.f32.mrb[0].mxu0
        %v2754 = vadd.f32 0.0, %v2753
        %v2755 = vpop.f32.mrb[0].mxu0
        %v2756 = vpop.f32.mrb[0].mxu0
        %v2757 = vpop.f32.mrb[0].mxu0
        %2758 = vdwg.mxu0
        %v2760 = vsel %vm196, %v2036, 0
        %v2763 = vsel %vm196, %v2068, 0
        %2765 = vmatprep.subr.bf16.mxu0 0
        %2766 = vmatpush1.bf16.xpose.msra.mxu0 %v2763
        %2767 = vmatprep.subr.bf16.mxu0 0
        %2768 = vmatpush1.bf16.xpose.msra.mxu0 0
        %2769 = vmatprep.subr.bf16.mxu0 0
        %2770 = vmatpush1.bf16.xpose.msra.mxu0 0
        %2771 = vmatprep.subr.bf16.mxu0 0
        %2772 = vmatpush1.bf16.xpose.msra.mxu0 0
        %2773 = vmatprep.subr.bf16.mxu0 0
        %2774 = vmatpush1.bf16.xpose.msra.mxu0 0
        %2775 = vmatprep.subr.bf16.mxu0 0
        %2776 = vmatpush1.bf16.xpose.msra.mxu0 0
        %2777 = vmatprep.subr.bf16.mxu0 0
        %2778 = vmatpush1.bf16.xpose.msra.mxu0 0
        %2779 = vmatprep.subr.bf16.mxu0 0
        %2780 = vmatpush1.bf16.xpose.msra.mxu0 0
        %2781 = vmatprep.subr.bf16.mxu0 0
        %2782 = vmatpush1.bf16.xpose.msra.mxu0 0
        %2783 = vmatprep.subr.bf16.mxu0 0
        %2784 = vmatpush1.bf16.xpose.msra.mxu0 0
        %2785 = vmatprep.subr.bf16.mxu0 0
        %2786 = vmatpush1.bf16.xpose.msra.mxu0 0
        %2787 = vmatprep.subr.bf16.mxu0 0
        %2788 = vmatpush1.bf16.xpose.msra.mxu0 0
        %2789 = vmatprep.subr.bf16.mxu0 0
        %2790 = vmatpush1.bf16.xpose.msra.mxu0 0
        %2791 = vmatprep.subr.bf16.mxu0 0
        %2792 = vmatpush1.bf16.xpose.msra.mxu0 0
        %2793 = vmatprep.subr.bf16.mxu0 0
        %2794 = vmatpush1.bf16.xpose.msra.mxu0 0
        %2795 = vmatprep.subr.bf16.mxu0 0
        %2796 = vmatpush1.bf16.xpose.msra.mxu0 0
        %2797 = vmatprep.mubr.bf16.mxu0 0
        %2798 = vmatmul.mubr.bf16.gmra.mrb[0].mxu0 %v2760
        %v2799 = vpop.f32.mrb[0].mxu0
        %v2800 = vadd.f32 0.0, %v2799
        %v2801 = vpop.f32.mrb[0].mxu0
        %v2802 = vpop.f32.mrb[0].mxu0
        %v2803 = vpop.f32.mrb[0].mxu0
        %2804 = vdwg.mxu0
        %v2805 = vadd.f32 %v1294, %v2110
        %v2806 = vadd.f32 %v1340, %v2156
        %v2807 = vadd.f32 %v1386, %v2202
        %v2808 = vadd.f32 %v1432, %v2248
        %v2809 = vadd.f32 %v1478, %v2294
        %v2810 = vadd.f32 %v1524, %v2340
        %v2811 = vadd.f32 %v1570, %v2386
        %v2812 = vadd.f32 %v1616, %v2432
        %v2813 = vadd.f32 %v1662, %v2478
        %v2814 = vadd.f32 %v1708, %v2524
        %v2815 = vadd.f32 %v1754, %v2570
        %v2816 = vadd.f32 %v1800, %v2616
        %v2817 = vadd.f32 %v1846, %v2662
        %v2818 = vadd.f32 %v1892, %v2708
        %v2819 = vadd.f32 %v1938, %v2754
        %v2820 = vadd.f32 %v1984, %v2800
        %vm2821 = vcmp.gt.f32.partialorder %v2805, 0.0
        %vm2822 = vcmp.gt.f32.partialorder %v2806, 0.0
        %vm2823 = vcmp.gt.f32.partialorder %v2807, 0.0
        %vm2824 = vcmp.gt.f32.partialorder %v2808, 0.0
        %vm2825 = vcmp.gt.f32.partialorder %v2809, 0.0
        %vm2826 = vcmp.gt.f32.partialorder %v2810, 0.0
        %vm2827 = vcmp.gt.f32.partialorder %v2811, 0.0
        %vm2828 = vcmp.gt.f32.partialorder %v2812, 0.0
        %vm2829 = vcmp.gt.f32.partialorder %v2813, 0.0
        %vm2830 = vcmp.gt.f32.partialorder %v2814, 0.0
        %vm2831 = vcmp.gt.f32.partialorder %v2815, 0.0
        %vm2832 = vcmp.gt.f32.partialorder %v2816, 0.0
        %vm2833 = vcmp.gt.f32.partialorder %v2817, 0.0
        %vm2834 = vcmp.gt.f32.partialorder %v2818, 0.0
        %vm2835 = vcmp.gt.f32.partialorder %v2819, 0.0
        %vm2836 = vcmp.gt.f32.partialorder %v2820, 0.0
        %v2837 = vsel %vm2821, 1.0, 0.0
        %v2838 = vsel %vm2822, 1.0, 0.0
        %v2839 = vsel %vm2823, 1.0, 0.0
        %v2840 = vsel %vm2824, 1.0, 0.0
        %v2841 = vsel %vm2825, 1.0, 0.0
        %v2842 = vsel %vm2826, 1.0, 0.0
        %v2843 = vsel %vm2827, 1.0, 0.0
        %v2844 = vsel %vm2828, 1.0, 0.0
        %v2845 = vsel %vm2829, 1.0, 0.0
        %v2846 = vsel %vm2830, 1.0, 0.0
        %v2847 = vsel %vm2831, 1.0, 0.0
        %v2848 = vsel %vm2832, 1.0, 0.0
        %v2849 = vsel %vm2833, 1.0, 0.0
        %v2850 = vsel %vm2834, 1.0, 0.0
        %v2851 = vsel %vm2835, 1.0, 0.0
        %v2852 = vsel %vm2836, 1.0, 0.0
        %vm2853 = vcmask 64512
        %v2854 = vsel %vm2853, %v2805, -inf
        %2855 = vmax.xlane.f32.xlu0 %v2854
        %v2856 = vpop.xlane.xlu0 %2855
        %v2857 = vsel %vm2853, %v2806, -inf
        %2858 = vmax.xlane.f32.xlu0 %v2857
        %v2859 = vpop.xlane.xlu0 %2858
        %v2860 = vsel %vm2853, %v2807, -inf
        %2861 = vmax.xlane.f32.xlu0 %v2860
        %v2862 = vpop.xlane.xlu0 %2861
        %v2863 = vsel %vm2853, %v2808, -inf
        %2864 = vmax.xlane.f32.xlu0 %v2863
        %v2865 = vpop.xlane.xlu0 %2864
        %v2866 = vsel %vm2853, %v2809, -inf
        %2867 = vmax.xlane.f32.xlu0 %v2866
        %v2868 = vpop.xlane.xlu0 %2867
        %v2869 = vsel %vm2853, %v2810, -inf
        %2870 = vmax.xlane.f32.xlu0 %v2869
        %v2871 = vpop.xlane.xlu0 %2870
        %v2872 = vsel %vm2853, %v2811, -inf
        %2873 = vmax.xlane.f32.xlu0 %v2872
        %v2874 = vpop.xlane.xlu0 %2873
        %v2875 = vsel %vm2853, %v2812, -inf
        %2876 = vmax.xlane.f32.xlu0 %v2875
        %v2877 = vpop.xlane.xlu0 %2876
        %v2878 = vsel %vm2853, %v2813, -inf
        %2879 = vmax.xlane.f32.xlu0 %v2878
        %v2880 = vpop.xlane.xlu0 %2879
        %v2881 = vsel %vm2853, %v2814, -inf
        %2882 = vmax.xlane.f32.xlu0 %v2881
        %v2883 = vpop.xlane.xlu0 %2882
        %v2884 = vsel %vm2853, %v2815, -inf
        %2885 = vmax.xlane.f32.xlu0 %v2884
        %v2886 = vpop.xlane.xlu0 %2885
        %v2887 = vsel %vm2853, %v2816, -inf
        %2888 = vmax.xlane.f32.xlu0 %v2887
        %v2889 = vpop.xlane.xlu0 %2888
        %v2890 = vsel %vm2853, %v2817, -inf
        %2891 = vmax.xlane.f32.xlu0 %v2890
        %v2892 = vpop.xlane.xlu0 %2891
        %v2893 = vsel %vm2853, %v2818, -inf
        %2894 = vmax.xlane.f32.xlu0 %v2893
        %v2895 = vpop.xlane.xlu0 %2894
        %v2896 = vsel %vm2853, %v2819, -inf
        %2897 = vmax.xlane.f32.xlu0 %v2896
        %v2898 = vpop.xlane.xlu0 %2897
        %v2899 = vsel %vm2853, %v2820, -inf
        %2900 = vmax.xlane.f32.xlu0 %v2899
        %v2901 = vpop.xlane.xlu0 %2900
        %v2902 = vrot.slane %v2856, 4
        %v2903 = vmax.f32 %v2856, %v2902
        %v2904 = vrot.slane %v2903, 2
        %v2905 = vmax.f32 %v2903, %v2904
        %v2906 = vrot.slane %v2905, 1
        %v2907 = vmax.f32 %v2905, %v2906
        %v2908 = vrot.slane %v2859, 4
        %v2909 = vmax.f32 %v2859, %v2908
        %v2910 = vrot.slane %v2909, 2
        %v2911 = vmax.f32 %v2909, %v2910
        %v2912 = vrot.slane %v2911, 1
        %v2913 = vmax.f32 %v2911, %v2912
        %v2914 = vrot.slane %v2862, 4
        %v2915 = vmax.f32 %v2862, %v2914
        %v2916 = vrot.slane %v2915, 2
        %v2917 = vmax.f32 %v2915, %v2916
        %v2918 = vrot.slane %v2917, 1
        %v2919 = vmax.f32 %v2917, %v2918
        %v2920 = vrot.slane %v2865, 4
        %v2921 = vmax.f32 %v2865, %v2920
        %v2922 = vrot.slane %v2921, 2
        %v2923 = vmax.f32 %v2921, %v2922
        %v2924 = vrot.slane %v2923, 1
        %v2925 = vmax.f32 %v2923, %v2924
        %v2926 = vrot.slane %v2868, 4
        %v2927 = vmax.f32 %v2868, %v2926
        %v2928 = vrot.slane %v2927, 2
        %v2929 = vmax.f32 %v2927, %v2928
        %v2930 = vrot.slane %v2929, 1
        %v2931 = vmax.f32 %v2929, %v2930
        %v2932 = vrot.slane %v2871, 4
        %v2933 = vmax.f32 %v2871, %v2932
        %v2934 = vrot.slane %v2933, 2
        %v2935 = vmax.f32 %v2933, %v2934
        %v2936 = vrot.slane %v2935, 1
        %v2937 = vmax.f32 %v2935, %v2936
        %v2938 = vrot.slane %v2874, 4
        %v2939 = vmax.f32 %v2874, %v2938
        %v2940 = vrot.slane %v2939, 2
        %v2941 = vmax.f32 %v2939, %v2940
        %v2942 = vrot.slane %v2941, 1
        %v2943 = vmax.f32 %v2941, %v2942
        %v2944 = vrot.slane %v2877, 4
        %v2945 = vmax.f32 %v2877, %v2944
        %v2946 = vrot.slane %v2945, 2
        %v2947 = vmax.f32 %v2945, %v2946
        %v2948 = vrot.slane %v2947, 1
        %v2949 = vmax.f32 %v2947, %v2948
        %v2950 = vrot.slane %v2880, 4
        %v2951 = vmax.f32 %v2880, %v2950
        %v2952 = vrot.slane %v2951, 2
        %v2953 = vmax.f32 %v2951, %v2952
        %v2954 = vrot.slane %v2953, 1
        %v2955 = vmax.f32 %v2953, %v2954
        %v2956 = vrot.slane %v2883, 4
        %v2957 = vmax.f32 %v2883, %v2956
        %v2958 = vrot.slane %v2957, 2
        %v2959 = vmax.f32 %v2957, %v2958
        %v2960 = vrot.slane %v2959, 1
        %v2961 = vmax.f32 %v2959, %v2960
        %v2962 = vrot.slane %v2886, 4
        %v2963 = vmax.f32 %v2886, %v2962
        %v2964 = vrot.slane %v2963, 2
        %v2965 = vmax.f32 %v2963, %v2964
        %v2966 = vrot.slane %v2965, 1
        %v2967 = vmax.f32 %v2965, %v2966
        %v2968 = vrot.slane %v2889, 4
        %v2969 = vmax.f32 %v2889, %v2968
        %v2970 = vrot.slane %v2969, 2
        %v2971 = vmax.f32 %v2969, %v2970
        %v2972 = vrot.slane %v2971, 1
        %v2973 = vmax.f32 %v2971, %v2972
        %v2974 = vrot.slane %v2892, 4
        %v2975 = vmax.f32 %v2892, %v2974
        %v2976 = vrot.slane %v2975, 2
        %v2977 = vmax.f32 %v2975, %v2976
        %v2978 = vrot.slane %v2977, 1
        %v2979 = vmax.f32 %v2977, %v2978
        %v2980 = vrot.slane %v2895, 4
        %v2981 = vmax.f32 %v2895, %v2980
        %v2982 = vrot.slane %v2981, 2
        %v2983 = vmax.f32 %v2981, %v2982
        %v2984 = vrot.slane %v2983, 1
        %v2985 = vmax.f32 %v2983, %v2984
        %v2986 = vrot.slane %v2898, 4
        %v2987 = vmax.f32 %v2898, %v2986
        %v2988 = vrot.slane %v2987, 2
        %v2989 = vmax.f32 %v2987, %v2988
        %v2990 = vrot.slane %v2989, 1
        %v2991 = vmax.f32 %v2989, %v2990
        %v2992 = vrot.slane %v2901, 4
        %v2993 = vmax.f32 %v2901, %v2992
        %v2994 = vrot.slane %v2993, 2
        %v2995 = vmax.f32 %v2993, %v2994
        %v2996 = vrot.slane %v2995, 1
        %v2997 = vmax.f32 %v2995, %v2996
        %v2998 = vadd.f32 %v2907, 1.0
        %v2999 = vadd.f32 %v2913, 1.0
        %v3000 = vadd.f32 %v2919, 1.0
        %v3001 = vadd.f32 %v2925, 1.0
        %v3002 = vadd.f32 %v2931, 1.0
        %v3003 = vadd.f32 %v2937, 1.0
        %v3004 = vadd.f32 %v2943, 1.0
        %v3005 = vadd.f32 %v2949, 1.0
        %v3006 = vadd.f32 %v2955, 1.0
        %v3007 = vadd.f32 %v2961, 1.0
        %v3008 = vadd.f32 %v2967, 1.0
        %v3009 = vadd.f32 %v2973, 1.0
        %v3010 = vadd.f32 %v2979, 1.0
        %v3011 = vadd.f32 %v2985, 1.0
        %v3012 = vadd.f32 %v2991, 1.0
        %v3013 = vadd.f32 %v2997, 1.0
        %v3014 = vlog2.pop %v2998
        %v3015 = vmul.f32 %v3014, 0.6931472
        %v3016 = vlog2.pop %v2999
        %v3017 = vmul.f32 %v3016, 0.6931472
        %v3018 = vlog2.pop %v3000
        %v3019 = vmul.f32 %v3018, 0.6931472
        %v3020 = vlog2.pop %v3001
        %v3021 = vmul.f32 %v3020, 0.6931472
        %v3022 = vlog2.pop %v3002
        %v3023 = vmul.f32 %v3022, 0.6931472
        %v3024 = vlog2.pop %v3003
        %v3025 = vmul.f32 %v3024, 0.6931472
        %v3026 = vlog2.pop %v3004
        %v3027 = vmul.f32 %v3026, 0.6931472
        %v3028 = vlog2.pop %v3005
        %v3029 = vmul.f32 %v3028, 0.6931472
        %v3030 = vlog2.pop %v3006
        %v3031 = vmul.f32 %v3030, 0.6931472
        %v3032 = vlog2.pop %v3007
        %v3033 = vmul.f32 %v3032, 0.6931472
        %v3034 = vlog2.pop %v3008
        %v3035 = vmul.f32 %v3034, 0.6931472
        %v3036 = vlog2.pop %v3009
        %v3037 = vmul.f32 %v3036, 0.6931472
        %v3038 = vlog2.pop %v3010
        %v3039 = vmul.f32 %v3038, 0.6931472
        %v3040 = vlog2.pop %v3011
        %v3041 = vmul.f32 %v3040, 0.6931472
        %v3042 = vlog2.pop %v3012
        %v3043 = vmul.f32 %v3042, 0.6931472
        %v3044 = vlog2.pop %v3013
        %v3045 = vmul.f32 %v3044, 0.6931472
        %v3046 = vrcp.pop %v3015
        %v3047 = vrcp.pop %v3017
        %v3048 = vrcp.pop %v3019
        %v3049 = vrcp.pop %v3021
        %v3050 = vrcp.pop %v3023
        %v3051 = vrcp.pop %v3025
        %v3052 = vrcp.pop %v3027
        %v3053 = vrcp.pop %v3029
        %v3054 = vrcp.pop %v3031
        %v3055 = vrcp.pop %v3033
        %v3056 = vrcp.pop %v3035
        %v3057 = vrcp.pop %v3037
        %v3058 = vrcp.pop %v3039
        %v3059 = vrcp.pop %v3041
        %v3060 = vrcp.pop %v3043
        %v3061 = vrcp.pop %v3045
        %vm3062 = vcmp.gt.f32.partialorder %v2805, -1.0
        %vm3063 = vcmp.gt.f32.partialorder %v2806, -1.0
        %vm3064 = vcmp.gt.f32.partialorder %v2807, -1.0
        %vm3065 = vcmp.gt.f32.partialorder %v2808, -1.0
        %vm3066 = vcmp.gt.f32.partialorder %v2809, -1.0
        %vm3067 = vcmp.gt.f32.partialorder %v2810, -1.0
        %vm3068 = vcmp.gt.f32.partialorder %v2811, -1.0
        %vm3069 = vcmp.gt.f32.partialorder %v2812, -1.0
        %vm3070 = vcmp.gt.f32.partialorder %v2813, -1.0
        %vm3071 = vcmp.gt.f32.partialorder %v2814, -1.0
        %vm3072 = vcmp.gt.f32.partialorder %v2815, -1.0
        %vm3073 = vcmp.gt.f32.partialorder %v2816, -1.0
        %vm3074 = vcmp.gt.f32.partialorder %v2817, -1.0
        %vm3075 = vcmp.gt.f32.partialorder %v2818, -1.0
        %vm3076 = vcmp.gt.f32.partialorder %v2819, -1.0
        %vm3077 = vcmp.gt.f32.partialorder %v2820, -1.0
        %v3078 = vadd.f32 %v2805, 1.0
        %v3079 = vadd.f32 %v2806, 1.0
        %v3080 = vadd.f32 %v2807, 1.0
        %v3081 = vadd.f32 %v2808, 1.0
        %v3082 = vadd.f32 %v2809, 1.0
        %v3083 = vadd.f32 %v2810, 1.0
        %v3084 = vadd.f32 %v2811, 1.0
        %v3085 = vadd.f32 %v2812, 1.0
        %v3086 = vadd.f32 %v2813, 1.0
        %v3087 = vadd.f32 %v2814, 1.0
        %v3088 = vadd.f32 %v2815, 1.0
        %v3089 = vadd.f32 %v2816, 1.0
        %v3090 = vadd.f32 %v2817, 1.0
        %v3091 = vadd.f32 %v2818, 1.0
        %v3092 = vadd.f32 %v2819, 1.0
        %v3093 = vadd.f32 %v2820, 1.0
        %v3094 = vlog2.pop %v3078
        %v3095 = vmul.f32 %v3094, 0.6931472
        %v3096 = vlog2.pop %v3079
        %v3097 = vmul.f32 %v3096, 0.6931472
        %v3098 = vlog2.pop %v3080
        %v3099 = vmul.f32 %v3098, 0.6931472
        %v3100 = vlog2.pop %v3081
        %v3101 = vmul.f32 %v3100, 0.6931472
        %v3102 = vlog2.pop %v3082
        %v3103 = vmul.f32 %v3102, 0.6931472
        %v3104 = vlog2.pop %v3083
        %v3105 = vmul.f32 %v3104, 0.6931472
        %v3106 = vlog2.pop %v3084
        %v3107 = vmul.f32 %v3106, 0.6931472
        %v3108 = vlog2.pop %v3085
        %v3109 = vmul.f32 %v3108, 0.6931472
        %v3110 = vlog2.pop %v3086
        %v3111 = vmul.f32 %v3110, 0.6931472
        %v3112 = vlog2.pop %v3087
        %v3113 = vmul.f32 %v3112, 0.6931472
        %v3114 = vlog2.pop %v3088
        %v3115 = vmul.f32 %v3114, 0.6931472
        %v3116 = vlog2.pop %v3089
        %v3117 = vmul.f32 %v3116, 0.6931472
        %v3118 = vlog2.pop %v3090
        %v3119 = vmul.f32 %v3118, 0.6931472
        %v3120 = vlog2.pop %v3091
        %v3121 = vmul.f32 %v3120, 0.6931472
        %v3122 = vlog2.pop %v3092
        %v3123 = vmul.f32 %v3122, 0.6931472
        %v3124 = vlog2.pop %v3093
        %v3125 = vmul.f32 %v3124, 0.6931472
        %v3126 = vmul.f32 %v3095, %v3046
        %v3127 = vmul.f32 %v3097, %v3047
        %v3128 = vmul.f32 %v3099, %v3048
        %v3129 = vmul.f32 %v3101, %v3049
        %v3130 = vmul.f32 %v3103, %v3050
        %v3131 = vmul.f32 %v3105, %v3051
        %v3132 = vmul.f32 %v3107, %v3052
        %v3133 = vmul.f32 %v3109, %v3053
        %v3134 = vmul.f32 %v3111, %v3054
        %v3135 = vmul.f32 %v3113, %v3055
        %v3136 = vmul.f32 %v3115, %v3056
        %v3137 = vmul.f32 %v3117, %v3057
        %v3138 = vmul.f32 %v3119, %v3058
        %v3139 = vmul.f32 %v3121, %v3059
        %v3140 = vmul.f32 %v3123, %v3060
        %v3141 = vmul.f32 %v3125, %v3061
        %v3142 = vsel %vm3062, %v3126, 0.0
        %v3143 = vsel %vm3063, %v3127, 0.0
        %v3144 = vsel %vm3064, %v3128, 0.0
        %v3145 = vsel %vm3065, %v3129, 0.0
        %v3146 = vsel %vm3066, %v3130, 0.0
        %v3147 = vsel %vm3067, %v3131, 0.0
        %v3148 = vsel %vm3068, %v3132, 0.0
        %v3149 = vsel %vm3069, %v3133, 0.0
        %v3150 = vsel %vm3070, %v3134, 0.0
        %v3151 = vsel %vm3071, %v3135, 0.0
        %v3152 = vsel %vm3072, %v3136, 0.0
        %v3153 = vsel %vm3073, %v3137, 0.0
        %v3154 = vsel %vm3074, %v3138, 0.0
        %v3155 = vsel %vm3075, %v3139, 0.0
        %v3156 = vsel %vm3076, %v3140, 0.0
        %v3157 = vsel %vm3077, %v3141, 0.0
        %v3158 = vmul.f32 %v2837, %v3142
        %v3159 = vmul.f32 %v2838, %v3143
        %v3160 = vmul.f32 %v2839, %v3144
        %v3161 = vmul.f32 %v2840, %v3145
        %v3162 = vmul.f32 %v2841, %v3146
        %v3163 = vmul.f32 %v2842, %v3147
        %v3164 = vmul.f32 %v2843, %v3148
        %v3165 = vmul.f32 %v2844, %v3149
        %v3166 = vmul.f32 %v2845, %v3150
        %v3167 = vmul.f32 %v2846, %v3151
        %v3168 = vmul.f32 %v2847, %v3152
        %v3169 = vmul.f32 %v2848, %v3153
        %v3170 = vmul.f32 %v2849, %v3154
        %v3171 = vmul.f32 %v2850, %v3155
        %v3172 = vmul.f32 %v2851, %v3156
        %v3173 = vmul.f32 %v2852, %v3157
        %v3174 = vpack.c.bf16 %v3158, %v3158
        %v3175 = vpack.c.bf16 %v3159, %v3159
        %v3176 = vpack.c.bf16 %v3160, %v3160
        %v3177 = vpack.c.bf16 %v3161, %v3161
        %v3178 = vpack.c.bf16 %v3162, %v3162
        %v3179 = vpack.c.bf16 %v3163, %v3163
        %v3180 = vpack.c.bf16 %v3164, %v3164
        %v3181 = vpack.c.bf16 %v3165, %v3165
        %v3182 = vpack.c.bf16 %v3166, %v3166
        %v3183 = vpack.c.bf16 %v3167, %v3167
        %v3184 = vpack.c.bf16 %v3168, %v3168
        %v3185 = vpack.c.bf16 %v3169, %v3169
        %v3186 = vpack.c.bf16 %v3170, %v3170
        %v3187 = vpack.c.bf16 %v3171, %v3171
        %v3188 = vpack.c.bf16 %v3172, %v3172
        %v3189 = vpack.c.bf16 %v3173, %v3173
        %v3191 = vsel %vm2853, %v3174, 0
        %3193 = vmatprep.subr.bf16.mxu0 0
        %3194 = vmatpush1.bf16.xpose.msra.mxu0 %v3191
        %3195 = vmatprep.subr.bf16.mxu0 0
        %3196 = vmatpush1.bf16.xpose.msra.mxu0 0
        %3197 = vmatprep.subr.bf16.mxu0 0
        %3198 = vmatpush1.bf16.xpose.msra.mxu0 0
        %3199 = vmatprep.subr.bf16.mxu0 0
        %3200 = vmatpush1.bf16.xpose.msra.mxu0 0
        %3201 = vmatprep.subr.bf16.mxu0 0
        %3202 = vmatpush1.bf16.xpose.msra.mxu0 0
        %3203 = vmatprep.subr.bf16.mxu0 0
        %3204 = vmatpush1.bf16.xpose.msra.mxu0 0
        %3205 = vmatprep.subr.bf16.mxu0 0
        %3206 = vmatpush1.bf16.xpose.msra.mxu0 0
        %3207 = vmatprep.subr.bf16.mxu0 0
        %3208 = vmatpush1.bf16.xpose.msra.mxu0 0
        %3209 = vmatprep.subr.bf16.mxu0 0
        %3210 = vmatpush1.bf16.xpose.msra.mxu0 0
        %3211 = vmatprep.subr.bf16.mxu0 0
        %3212 = vmatpush1.bf16.xpose.msra.mxu0 0
        %3213 = vmatprep.subr.bf16.mxu0 0
        %3214 = vmatpush1.bf16.xpose.msra.mxu0 0
        %3215 = vmatprep.subr.bf16.mxu0 0
        %3216 = vmatpush1.bf16.xpose.msra.mxu0 0
        %3217 = vmatprep.subr.bf16.mxu0 0
        %3218 = vmatpush1.bf16.xpose.msra.mxu0 0
        %3219 = vmatprep.subr.bf16.mxu0 0
        %3220 = vmatpush1.bf16.xpose.msra.mxu0 0
        %3221 = vmatprep.subr.bf16.mxu0 0
        %3222 = vmatpush1.bf16.xpose.msra.mxu0 0
        %3223 = vmatprep.subr.bf16.mxu0 0
        %3224 = vmatpush1.bf16.xpose.msra.mxu0 0
        %3225 = vmatprep.mubr.bf16.mxu0 0
        %3226 = vmatmul.mubr.bf16.gmra.mrb[0].mxu0 %v3191
        %v3227 = vpop.f32.mrb[0].mxu0
        %v3228 = vadd.f32 0.0, %v3227
        %v3229 = vpop.f32.mrb[0].mxu0
        %v3230 = vpop.f32.mrb[0].mxu0
        %v3231 = vpop.f32.mrb[0].mxu0
        %3232 = vdwg.mxu0
        %v3234 = vsel %vm2853, %v3175, 0
        %3236 = vmatprep.subr.bf16.mxu0 0
        %3237 = vmatpush1.bf16.xpose.msra.mxu0 %v3234
        %3238 = vmatprep.subr.bf16.mxu0 0
        %3239 = vmatpush1.bf16.xpose.msra.mxu0 0
        %3240 = vmatprep.subr.bf16.mxu0 0
        %3241 = vmatpush1.bf16.xpose.msra.mxu0 0
        %3242 = vmatprep.subr.bf16.mxu0 0
        %3243 = vmatpush1.bf16.xpose.msra.mxu0 0
        %3244 = vmatprep.subr.bf16.mxu0 0
        %3245 = vmatpush1.bf16.xpose.msra.mxu0 0
        %3246 = vmatprep.subr.bf16.mxu0 0
        %3247 = vmatpush1.bf16.xpose.msra.mxu0 0
        %3248 = vmatprep.subr.bf16.mxu0 0
        %3249 = vmatpush1.bf16.xpose.msra.mxu0 0
        %3250 = vmatprep.subr.bf16.mxu0 0
        %3251 = vmatpush1.bf16.xpose.msra.mxu0 0
        %3252 = vmatprep.subr.bf16.mxu0 0
        %3253 = vmatpush1.bf16.xpose.msra.mxu0 0
        %3254 = vmatprep.subr.bf16.mxu0 0
        %3255 = vmatpush1.bf16.xpose.msra.mxu0 0
        %3256 = vmatprep.subr.bf16.mxu0 0
        %3257 = vmatpush1.bf16.xpose.msra.mxu0 0
        %3258 = vmatprep.subr.bf16.mxu0 0
        %3259 = vmatpush1.bf16.xpose.msra.mxu0 0
        %3260 = vmatprep.subr.bf16.mxu0 0
        %3261 = vmatpush1.bf16.xpose.msra.mxu0 0
        %3262 = vmatprep.subr.bf16.mxu0 0
        %3263 = vmatpush1.bf16.xpose.msra.mxu0 0
        %3264 = vmatprep.subr.bf16.mxu0 0
        %3265 = vmatpush1.bf16.xpose.msra.mxu0 0
        %3266 = vmatprep.subr.bf16.mxu0 0
        %3267 = vmatpush1.bf16.xpose.msra.mxu0 0
        %3268 = vmatprep.mubr.bf16.mxu0 0
        %3269 = vmatmul.mubr.bf16.gmra.mrb[0].mxu0 %v3234
        %v3270 = vpop.f32.mrb[0].mxu0
        %v3271 = vadd.f32 0.0, %v3270
        %v3272 = vpop.f32.mrb[0].mxu0
        %v3273 = vpop.f32.mrb[0].mxu0
        %v3274 = vpop.f32.mrb[0].mxu0
        %3275 = vdwg.mxu0
        %v3277 = vsel %vm2853, %v3176, 0
        %3279 = vmatprep.subr.bf16.mxu0 0
        %3280 = vmatpush1.bf16.xpose.msra.mxu0 %v3277
        %3281 = vmatprep.subr.bf16.mxu0 0
        %3282 = vmatpush1.bf16.xpose.msra.mxu0 0
        %3283 = vmatprep.subr.bf16.mxu0 0
        %3284 = vmatpush1.bf16.xpose.msra.mxu0 0
        %3285 = vmatprep.subr.bf16.mxu0 0
        %3286 = vmatpush1.bf16.xpose.msra.mxu0 0
        %3287 = vmatprep.subr.bf16.mxu0 0
        %3288 = vmatpush1.bf16.xpose.msra.mxu0 0
        %3289 = vmatprep.subr.bf16.mxu0 0
        %3290 = vmatpush1.bf16.xpose.msra.mxu0 0
        %3291 = vmatprep.subr.bf16.mxu0 0
        %3292 = vmatpush1.bf16.xpose.msra.mxu0 0
        %3293 = vmatprep.subr.bf16.mxu0 0
        %3294 = vmatpush1.bf16.xpose.msra.mxu0 0
        %3295 = vmatprep.subr.bf16.mxu0 0
        %3296 = vmatpush1.bf16.xpose.msra.mxu0 0
        %3297 = vmatprep.subr.bf16.mxu0 0
        %3298 = vmatpush1.bf16.xpose.msra.mxu0 0
        %3299 = vmatprep.subr.bf16.mxu0 0
        %3300 = vmatpush1.bf16.xpose.msra.mxu0 0
        %3301 = vmatprep.subr.bf16.mxu0 0
        %3302 = vmatpush1.bf16.xpose.msra.mxu0 0
        %3303 = vmatprep.subr.bf16.mxu0 0
        %3304 = vmatpush1.bf16.xpose.msra.mxu0 0
        %3305 = vmatprep.subr.bf16.mxu0 0
        %3306 = vmatpush1.bf16.xpose.msra.mxu0 0
        %3307 = vmatprep.subr.bf16.mxu0 0
        %3308 = vmatpush1.bf16.xpose.msra.mxu0 0
        %3309 = vmatprep.subr.bf16.mxu0 0
        %3310 = vmatpush1.bf16.xpose.msra.mxu0 0
        %3311 = vmatprep.mubr.bf16.mxu0 0
        %3312 = vmatmul.mubr.bf16.gmra.mrb[0].mxu0 %v3277
        %v3313 = vpop.f32.mrb[0].mxu0
        %v3314 = vadd.f32 0.0, %v3313
        %v3315 = vpop.f32.mrb[0].mxu0
        %v3316 = vpop.f32.mrb[0].mxu0
        %v3317 = vpop.f32.mrb[0].mxu0
        %3318 = vdwg.mxu0
        %v3320 = vsel %vm2853, %v3177, 0
        %3322 = vmatprep.subr.bf16.mxu0 0
        %3323 = vmatpush1.bf16.xpose.msra.mxu0 %v3320
        %3324 = vmatprep.subr.bf16.mxu0 0
        %3325 = vmatpush1.bf16.xpose.msra.mxu0 0
        %3326 = vmatprep.subr.bf16.mxu0 0
        %3327 = vmatpush1.bf16.xpose.msra.mxu0 0
        %3328 = vmatprep.subr.bf16.mxu0 0
        %3329 = vmatpush1.bf16.xpose.msra.mxu0 0
        %3330 = vmatprep.subr.bf16.mxu0 0
        %3331 = vmatpush1.bf16.xpose.msra.mxu0 0
        %3332 = vmatprep.subr.bf16.mxu0 0
        %3333 = vmatpush1.bf16.xpose.msra.mxu0 0
        %3334 = vmatprep.subr.bf16.mxu0 0
        %3335 = vmatpush1.bf16.xpose.msra.mxu0 0
        %3336 = vmatprep.subr.bf16.mxu0 0
        %3337 = vmatpush1.bf16.xpose.msra.mxu0 0
        %3338 = vmatprep.subr.bf16.mxu0 0
        %3339 = vmatpush1.bf16.xpose.msra.mxu0 0
        %3340 = vmatprep.subr.bf16.mxu0 0
        %3341 = vmatpush1.bf16.xpose.msra.mxu0 0
        %3342 = vmatprep.subr.bf16.mxu0 0
        %3343 = vmatpush1.bf16.xpose.msra.mxu0 0
        %3344 = vmatprep.subr.bf16.mxu0 0
        %3345 = vmatpush1.bf16.xpose.msra.mxu0 0
        %3346 = vmatprep.subr.bf16.mxu0 0
        %3347 = vmatpush1.bf16.xpose.msra.mxu0 0
        %3348 = vmatprep.subr.bf16.mxu0 0
        %3349 = vmatpush1.bf16.xpose.msra.mxu0 0
        %3350 = vmatprep.subr.bf16.mxu0 0
        %3351 = vmatpush1.bf16.xpose.msra.mxu0 0
        %3352 = vmatprep.subr.bf16.mxu0 0
        %3353 = vmatpush1.bf16.xpose.msra.mxu0 0
        %3354 = vmatprep.mubr.bf16.mxu0 0
        %3355 = vmatmul.mubr.bf16.gmra.mrb[0].mxu0 %v3320
        %v3356 = vpop.f32.mrb[0].mxu0
        %v3357 = vadd.f32 0.0, %v3356
        %v3358 = vpop.f32.mrb[0].mxu0
        %v3359 = vpop.f32.mrb[0].mxu0
        %v3360 = vpop.f32.mrb[0].mxu0
        %3361 = vdwg.mxu0
        %v3363 = vsel %vm2853, %v3178, 0
        %3365 = vmatprep.subr.bf16.mxu0 0
        %3366 = vmatpush1.bf16.xpose.msra.mxu0 %v3363
        %3367 = vmatprep.subr.bf16.mxu0 0
        %3368 = vmatpush1.bf16.xpose.msra.mxu0 0
        %3369 = vmatprep.subr.bf16.mxu0 0
        %3370 = vmatpush1.bf16.xpose.msra.mxu0 0
        %3371 = vmatprep.subr.bf16.mxu0 0
        %3372 = vmatpush1.bf16.xpose.msra.mxu0 0
        %3373 = vmatprep.subr.bf16.mxu0 0
        %3374 = vmatpush1.bf16.xpose.msra.mxu0 0
        %3375 = vmatprep.subr.bf16.mxu0 0
        %3376 = vmatpush1.bf16.xpose.msra.mxu0 0
        %3377 = vmatprep.subr.bf16.mxu0 0
        %3378 = vmatpush1.bf16.xpose.msra.mxu0 0
        %3379 = vmatprep.subr.bf16.mxu0 0
        %3380 = vmatpush1.bf16.xpose.msra.mxu0 0
        %3381 = vmatprep.subr.bf16.mxu0 0
        %3382 = vmatpush1.bf16.xpose.msra.mxu0 0
        %3383 = vmatprep.subr.bf16.mxu0 0
        %3384 = vmatpush1.bf16.xpose.msra.mxu0 0
        %3385 = vmatprep.subr.bf16.mxu0 0
        %3386 = vmatpush1.bf16.xpose.msra.mxu0 0
        %3387 = vmatprep.subr.bf16.mxu0 0
        %3388 = vmatpush1.bf16.xpose.msra.mxu0 0
        %3389 = vmatprep.subr.bf16.mxu0 0
        %3390 = vmatpush1.bf16.xpose.msra.mxu0 0
        %3391 = vmatprep.subr.bf16.mxu0 0
        %3392 = vmatpush1.bf16.xpose.msra.mxu0 0
        %3393 = vmatprep.subr.bf16.mxu0 0
        %3394 = vmatpush1.bf16.xpose.msra.mxu0 0
        %3395 = vmatprep.subr.bf16.mxu0 0
        %3396 = vmatpush1.bf16.xpose.msra.mxu0 0
        %3397 = vmatprep.mubr.bf16.mxu0 0
        %3398 = vmatmul.mubr.bf16.gmra.mrb[0].mxu0 %v3363
        %v3399 = vpop.f32.mrb[0].mxu0
        %v3400 = vadd.f32 0.0, %v3399
        %v3401 = vpop.f32.mrb[0].mxu0
        %v3402 = vpop.f32.mrb[0].mxu0
        %v3403 = vpop.f32.mrb[0].mxu0
        %3404 = vdwg.mxu0
        %v3406 = vsel %vm2853, %v3179, 0
        %3408 = vmatprep.subr.bf16.mxu0 0
        %3409 = vmatpush1.bf16.xpose.msra.mxu0 %v3406
        %3410 = vmatprep.subr.bf16.mxu0 0
        %3411 = vmatpush1.bf16.xpose.msra.mxu0 0
        %3412 = vmatprep.subr.bf16.mxu0 0
        %3413 = vmatpush1.bf16.xpose.msra.mxu0 0
        %3414 = vmatprep.subr.bf16.mxu0 0
        %3415 = vmatpush1.bf16.xpose.msra.mxu0 0
        %3416 = vmatprep.subr.bf16.mxu0 0
        %3417 = vmatpush1.bf16.xpose.msra.mxu0 0
        %3418 = vmatprep.subr.bf16.mxu0 0
        %3419 = vmatpush1.bf16.xpose.msra.mxu0 0
        %3420 = vmatprep.subr.bf16.mxu0 0
        %3421 = vmatpush1.bf16.xpose.msra.mxu0 0
        %3422 = vmatprep.subr.bf16.mxu0 0
        %3423 = vmatpush1.bf16.xpose.msra.mxu0 0
        %3424 = vmatprep.subr.bf16.mxu0 0
        %3425 = vmatpush1.bf16.xpose.msra.mxu0 0
        %3426 = vmatprep.subr.bf16.mxu0 0
        %3427 = vmatpush1.bf16.xpose.msra.mxu0 0
        %3428 = vmatprep.subr.bf16.mxu0 0
        %3429 = vmatpush1.bf16.xpose.msra.mxu0 0
        %3430 = vmatprep.subr.bf16.mxu0 0
        %3431 = vmatpush1.bf16.xpose.msra.mxu0 0
        %3432 = vmatprep.subr.bf16.mxu0 0
        %3433 = vmatpush1.bf16.xpose.msra.mxu0 0
        %3434 = vmatprep.subr.bf16.mxu0 0
        %3435 = vmatpush1.bf16.xpose.msra.mxu0 0
        %3436 = vmatprep.subr.bf16.mxu0 0
        %3437 = vmatpush1.bf16.xpose.msra.mxu0 0
        %3438 = vmatprep.subr.bf16.mxu0 0
        %3439 = vmatpush1.bf16.xpose.msra.mxu0 0
        %3440 = vmatprep.mubr.bf16.mxu0 0
        %3441 = vmatmul.mubr.bf16.gmra.mrb[0].mxu0 %v3406
        %v3442 = vpop.f32.mrb[0].mxu0
        %v3443 = vadd.f32 0.0, %v3442
        %v3444 = vpop.f32.mrb[0].mxu0
        %v3445 = vpop.f32.mrb[0].mxu0
        %v3446 = vpop.f32.mrb[0].mxu0
        %3447 = vdwg.mxu0
        %v3449 = vsel %vm2853, %v3180, 0
        %3451 = vmatprep.subr.bf16.mxu0 0
        %3452 = vmatpush1.bf16.xpose.msra.mxu0 %v3449
        %3453 = vmatprep.subr.bf16.mxu0 0
        %3454 = vmatpush1.bf16.xpose.msra.mxu0 0
        %3455 = vmatprep.subr.bf16.mxu0 0
        %3456 = vmatpush1.bf16.xpose.msra.mxu0 0
        %3457 = vmatprep.subr.bf16.mxu0 0
        %3458 = vmatpush1.bf16.xpose.msra.mxu0 0
        %3459 = vmatprep.subr.bf16.mxu0 0
        %3460 = vmatpush1.bf16.xpose.msra.mxu0 0
        %3461 = vmatprep.subr.bf16.mxu0 0
        %3462 = vmatpush1.bf16.xpose.msra.mxu0 0
        %3463 = vmatprep.subr.bf16.mxu0 0
        %3464 = vmatpush1.bf16.xpose.msra.mxu0 0
        %3465 = vmatprep.subr.bf16.mxu0 0
        %3466 = vmatpush1.bf16.xpose.msra.mxu0 0
        %3467 = vmatprep.subr.bf16.mxu0 0
        %3468 = vmatpush1.bf16.xpose.msra.mxu0 0
        %3469 = vmatprep.subr.bf16.mxu0 0
        %3470 = vmatpush1.bf16.xpose.msra.mxu0 0
        %3471 = vmatprep.subr.bf16.mxu0 0
        %3472 = vmatpush1.bf16.xpose.msra.mxu0 0
        %3473 = vmatprep.subr.bf16.mxu0 0
        %3474 = vmatpush1.bf16.xpose.msra.mxu0 0
        %3475 = vmatprep.subr.bf16.mxu0 0
        %3476 = vmatpush1.bf16.xpose.msra.mxu0 0
        %3477 = vmatprep.subr.bf16.mxu0 0
        %3478 = vmatpush1.bf16.xpose.msra.mxu0 0
        %3479 = vmatprep.subr.bf16.mxu0 0
        %3480 = vmatpush1.bf16.xpose.msra.mxu0 0
        %3481 = vmatprep.subr.bf16.mxu0 0
        %3482 = vmatpush1.bf16.xpose.msra.mxu0 0
        %3483 = vmatprep.mubr.bf16.mxu0 0
        %3484 = vmatmul.mubr.bf16.gmra.mrb[0].mxu0 %v3449
        %v3485 = vpop.f32.mrb[0].mxu0
        %v3486 = vadd.f32 0.0, %v3485
        %v3487 = vpop.f32.mrb[0].mxu0
        %v3488 = vpop.f32.mrb[0].mxu0
        %v3489 = vpop.f32.mrb[0].mxu0
        %3490 = vdwg.mxu0
        %v3492 = vsel %vm2853, %v3181, 0
        %3494 = vmatprep.subr.bf16.mxu0 0
        %3495 = vmatpush1.bf16.xpose.msra.mxu0 %v3492
        %3496 = vmatprep.subr.bf16.mxu0 0
        %3497 = vmatpush1.bf16.xpose.msra.mxu0 0
        %3498 = vmatprep.subr.bf16.mxu0 0
        %3499 = vmatpush1.bf16.xpose.msra.mxu0 0
        %3500 = vmatprep.subr.bf16.mxu0 0
        %3501 = vmatpush1.bf16.xpose.msra.mxu0 0
        %3502 = vmatprep.subr.bf16.mxu0 0
        %3503 = vmatpush1.bf16.xpose.msra.mxu0 0
        %3504 = vmatprep.subr.bf16.mxu0 0
        %3505 = vmatpush1.bf16.xpose.msra.mxu0 0
        %3506 = vmatprep.subr.bf16.mxu0 0
        %3507 = vmatpush1.bf16.xpose.msra.mxu0 0
        %3508 = vmatprep.subr.bf16.mxu0 0
        %3509 = vmatpush1.bf16.xpose.msra.mxu0 0
        %3510 = vmatprep.subr.bf16.mxu0 0
        %3511 = vmatpush1.bf16.xpose.msra.mxu0 0
        %3512 = vmatprep.subr.bf16.mxu0 0
        %3513 = vmatpush1.bf16.xpose.msra.mxu0 0
        %3514 = vmatprep.subr.bf16.mxu0 0
        %3515 = vmatpush1.bf16.xpose.msra.mxu0 0
        %3516 = vmatprep.subr.bf16.mxu0 0
        %3517 = vmatpush1.bf16.xpose.msra.mxu0 0
        %3518 = vmatprep.subr.bf16.mxu0 0
        %3519 = vmatpush1.bf16.xpose.msra.mxu0 0
        %3520 = vmatprep.subr.bf16.mxu0 0
        %3521 = vmatpush1.bf16.xpose.msra.mxu0 0
        %3522 = vmatprep.subr.bf16.mxu0 0
        %3523 = vmatpush1.bf16.xpose.msra.mxu0 0
        %3524 = vmatprep.subr.bf16.mxu0 0
        %3525 = vmatpush1.bf16.xpose.msra.mxu0 0
        %3526 = vmatprep.mubr.bf16.mxu0 0
        %3527 = vmatmul.mubr.bf16.gmra.mrb[0].mxu0 %v3492
        %v3528 = vpop.f32.mrb[0].mxu0
        %v3529 = vadd.f32 0.0, %v3528
        %v3530 = vpop.f32.mrb[0].mxu0
        %v3531 = vpop.f32.mrb[0].mxu0
        %v3532 = vpop.f32.mrb[0].mxu0
        %3533 = vdwg.mxu0
        %v3535 = vsel %vm2853, %v3182, 0
        %3537 = vmatprep.subr.bf16.mxu0 0
        %3538 = vmatpush1.bf16.xpose.msra.mxu0 %v3535
        %3539 = vmatprep.subr.bf16.mxu0 0
        %3540 = vmatpush1.bf16.xpose.msra.mxu0 0
        %3541 = vmatprep.subr.bf16.mxu0 0
        %3542 = vmatpush1.bf16.xpose.msra.mxu0 0
        %3543 = vmatprep.subr.bf16.mxu0 0
        %3544 = vmatpush1.bf16.xpose.msra.mxu0 0
        %3545 = vmatprep.subr.bf16.mxu0 0
        %3546 = vmatpush1.bf16.xpose.msra.mxu0 0
        %3547 = vmatprep.subr.bf16.mxu0 0
        %3548 = vmatpush1.bf16.xpose.msra.mxu0 0
        %3549 = vmatprep.subr.bf16.mxu0 0
        %3550 = vmatpush1.bf16.xpose.msra.mxu0 0
        %3551 = vmatprep.subr.bf16.mxu0 0
        %3552 = vmatpush1.bf16.xpose.msra.mxu0 0
        %3553 = vmatprep.subr.bf16.mxu0 0
        %3554 = vmatpush1.bf16.xpose.msra.mxu0 0
        %3555 = vmatprep.subr.bf16.mxu0 0
        %3556 = vmatpush1.bf16.xpose.msra.mxu0 0
        %3557 = vmatprep.subr.bf16.mxu0 0
        %3558 = vmatpush1.bf16.xpose.msra.mxu0 0
        %3559 = vmatprep.subr.bf16.mxu0 0
        %3560 = vmatpush1.bf16.xpose.msra.mxu0 0
        %3561 = vmatprep.subr.bf16.mxu0 0
        %3562 = vmatpush1.bf16.xpose.msra.mxu0 0
        %3563 = vmatprep.subr.bf16.mxu0 0
        %3564 = vmatpush1.bf16.xpose.msra.mxu0 0
        %3565 = vmatprep.subr.bf16.mxu0 0
        %3566 = vmatpush1.bf16.xpose.msra.mxu0 0
        %3567 = vmatprep.subr.bf16.mxu0 0
        %3568 = vmatpush1.bf16.xpose.msra.mxu0 0
        %3569 = vmatprep.mubr.bf16.mxu0 0
        %3570 = vmatmul.mubr.bf16.gmra.mrb[0].mxu0 %v3535
        %v3571 = vpop.f32.mrb[0].mxu0
        %v3572 = vadd.f32 0.0, %v3571
        %v3573 = vpop.f32.mrb[0].mxu0
        %v3574 = vpop.f32.mrb[0].mxu0
        %v3575 = vpop.f32.mrb[0].mxu0
        %3576 = vdwg.mxu0
        %v3578 = vsel %vm2853, %v3183, 0
        %3580 = vmatprep.subr.bf16.mxu0 0
        %3581 = vmatpush1.bf16.xpose.msra.mxu0 %v3578
        %3582 = vmatprep.subr.bf16.mxu0 0
        %3583 = vmatpush1.bf16.xpose.msra.mxu0 0
        %3584 = vmatprep.subr.bf16.mxu0 0
        %3585 = vmatpush1.bf16.xpose.msra.mxu0 0
        %3586 = vmatprep.subr.bf16.mxu0 0
        %3587 = vmatpush1.bf16.xpose.msra.mxu0 0
        %3588 = vmatprep.subr.bf16.mxu0 0
        %3589 = vmatpush1.bf16.xpose.msra.mxu0 0
        %3590 = vmatprep.subr.bf16.mxu0 0
        %3591 = vmatpush1.bf16.xpose.msra.mxu0 0
        %3592 = vmatprep.subr.bf16.mxu0 0
        %3593 = vmatpush1.bf16.xpose.msra.mxu0 0
        %3594 = vmatprep.subr.bf16.mxu0 0
        %3595 = vmatpush1.bf16.xpose.msra.mxu0 0
        %3596 = vmatprep.subr.bf16.mxu0 0
        %3597 = vmatpush1.bf16.xpose.msra.mxu0 0
        %3598 = vmatprep.subr.bf16.mxu0 0
        %3599 = vmatpush1.bf16.xpose.msra.mxu0 0
        %3600 = vmatprep.subr.bf16.mxu0 0
        %3601 = vmatpush1.bf16.xpose.msra.mxu0 0
        %3602 = vmatprep.subr.bf16.mxu0 0
        %3603 = vmatpush1.bf16.xpose.msra.mxu0 0
        %3604 = vmatprep.subr.bf16.mxu0 0
        %3605 = vmatpush1.bf16.xpose.msra.mxu0 0
        %3606 = vmatprep.subr.bf16.mxu0 0
        %3607 = vmatpush1.bf16.xpose.msra.mxu0 0
        %3608 = vmatprep.subr.bf16.mxu0 0
        %3609 = vmatpush1.bf16.xpose.msra.mxu0 0
        %3610 = vmatprep.subr.bf16.mxu0 0
        %3611 = vmatpush1.bf16.xpose.msra.mxu0 0
        %3612 = vmatprep.mubr.bf16.mxu0 0
        %3613 = vmatmul.mubr.bf16.gmra.mrb[0].mxu0 %v3578
        %v3614 = vpop.f32.mrb[0].mxu0
        %v3615 = vadd.f32 0.0, %v3614
        %v3616 = vpop.f32.mrb[0].mxu0
        %v3617 = vpop.f32.mrb[0].mxu0
        %v3618 = vpop.f32.mrb[0].mxu0
        %3619 = vdwg.mxu0
        %v3621 = vsel %vm2853, %v3184, 0
        %3623 = vmatprep.subr.bf16.mxu0 0
        %3624 = vmatpush1.bf16.xpose.msra.mxu0 %v3621
        %3625 = vmatprep.subr.bf16.mxu0 0
        %3626 = vmatpush1.bf16.xpose.msra.mxu0 0
        %3627 = vmatprep.subr.bf16.mxu0 0
        %3628 = vmatpush1.bf16.xpose.msra.mxu0 0
        %3629 = vmatprep.subr.bf16.mxu0 0
        %3630 = vmatpush1.bf16.xpose.msra.mxu0 0
        %3631 = vmatprep.subr.bf16.mxu0 0
        %3632 = vmatpush1.bf16.xpose.msra.mxu0 0
        %3633 = vmatprep.subr.bf16.mxu0 0
        %3634 = vmatpush1.bf16.xpose.msra.mxu0 0
        %3635 = vmatprep.subr.bf16.mxu0 0
        %3636 = vmatpush1.bf16.xpose.msra.mxu0 0
        %3637 = vmatprep.subr.bf16.mxu0 0
        %3638 = vmatpush1.bf16.xpose.msra.mxu0 0
        %3639 = vmatprep.subr.bf16.mxu0 0
        %3640 = vmatpush1.bf16.xpose.msra.mxu0 0
        %3641 = vmatprep.subr.bf16.mxu0 0
        %3642 = vmatpush1.bf16.xpose.msra.mxu0 0
        %3643 = vmatprep.subr.bf16.mxu0 0
        %3644 = vmatpush1.bf16.xpose.msra.mxu0 0
        %3645 = vmatprep.subr.bf16.mxu0 0
        %3646 = vmatpush1.bf16.xpose.msra.mxu0 0
        %3647 = vmatprep.subr.bf16.mxu0 0
        %3648 = vmatpush1.bf16.xpose.msra.mxu0 0
        %3649 = vmatprep.subr.bf16.mxu0 0
        %3650 = vmatpush1.bf16.xpose.msra.mxu0 0
        %3651 = vmatprep.subr.bf16.mxu0 0
        %3652 = vmatpush1.bf16.xpose.msra.mxu0 0
        %3653 = vmatprep.subr.bf16.mxu0 0
        %3654 = vmatpush1.bf16.xpose.msra.mxu0 0
        %3655 = vmatprep.mubr.bf16.mxu0 0
        %3656 = vmatmul.mubr.bf16.gmra.mrb[0].mxu0 %v3621
        %v3657 = vpop.f32.mrb[0].mxu0
        %v3658 = vadd.f32 0.0, %v3657
        %v3659 = vpop.f32.mrb[0].mxu0
        %v3660 = vpop.f32.mrb[0].mxu0
        %v3661 = vpop.f32.mrb[0].mxu0
        %3662 = vdwg.mxu0
        %v3664 = vsel %vm2853, %v3185, 0
        %3666 = vmatprep.subr.bf16.mxu0 0
        %3667 = vmatpush1.bf16.xpose.msra.mxu0 %v3664
        %3668 = vmatprep.subr.bf16.mxu0 0
        %3669 = vmatpush1.bf16.xpose.msra.mxu0 0
        %3670 = vmatprep.subr.bf16.mxu0 0
        %3671 = vmatpush1.bf16.xpose.msra.mxu0 0
        %3672 = vmatprep.subr.bf16.mxu0 0
        %3673 = vmatpush1.bf16.xpose.msra.mxu0 0
        %3674 = vmatprep.subr.bf16.mxu0 0
        %3675 = vmatpush1.bf16.xpose.msra.mxu0 0
        %3676 = vmatprep.subr.bf16.mxu0 0
        %3677 = vmatpush1.bf16.xpose.msra.mxu0 0
        %3678 = vmatprep.subr.bf16.mxu0 0
        %3679 = vmatpush1.bf16.xpose.msra.mxu0 0
        %3680 = vmatprep.subr.bf16.mxu0 0
        %3681 = vmatpush1.bf16.xpose.msra.mxu0 0
        %3682 = vmatprep.subr.bf16.mxu0 0
        %3683 = vmatpush1.bf16.xpose.msra.mxu0 0
        %3684 = vmatprep.subr.bf16.mxu0 0
        %3685 = vmatpush1.bf16.xpose.msra.mxu0 0
        %3686 = vmatprep.subr.bf16.mxu0 0
        %3687 = vmatpush1.bf16.xpose.msra.mxu0 0
        %3688 = vmatprep.subr.bf16.mxu0 0
        %3689 = vmatpush1.bf16.xpose.msra.mxu0 0
        %3690 = vmatprep.subr.bf16.mxu0 0
        %3691 = vmatpush1.bf16.xpose.msra.mxu0 0
        %3692 = vmatprep.subr.bf16.mxu0 0
        %3693 = vmatpush1.bf16.xpose.msra.mxu0 0
        %3694 = vmatprep.subr.bf16.mxu0 0
        %3695 = vmatpush1.bf16.xpose.msra.mxu0 0
        %3696 = vmatprep.subr.bf16.mxu0 0
        %3697 = vmatpush1.bf16.xpose.msra.mxu0 0
        %3698 = vmatprep.mubr.bf16.mxu0 0
        %3699 = vmatmul.mubr.bf16.gmra.mrb[0].mxu0 %v3664
        %v3700 = vpop.f32.mrb[0].mxu0
        %v3701 = vadd.f32 0.0, %v3700
        %v3702 = vpop.f32.mrb[0].mxu0
        %v3703 = vpop.f32.mrb[0].mxu0
        %v3704 = vpop.f32.mrb[0].mxu0
        %3705 = vdwg.mxu0
        %v3707 = vsel %vm2853, %v3186, 0
        %3709 = vmatprep.subr.bf16.mxu0 0
        %3710 = vmatpush1.bf16.xpose.msra.mxu0 %v3707
        %3711 = vmatprep.subr.bf16.mxu0 0
        %3712 = vmatpush1.bf16.xpose.msra.mxu0 0
        %3713 = vmatprep.subr.bf16.mxu0 0
        %3714 = vmatpush1.bf16.xpose.msra.mxu0 0
        %3715 = vmatprep.subr.bf16.mxu0 0
        %3716 = vmatpush1.bf16.xpose.msra.mxu0 0
        %3717 = vmatprep.subr.bf16.mxu0 0
        %3718 = vmatpush1.bf16.xpose.msra.mxu0 0
        %3719 = vmatprep.subr.bf16.mxu0 0
        %3720 = vmatpush1.bf16.xpose.msra.mxu0 0
        %3721 = vmatprep.subr.bf16.mxu0 0
        %3722 = vmatpush1.bf16.xpose.msra.mxu0 0
        %3723 = vmatprep.subr.bf16.mxu0 0
        %3724 = vmatpush1.bf16.xpose.msra.mxu0 0
        %3725 = vmatprep.subr.bf16.mxu0 0
        %3726 = vmatpush1.bf16.xpose.msra.mxu0 0
        %3727 = vmatprep.subr.bf16.mxu0 0
        %3728 = vmatpush1.bf16.xpose.msra.mxu0 0
        %3729 = vmatprep.subr.bf16.mxu0 0
        %3730 = vmatpush1.bf16.xpose.msra.mxu0 0
        %3731 = vmatprep.subr.bf16.mxu0 0
        %3732 = vmatpush1.bf16.xpose.msra.mxu0 0
        %3733 = vmatprep.subr.bf16.mxu0 0
        %3734 = vmatpush1.bf16.xpose.msra.mxu0 0
        %3735 = vmatprep.subr.bf16.mxu0 0
        %3736 = vmatpush1.bf16.xpose.msra.mxu0 0
        %3737 = vmatprep.subr.bf16.mxu0 0
        %3738 = vmatpush1.bf16.xpose.msra.mxu0 0
        %3739 = vmatprep.subr.bf16.mxu0 0
        %3740 = vmatpush1.bf16.xpose.msra.mxu0 0
        %3741 = vmatprep.mubr.bf16.mxu0 0
        %3742 = vmatmul.mubr.bf16.gmra.mrb[0].mxu0 %v3707
        %v3743 = vpop.f32.mrb[0].mxu0
        %v3744 = vadd.f32 0.0, %v3743
        %v3745 = vpop.f32.mrb[0].mxu0
        %v3746 = vpop.f32.mrb[0].mxu0
        %v3747 = vpop.f32.mrb[0].mxu0
        %3748 = vdwg.mxu0
        %v3750 = vsel %vm2853, %v3187, 0
        %3752 = vmatprep.subr.bf16.mxu0 0
        %3753 = vmatpush1.bf16.xpose.msra.mxu0 %v3750
        %3754 = vmatprep.subr.bf16.mxu0 0
        %3755 = vmatpush1.bf16.xpose.msra.mxu0 0
        %3756 = vmatprep.subr.bf16.mxu0 0
        %3757 = vmatpush1.bf16.xpose.msra.mxu0 0
        %3758 = vmatprep.subr.bf16.mxu0 0
        %3759 = vmatpush1.bf16.xpose.msra.mxu0 0
        %3760 = vmatprep.subr.bf16.mxu0 0
        %3761 = vmatpush1.bf16.xpose.msra.mxu0 0
        %3762 = vmatprep.subr.bf16.mxu0 0
        %3763 = vmatpush1.bf16.xpose.msra.mxu0 0
        %3764 = vmatprep.subr.bf16.mxu0 0
        %3765 = vmatpush1.bf16.xpose.msra.mxu0 0
        %3766 = vmatprep.subr.bf16.mxu0 0
        %3767 = vmatpush1.bf16.xpose.msra.mxu0 0
        %3768 = vmatprep.subr.bf16.mxu0 0
        %3769 = vmatpush1.bf16.xpose.msra.mxu0 0
        %3770 = vmatprep.subr.bf16.mxu0 0
        %3771 = vmatpush1.bf16.xpose.msra.mxu0 0
        %3772 = vmatprep.subr.bf16.mxu0 0
        %3773 = vmatpush1.bf16.xpose.msra.mxu0 0
        %3774 = vmatprep.subr.bf16.mxu0 0
        %3775 = vmatpush1.bf16.xpose.msra.mxu0 0
        %3776 = vmatprep.subr.bf16.mxu0 0
        %3777 = vmatpush1.bf16.xpose.msra.mxu0 0
        %3778 = vmatprep.subr.bf16.mxu0 0
        %3779 = vmatpush1.bf16.xpose.msra.mxu0 0
        %3780 = vmatprep.subr.bf16.mxu0 0
        %3781 = vmatpush1.bf16.xpose.msra.mxu0 0
        %3782 = vmatprep.subr.bf16.mxu0 0
        %3783 = vmatpush1.bf16.xpose.msra.mxu0 0
        %3784 = vmatprep.mubr.bf16.mxu0 0
        %3785 = vmatmul.mubr.bf16.gmra.mrb[0].mxu0 %v3750
        %v3786 = vpop.f32.mrb[0].mxu0
        %v3787 = vadd.f32 0.0, %v3786
        %v3788 = vpop.f32.mrb[0].mxu0
        %v3789 = vpop.f32.mrb[0].mxu0
        %v3790 = vpop.f32.mrb[0].mxu0
        %3791 = vdwg.mxu0
        %v3793 = vsel %vm2853, %v3188, 0
        %3795 = vmatprep.subr.bf16.mxu0 0
        %3796 = vmatpush1.bf16.xpose.msra.mxu0 %v3793
        %3797 = vmatprep.subr.bf16.mxu0 0
        %3798 = vmatpush1.bf16.xpose.msra.mxu0 0
        %3799 = vmatprep.subr.bf16.mxu0 0
        %3800 = vmatpush1.bf16.xpose.msra.mxu0 0
        %3801 = vmatprep.subr.bf16.mxu0 0
        %3802 = vmatpush1.bf16.xpose.msra.mxu0 0
        %3803 = vmatprep.subr.bf16.mxu0 0
        %3804 = vmatpush1.bf16.xpose.msra.mxu0 0
        %3805 = vmatprep.subr.bf16.mxu0 0
        %3806 = vmatpush1.bf16.xpose.msra.mxu0 0
        %3807 = vmatprep.subr.bf16.mxu0 0
        %3808 = vmatpush1.bf16.xpose.msra.mxu0 0
        %3809 = vmatprep.subr.bf16.mxu0 0
        %3810 = vmatpush1.bf16.xpose.msra.mxu0 0
        %3811 = vmatprep.subr.bf16.mxu0 0
        %3812 = vmatpush1.bf16.xpose.msra.mxu0 0
        %3813 = vmatprep.subr.bf16.mxu0 0
        %3814 = vmatpush1.bf16.xpose.msra.mxu0 0
        %3815 = vmatprep.subr.bf16.mxu0 0
        %3816 = vmatpush1.bf16.xpose.msra.mxu0 0
        %3817 = vmatprep.subr.bf16.mxu0 0
        %3818 = vmatpush1.bf16.xpose.msra.mxu0 0
        %3819 = vmatprep.subr.bf16.mxu0 0
        %3820 = vmatpush1.bf16.xpose.msra.mxu0 0
        %3821 = vmatprep.subr.bf16.mxu0 0
        %3822 = vmatpush1.bf16.xpose.msra.mxu0 0
        %3823 = vmatprep.subr.bf16.mxu0 0
        %3824 = vmatpush1.bf16.xpose.msra.mxu0 0
        %3825 = vmatprep.subr.bf16.mxu0 0
        %3826 = vmatpush1.bf16.xpose.msra.mxu0 0
        %3827 = vmatprep.mubr.bf16.mxu0 0
        %3828 = vmatmul.mubr.bf16.gmra.mrb[0].mxu0 %v3793
        %v3829 = vpop.f32.mrb[0].mxu0
        %v3830 = vadd.f32 0.0, %v3829
        %v3831 = vpop.f32.mrb[0].mxu0
        %v3832 = vpop.f32.mrb[0].mxu0
        %v3833 = vpop.f32.mrb[0].mxu0
        %3834 = vdwg.mxu0
        %v3836 = vsel %vm2853, %v3189, 0
        %3838 = vmatprep.subr.bf16.mxu0 0
        %3839 = vmatpush1.bf16.xpose.msra.mxu0 %v3836
        %3840 = vmatprep.subr.bf16.mxu0 0
        %3841 = vmatpush1.bf16.xpose.msra.mxu0 0
        %3842 = vmatprep.subr.bf16.mxu0 0
        %3843 = vmatpush1.bf16.xpose.msra.mxu0 0
        %3844 = vmatprep.subr.bf16.mxu0 0
        %3845 = vmatpush1.bf16.xpose.msra.mxu0 0
        %3846 = vmatprep.subr.bf16.mxu0 0
        %3847 = vmatpush1.bf16.xpose.msra.mxu0 0
        %3848 = vmatprep.subr.bf16.mxu0 0
        %3849 = vmatpush1.bf16.xpose.msra.mxu0 0
        %3850 = vmatprep.subr.bf16.mxu0 0
        %3851 = vmatpush1.bf16.xpose.msra.mxu0 0
        %3852 = vmatprep.subr.bf16.mxu0 0
        %3853 = vmatpush1.bf16.xpose.msra.mxu0 0
        %3854 = vmatprep.subr.bf16.mxu0 0
        %3855 = vmatpush1.bf16.xpose.msra.mxu0 0
        %3856 = vmatprep.subr.bf16.mxu0 0
        %3857 = vmatpush1.bf16.xpose.msra.mxu0 0
        %3858 = vmatprep.subr.bf16.mxu0 0
        %3859 = vmatpush1.bf16.xpose.msra.mxu0 0
        %3860 = vmatprep.subr.bf16.mxu0 0
        %3861 = vmatpush1.bf16.xpose.msra.mxu0 0
        %3862 = vmatprep.subr.bf16.mxu0 0
        %3863 = vmatpush1.bf16.xpose.msra.mxu0 0
        %3864 = vmatprep.subr.bf16.mxu0 0
        %3865 = vmatpush1.bf16.xpose.msra.mxu0 0
        %3866 = vmatprep.subr.bf16.mxu0 0
        %3867 = vmatpush1.bf16.xpose.msra.mxu0 0
        %3868 = vmatprep.subr.bf16.mxu0 0
        %3869 = vmatpush1.bf16.xpose.msra.mxu0 0
        %3870 = vmatprep.mubr.bf16.mxu0 0
        %3871 = vmatmul.mubr.bf16.gmra.mrb[0].mxu0 %v3836
        %v3872 = vpop.f32.mrb[0].mxu0
        %v3873 = vadd.f32 0.0, %v3872
        %v3874 = vpop.f32.mrb[0].mxu0
        %v3875 = vpop.f32.mrb[0].mxu0
        %v3876 = vpop.f32.mrb[0].mxu0
        %3877 = vdwg.mxu0
        %vm3878 = vcmp.ne.f32.partialorder %v3228, %v3228
        %vm3879 = vcmp.ne.f32.partialorder %v3271, %v3271
        %vm3880 = vcmp.ne.f32.partialorder %v3314, %v3314
        %vm3881 = vcmp.ne.f32.partialorder %v3357, %v3357
        %vm3882 = vcmp.ne.f32.partialorder %v3400, %v3400
        %vm3883 = vcmp.ne.f32.partialorder %v3443, %v3443
        %vm3884 = vcmp.ne.f32.partialorder %v3486, %v3486
        %vm3885 = vcmp.ne.f32.partialorder %v3529, %v3529
        %vm3886 = vcmp.ne.f32.partialorder %v3572, %v3572
        %vm3887 = vcmp.ne.f32.partialorder %v3615, %v3615
        %vm3888 = vcmp.ne.f32.partialorder %v3658, %v3658
        %vm3889 = vcmp.ne.f32.partialorder %v3701, %v3701
        %vm3890 = vcmp.ne.f32.partialorder %v3744, %v3744
        %vm3891 = vcmp.ne.f32.partialorder %v3787, %v3787
        %vm3892 = vcmp.ne.f32.partialorder %v3830, %v3830
        %vm3893 = vcmp.ne.f32.partialorder %v3873, %v3873
        %v3894 = vsel %vm3878, 0.0, %v3228
        %v3895 = vsel %vm3879, 0.0, %v3271
        %v3896 = vsel %vm3880, 0.0, %v3314
        %v3897 = vsel %vm3881, 0.0, %v3357
        %v3898 = vsel %vm3882, 0.0, %v3400
        %v3899 = vsel %vm3883, 0.0, %v3443
        %v3900 = vsel %vm3884, 0.0, %v3486
        %v3901 = vsel %vm3885, 0.0, %v3529
        %v3902 = vsel %vm3886, 0.0, %v3572
        %v3903 = vsel %vm3887, 0.0, %v3615
        %v3904 = vsel %vm3888, 0.0, %v3658
        %v3905 = vsel %vm3889, 0.0, %v3701
        %v3906 = vsel %vm3890, 0.0, %v3744
        %v3907 = vsel %vm3891, 0.0, %v3787
        %v3908 = vsel %vm3892, 0.0, %v3830
        %v3909 = vsel %vm3893, 0.0, %v3873
        %v3910 = vmax.f32 %v3894, -3.4028235e+38
        %v3911 = vmax.f32 %v3895, -3.4028235e+38
        %v3912 = vmax.f32 %v3896, -3.4028235e+38
        %v3913 = vmax.f32 %v3897, -3.4028235e+38
        %v3914 = vmax.f32 %v3898, -3.4028235e+38
        %v3915 = vmax.f32 %v3899, -3.4028235e+38
        %v3916 = vmax.f32 %v3900, -3.4028235e+38
        %v3917 = vmax.f32 %v3901, -3.4028235e+38
        %v3918 = vmax.f32 %v3902, -3.4028235e+38
        %v3919 = vmax.f32 %v3903, -3.4028235e+38
        %v3920 = vmax.f32 %v3904, -3.4028235e+38
        %v3921 = vmax.f32 %v3905, -3.4028235e+38
        %v3922 = vmax.f32 %v3906, -3.4028235e+38
        %v3923 = vmax.f32 %v3907, -3.4028235e+38
        %v3924 = vmax.f32 %v3908, -3.4028235e+38
        %v3925 = vmax.f32 %v3909, -3.4028235e+38
        %v3926 = vmin.f32 %v3910, 3.4028235e+38
        %v3927 = vmin.f32 %v3911, 3.4028235e+38
        %v3928 = vmin.f32 %v3912, 3.4028235e+38
        %v3929 = vmin.f32 %v3913, 3.4028235e+38
        %v3930 = vmin.f32 %v3914, 3.4028235e+38
        %v3931 = vmin.f32 %v3915, 3.4028235e+38
        %v3932 = vmin.f32 %v3916, 3.4028235e+38
        %v3933 = vmin.f32 %v3917, 3.4028235e+38
        %v3934 = vmin.f32 %v3918, 3.4028235e+38
        %v3935 = vmin.f32 %v3919, 3.4028235e+38
        %v3936 = vmin.f32 %v3920, 3.4028235e+38
        %v3937 = vmin.f32 %v3921, 3.4028235e+38
        %v3938 = vmin.f32 %v3922, 3.4028235e+38
        %v3939 = vmin.f32 %v3923, 3.4028235e+38
        %v3940 = vmin.f32 %v3924, 3.4028235e+38
        %v3941 = vmin.f32 %v3925, 3.4028235e+38
        %3942 = vst.msk [vmem:[%s151] sm:$0xff] %vm2853, %v3926
        %3944 = vrot.lane.b32.xlu0 %v3927, 8
        %v3945 = vpop.permute.xlu0 %3944
        %vm3947 = vcmask 130112
        %3948 = vst.msk [vmem:[%s151] sm:$0xff] %vm3947, %v3945
        %3950 = vrot.lane.b32.xlu0 %v3928, 16
        %v3951 = vpop.permute.xlu0 %3950
        %vm3953 = vcmask 195712
        %3954 = vst.msk [vmem:[%s151] sm:$0xff] %vm3953, %v3951
        %3956 = vrot.lane.b32.xlu0 %v3929, 24
        %v3957 = vpop.permute.xlu0 %3956
        %vm3959 = vcmask 261312
        %3960 = vst.msk [vmem:[%s151] sm:$0xff] %vm3959, %v3957
        %3962 = vrot.lane.b32.xlu0 %v3930, 32
        %v3963 = vpop.permute.xlu0 %3962
        %vm3965 = vcmask 326912
        %3966 = vst.msk [vmem:[%s151] sm:$0xff] %vm3965, %v3963
        %3968 = vrot.lane.b32.xlu0 %v3931, 40
        %v3969 = vpop.permute.xlu0 %3968
        %vm3971 = vcmask 392512
        %3972 = vst.msk [vmem:[%s151] sm:$0xff] %vm3971, %v3969
        %3974 = vrot.lane.b32.xlu0 %v3932, 48
        %v3975 = vpop.permute.xlu0 %3974
        %vm3977 = vcmask 458112
        %3978 = vst.msk [vmem:[%s151] sm:$0xff] %vm3977, %v3975
        %3980 = vrot.lane.b32.xlu0 %v3933, 56
        %v3981 = vpop.permute.xlu0 %3980
        %vm3983 = vcmask 523712
        %3984 = vst.msk [vmem:[%s151] sm:$0xff] %vm3983, %v3981
        %3986 = vrot.lane.b32.xlu0 %v3934, 64
        %v3987 = vpop.permute.xlu0 %3986
        %vm3989 = vcmask 589312
        %3990 = vst.msk [vmem:[%s151] sm:$0xff] %vm3989, %v3987
        %3992 = vrot.lane.b32.xlu0 %v3935, 72
        %v3993 = vpop.permute.xlu0 %3992
        %vm3995 = vcmask 654912
        %3996 = vst.msk [vmem:[%s151] sm:$0xff] %vm3995, %v3993
        %3998 = vrot.lane.b32.xlu0 %v3936, 80
        %v3999 = vpop.permute.xlu0 %3998
        %vm4001 = vcmask 720512
        %4002 = vst.msk [vmem:[%s151] sm:$0xff] %vm4001, %v3999
        %4004 = vrot.lane.b32.xlu0 %v3937, 88
        %v4005 = vpop.permute.xlu0 %4004
        %vm4007 = vcmask 786112
        %4008 = vst.msk [vmem:[%s151] sm:$0xff] %vm4007, %v4005
        %4010 = vrot.lane.b32.xlu0 %v3938, 96
        %v4011 = vpop.permute.xlu0 %4010
        %vm4013 = vcmask 851712
        %4014 = vst.msk [vmem:[%s151] sm:$0xff] %vm4013, %v4011
        %4016 = vrot.lane.b32.xlu0 %v3939, 104
        %v4017 = vpop.permute.xlu0 %4016
        %vm4019 = vcmask 917312
        %4020 = vst.msk [vmem:[%s151] sm:$0xff] %vm4019, %v4017
        %4022 = vrot.lane.b32.xlu0 %v3940, 112
        %v4023 = vpop.permute.xlu0 %4022
        %vm4025 = vcmask 982912
        %4026 = vst.msk [vmem:[%s151] sm:$0xff] %vm4025, %v4023
        %4028 = vrot.lane.b32.xlu0 %v3941, 120
        %v4029 = vpop.permute.xlu0 %4028
        %vm4031 = vcmask 1048512
        %4032 = vst.msk [vmem:[%s151] sm:$0xff] %vm4031, %v4029
        %s4033 = sand.u32 %s76, 1
        %s4034 = scalar_lea.sflag [#allocation3], %s4033
        %s4035 = sand.u32 %s76, 1
        %s4036 = smul.addr %s4035, 8
        %s4037 = scalar_lea.vmem [#allocation2], %s4036
        // Predicated region
        $region29: #{tpu_custom_call.1} parent=27 // pred_check
          %p4038 = pneg %p86
        $region30: #{tpu_custom_call.1} parent=27 // pred_check_branch
          %4040 = sbr.rel (%p4038) target = $region32
        $region31: #{tpu_custom_call.1} parent=27 // pred_region
          %s4042 = ssub.s32 128, 128
          %4043 = vsyncadd %s4034, %s4042
          %s4044 = smul.addr %s16, 128
          %s4045 = scalar_lea.hbm %s2, %s4044
          %s4047 = sshll.u32 %s4037, 4
          %s4048 = int_to_ptr.vmem [resolvable:$true] %s4047
          %4050 = dma.vmem_to_hbm [thread:$0]  %s4048, 128, %s4045, %s4034
        $region32: #{tpu_custom_call.1} parent=27 // pred_fallthru
          _
      $region28: #{tpu_custom_call.1} parent=5 // pred_fallthru
        _
      %p4051 = scmp.le.s32.totalorder 2, %s11
      // Predicated region
      $region33: #{tpu_custom_call.1} parent=5 // pred_check
        %p4052 = pneg %p4051
      $region34: #{tpu_custom_call.1} parent=5 // pred_check_branch
        %4054 = sbr.rel (%p4052) target = $region36
      $region35: #{tpu_custom_call.1} parent=5 // pred_region
        %s4055 = ssub.s32 %s11, 2
        // Predicated region
        $region37: #{tpu_custom_call.1} parent=35 // pred_check
          %p4056 = pneg %p92
        $region38: #{tpu_custom_call.1} parent=35 // pred_check_branch
          %4058 = sbr.rel (%p4056) target = $region40
        $region39: #{tpu_custom_call.1} parent=35 // pred_region
          %s4059 = sand.u32 %s77, 1
          %s4060 = scalar_lea.sflag [#allocation3], %s4059
          %s4061 = sand.u32 %s77, 1
          %s4062 = smul.addr %s4061, 8
          %s4063 = scalar_lea.vmem [#allocation2], %s4062
          %4064 = dma.done %s4060, 128
        $region40: #{tpu_custom_call.1} parent=35 // pred_fallthru
          _
      $region36: #{tpu_custom_call.1} parent=5 // pred_fallthru
        _
    $region6: #{tpu_custom_call.1} parent=1 // loop_footer
      %s15 = sadd.s32 1, %s11
    $region7: #{tpu_custom_call.1} parent=1 // loop_footer_branch
      %10 = sbr.rel target = $region3
    $region8: #{tpu_custom_call.1} parent=1 // loop_exit
      _
    %4065 = vsyncpa [#allocation3], 1
    %s4066 = scalar_lea.sflag [#allocation3], 1
    %4067 = vsyncpa %s4066, 1

</llo_original>
